<compile_context>
chip_gen: v6e
topology: v6e:2x2x1
jax: 0.10.0
libtpu: 0.0.40
codegen_flags: <defaults>
</compile_context>

<pallas_src>
import functools

import jax
import jax.numpy as jnp
from jax.experimental import pallas as pl
from jax.experimental.pallas import tpu as pltpu

# PyTorch hidden widths and their MXU/lane-friendly padded versions.
H1, H2, H3 = 500, 500, 2000
H1_P, H2_P, H3_P = 512, 512, 2048

LANE = 128
SUBLANE = 8


def _round_up(x, m):
    return (x + m - 1) // m * m


def _encoder_kernel(x_ref,
                    w1_ref, b1_ref,
                    w2_ref, b2_ref,
                    w3_ref, b3_ref,
                    w4_ref, b4_ref,
                    o_ref):
    """All four matmuls + bias + ReLU fused; intermediates never leave VMEM."""
    cd = w1_ref.dtype  # compute dtype (bf16); accumulation is f32 on the MXU.

    h = jnp.dot(x_ref[...], w1_ref[...], preferred_element_type=jnp.float32)
    h = jnp.maximum(h + b1_ref[...], 0.0)

    h = jnp.dot(h.astype(cd), w2_ref[...], preferred_element_type=jnp.float32)
    h = jnp.maximum(h + b2_ref[...], 0.0)

    h = jnp.dot(h.astype(cd), w3_ref[...], preferred_element_type=jnp.float32)
    h = jnp.maximum(h + b3_ref[...], 0.0)

    out = jnp.dot(h.astype(cd), w4_ref[...],
                  preferred_element_type=jnp.float32) + b4_ref[...]
    o_ref[...] = out.astype(o_ref.dtype)


def prepare_params(params, *, compute_dtype=jnp.bfloat16):
    """Zero-pad PyTorch-shaped f32 params to lane-friendly shapes and cast.

    params: w{i}: (in, out) f32 (transpose of nn.Linear weight), b{i}: (1, out).
    Returns padded weights in `compute_dtype` and padded f32 biases.
    Call once; padding is layout plumbing, not per-call work.
    """
    input_dim = params["w1"].shape[0]
    feature_dim = params["w4"].shape[1]
    in_p = _round_up(input_dim, LANE)
    feat_p = _round_up(feature_dim, LANE)

    dims = [(input_dim, H1), (H1, H2), (H2, H3), (H3, feature_dim)]
    pdims = [(in_p, H1_P), (H1_P, H2_P), (H2_P, H3_P), (H3_P, feat_p)]

    out = {}
    for idx, ((fi, fo), (pfi, pfo)) in enumerate(zip(dims, pdims), start=1):
        w = params[f"w{idx}"]
        b = params[f"b{idx}"]
        wp = jnp.zeros((pfi, pfo), compute_dtype)
        wp = wp.at[:fi, :fo].set(w.astype(compute_dtype))
        bp = jnp.zeros((1, pfo), jnp.float32)
        bp = bp.at[:, :fo].set(b.astype(jnp.float32))
        out[f"w{idx}"] = wp
        out[f"b{idx}"] = bp
    return out


@functools.partial(jax.jit, static_argnames=("input_dim", "feature_dim", "block_m"))
def encoder_forward(x, padded_params, *, input_dim, feature_dim, block_m=256):
    """x: (B, input_dim) f32. padded_params: output of prepare_params()."""
    B = x.shape[0]
    in_p = padded_params["w1"].shape[0]
    feat_p = padded_params["w4"].shape[1]
    cd = padded_params["w1"].dtype

    # Adaptive batch tile: minimize padded rows while keeping the MXU
    # M-dimension large.  block_m=256 keeps the MXU full on v6e/v7x; sweep
    # upward on v6e (128 MiB VMEM), keep <=384 on v7x (64 MiB VMEM).
    b8 = _round_up(B, SUBLANE)
    n_tiles = pl.cdiv(b8, block_m)
    bm = _round_up(pl.cdiv(b8, n_tiles), SUBLANE)
    b_pad = bm * n_tiles

    # Pad batch + input features with zeros and cast to the compute dtype.
    x_pad = jnp.zeros((b_pad, in_p), cd).at[:B, :input_dim].set(x.astype(cd))

    full = lambda arr: pl.BlockSpec(arr.shape, lambda i: (0, 0))  # resident

    grid_spec = pltpu.PrefetchScalarGridSpec(
        num_scalar_prefetch=0,
        grid=(n_tiles,),
        in_specs=[
            pl.BlockSpec((bm, in_p), lambda i: (i, 0)),            # x tile
            full(padded_params["w1"]), full(padded_params["b1"]),
            full(padded_params["w2"]), full(padded_params["b2"]),
            full(padded_params["w3"]), full(padded_params["b3"]),
            full(padded_params["w4"]), full(padded_params["b4"]),
        ],
        out_specs=pl.BlockSpec((bm, feat_p), lambda i: (i, 0)),
    )

    out_pad = pl.pallas_call(
        _encoder_kernel,
        out_shape=jax.ShapeDtypeStruct((b_pad, feat_p), jnp.float32),
        grid_spec=grid_spec,
        compiler_params=pltpu.CompilerParams(
            dimension_semantics=("parallel",),
            vmem_limit_bytes=32 << 20,   # valid on v5e/v6e/v7x; >> actual need
        ),
    )(x_pad,
      padded_params["w1"], padded_params["b1"],
      padded_params["w2"], padded_params["b2"],
      padded_params["w3"], padded_params["b3"],
      padded_params["w4"], padded_params["b4"])

    return out_pad[:B, :feature_dim]


def init_params(key, input_dim, feature_dim, dtype=jnp.float32):
    """PyTorch-like uniform fan-in init at the *original* (unpadded) shapes."""
    dims = [(input_dim, H1), (H1, H2), (H2, H3), (H3, feature_dim)]
    params = {}
    for idx, (fan_in, fan_out) in enumerate(dims, start=1):
        key, kw, kb = jax.random.split(key, 3)
        bound = 1.0 / jnp.sqrt(fan_in)
        params[f"w{idx}"] = jax.random.uniform(
            kw, (fan_in, fan_out), dtype, minval=-bound, maxval=bound)
        params[f"b{idx}"] = jax.random.uniform(
            kb, (1, fan_out), dtype, minval=-bound, maxval=bound)
    return params


def encoder_reference(x, params, compute_dtype=None):
    """Pure-JAX reference. If compute_dtype is given, operands are cast to it
    before each matmul (same quantization the kernel applies)."""
    def lin(h, w, b):
        if compute_dtype is not None:
            h = h.astype(compute_dtype)
            w = w.astype(compute_dtype)
        return jnp.dot(h, w, preferred_element_type=jnp.float32) + b
    h = jnp.maximum(lin(x, params["w1"], params["b1"]), 0.0)
    h = jnp.maximum(lin(h, params["w2"], params["b2"]), 0.0)
    h = jnp.maximum(lin(h, params["w3"], params["b3"]), 0.0)
    return lin(h, params["w4"], params["b4"])


if __name__ == "__main__":
    key = jax.random.PRNGKey(0)
    batch, input_dim, feature_dim = 16, 32, 32

    key, kx = jax.random.split(key)
    x = jax.random.normal(kx, (batch, input_dim), jnp.float32)

    params = init_params(key, input_dim, feature_dim)            # f32, PyTorch shapes
    padded_params = prepare_params(params, compute_dtype=jnp.bfloat16)

    out = encoder_forward(x, padded_params,
                          input_dim=input_dim, feature_dim=feature_dim,
                          block_m=256)
    out = jax.block_until_ready(out)
    assert out.shape == (batch, feature_dim)

    # Exact-math check: reference with the same bf16 operand quantization.
    ref_matched = encoder_reference(x, params, compute_dtype=jnp.bfloat16)
    assert jnp.allclose(out, ref_matched, atol=1e-2, rtol=1e-2), \
        "mismatch vs bf16-matched reference"

    # Sanity check vs full-f32 PyTorch semantics (loose: bf16 quantization).
    ref_f32 = encoder_reference(x, params)
    assert jnp.allclose(out, ref_f32, atol=2e-1, rtol=2e-1), \
        "mismatch vs f32 reference"

    print("KERNEL_OK")
</pallas_src>

<mosaic_0001>
module attributes {stable_mosaic.version = 11 : i64} {
  func.func @_encoder_kernel(%arg0: i32, %arg1: memref<16x128xbf16, #tpu.memory_space<vmem>>, %arg2: memref<128x512xbf16, #tpu.memory_space<vmem>>, %arg3: memref<1x512xf32, #tpu.memory_space<vmem>>, %arg4: memref<512x512xbf16, #tpu.memory_space<vmem>>, %arg5: memref<1x512xf32, #tpu.memory_space<vmem>>, %arg6: memref<512x2048xbf16, #tpu.memory_space<vmem>>, %arg7: memref<1x2048xf32, #tpu.memory_space<vmem>>, %arg8: memref<2048x128xbf16, #tpu.memory_space<vmem>>, %arg9: memref<1x128xf32, #tpu.memory_space<vmem>>, %arg10: memref<16x128xf32, #tpu.memory_space<vmem>>) attributes {dimension_semantics = [#tpu.dimension_semantics<parallel>], iteration_bounds = array<i64: 1>, scalar_prefetch = 0 : i64, scratch_operands = 0 : i64, tpu.core_type = #tpu.core_type<tc>, window_params = [{transform_indices = @transform_0, window_bounds = array<i64: 16, 128>}, {pipeline_mode = #tpu.pipeline_mode<synchronous>, transform_indices = @transform_1, window_bounds = array<i64: 128, 512>}, {pipeline_mode = #tpu.pipeline_mode<synchronous>, transform_indices = @transform_2, window_bounds = array<i64: 1, 512>}, {pipeline_mode = #tpu.pipeline_mode<synchronous>, transform_indices = @transform_3, window_bounds = array<i64: 512, 512>}, {pipeline_mode = #tpu.pipeline_mode<synchronous>, transform_indices = @transform_4, window_bounds = array<i64: 1, 512>}, {pipeline_mode = #tpu.pipeline_mode<synchronous>, transform_indices = @transform_5, window_bounds = array<i64: 512, 2048>}, {pipeline_mode = #tpu.pipeline_mode<synchronous>, transform_indices = @transform_6, window_bounds = array<i64: 1, 2048>}, {pipeline_mode = #tpu.pipeline_mode<synchronous>, transform_indices = @transform_7, window_bounds = array<i64: 2048, 128>}, {pipeline_mode = #tpu.pipeline_mode<synchronous>, transform_indices = @transform_8, window_bounds = array<i64: 1, 128>}, {transform_indices = @transform_9, window_bounds = array<i64: 16, 128>}]} {
    %c0 = arith.constant 0 : index
    %c0_0 = arith.constant 0 : index
    %0 = vector.load %arg1[%c0, %c0_0] : memref<16x128xbf16, #tpu.memory_space<vmem>>, vector<16x128xbf16>
    %c0_1 = arith.constant 0 : index
    %c0_2 = arith.constant 0 : index
    %1 = vector.load %arg2[%c0_1, %c0_2] : memref<128x512xbf16, #tpu.memory_space<vmem>>, vector<128x512xbf16>
    %cst = arith.constant dense<0.000000e+00> : vector<16x512xf32>
    %2 = tpu.matmul %0, %1, %cst {dimension_numbers = #tpu.dot_dimension_numbers<[1], [0], [0], [1], [0, 0, 1, 1], [], []>} : vector<16x128xbf16>, vector<128x512xbf16>, vector<16x512xf32> -> vector<16x512xf32>
    %c0_3 = arith.constant 0 : index
    %c0_4 = arith.constant 0 : index
    %3 = vector.load %arg3[%c0_3, %c0_4] : memref<1x512xf32, #tpu.memory_space<vmem>>, vector<1x512xf32>
    %4 = vector.broadcast %3 : vector<1x512xf32> to vector<16x512xf32>
    %5 = arith.addf %2, %4 : vector<16x512xf32>
    %cst_5 = arith.constant 0.000000e+00 : f32
    %6 = vector.broadcast %cst_5 : f32 to vector<16x512xf32>
    %7 = arith.maximumf %5, %6 : vector<16x512xf32>
    %8 = arith.truncf %7 : vector<16x512xf32> to vector<16x512xbf16>
    %c0_6 = arith.constant 0 : index
    %c0_7 = arith.constant 0 : index
    %9 = vector.load %arg4[%c0_6, %c0_7] : memref<512x512xbf16, #tpu.memory_space<vmem>>, vector<512x512xbf16>
    %cst_8 = arith.constant dense<0.000000e+00> : vector<16x512xf32>
    %10 = tpu.matmul %8, %9, %cst_8 {dimension_numbers = #tpu.dot_dimension_numbers<[1], [0], [0], [1], [0, 0, 1, 1], [], []>} : vector<16x512xbf16>, vector<512x512xbf16>, vector<16x512xf32> -> vector<16x512xf32>
    %c0_9 = arith.constant 0 : index
    %c0_10 = arith.constant 0 : index
    %11 = vector.load %arg5[%c0_9, %c0_10] : memref<1x512xf32, #tpu.memory_space<vmem>>, vector<1x512xf32>
    %12 = vector.broadcast %11 : vector<1x512xf32> to vector<16x512xf32>
    %13 = arith.addf %10, %12 : vector<16x512xf32>
    %cst_11 = arith.constant 0.000000e+00 : f32
    %14 = vector.broadcast %cst_11 : f32 to vector<16x512xf32>
    %15 = arith.maximumf %13, %14 : vector<16x512xf32>
    %16 = arith.truncf %15 : vector<16x512xf32> to vector<16x512xbf16>
    %c0_12 = arith.constant 0 : index
    %c0_13 = arith.constant 0 : index
    %17 = vector.load %arg6[%c0_12, %c0_13] : memref<512x2048xbf16, #tpu.memory_space<vmem>>, vector<512x2048xbf16>
    %cst_14 = arith.constant dense<0.000000e+00> : vector<16x2048xf32>
    %18 = tpu.matmul %16, %17, %cst_14 {dimension_numbers = #tpu.dot_dimension_numbers<[1], [0], [0], [1], [0, 0, 1, 1], [], []>} : vector<16x512xbf16>, vector<512x2048xbf16>, vector<16x2048xf32> -> vector<16x2048xf32>
    %c0_15 = arith.constant 0 : index
    %c0_16 = arith.constant 0 : index
    %19 = vector.load %arg7[%c0_15, %c0_16] : memref<1x2048xf32, #tpu.memory_space<vmem>>, vector<1x2048xf32>
    %20 = vector.broadcast %19 : vector<1x2048xf32> to vector<16x2048xf32>
    %21 = arith.addf %18, %20 : vector<16x2048xf32>
    %cst_17 = arith.constant 0.000000e+00 : f32
    %22 = vector.broadcast %cst_17 : f32 to vector<16x2048xf32>
    %23 = arith.maximumf %21, %22 : vector<16x2048xf32>
    %24 = arith.truncf %23 : vector<16x2048xf32> to vector<16x2048xbf16>
    %c0_18 = arith.constant 0 : index
    %c0_19 = arith.constant 0 : index
    %25 = vector.load %arg8[%c0_18, %c0_19] : memref<2048x128xbf16, #tpu.memory_space<vmem>>, vector<2048x128xbf16>
    %cst_20 = arith.constant dense<0.000000e+00> : vector<16x128xf32>
    %26 = tpu.matmul %24, %25, %cst_20 {dimension_numbers = #tpu.dot_dimension_numbers<[1], [0], [0], [1], [0, 0, 1, 1], [], []>} : vector<16x2048xbf16>, vector<2048x128xbf16>, vector<16x128xf32> -> vector<16x128xf32>
    %c0_21 = arith.constant 0 : index
    %c0_22 = arith.constant 0 : index
    %27 = vector.load %arg9[%c0_21, %c0_22] : memref<1x128xf32, #tpu.memory_space<vmem>>, vector<1x128xf32>
    %28 = vector.broadcast %27 : vector<1x128xf32> to vector<16x128xf32>
    %29 = arith.addf %26, %28 : vector<16x128xf32>
    %c0_23 = arith.constant 0 : index
    %c0_24 = arith.constant 0 : index
    %30 = vector.load %arg10[%c0_23, %c0_24] : memref<16x128xf32, #tpu.memory_space<vmem>>, vector<16x128xf32>
    tpu.vector_store %arg10[%c0_23, %c0_24], %29 {strides = array<i32>} : memref<16x128xf32, #tpu.memory_space<vmem>>, vector<16x128xf32>,
    return
  }
  func.func @transform_0(%arg0: i32) -> (i32, i32) {
    %c0_i32 = arith.constant 0 : i32
    %c0_i32_0 = arith.constant 0 : i32
    return %arg0, %c0_i32 : i32, i32
  }
  func.func @transform_1(%arg0: i32) -> (i32, i32) {
    %c0_i32 = arith.constant 0 : i32
    %c0_i32_0 = arith.constant 0 : i32
    %c0_i32_1 = arith.constant 0 : i32
    return %c0_i32, %c0_i32_0 : i32, i32
  }
  func.func @transform_2(%arg0: i32) -> (i32, i32) {
    %c0_i32 = arith.constant 0 : i32
    %c0_i32_0 = arith.constant 0 : i32
    %c0_i32_1 = arith.constant 0 : i32
    return %c0_i32, %c0_i32_0 : i32, i32
  }
  func.func @transform_3(%arg0: i32) -> (i32, i32) {
    %c0_i32 = arith.constant 0 : i32
    %c0_i32_0 = arith.constant 0 : i32
    %c0_i32_1 = arith.constant 0 : i32
    return %c0_i32, %c0_i32_0 : i32, i32
  }
  func.func @transform_4(%arg0: i32) -> (i32, i32) {
    %c0_i32 = arith.constant 0 : i32
    %c0_i32_0 = arith.constant 0 : i32
    %c0_i32_1 = arith.constant 0 : i32
    return %c0_i32, %c0_i32_0 : i32, i32
  }
  func.func @transform_5(%arg0: i32) -> (i32, i32) {
    %c0_i32 = arith.constant 0 : i32
    %c0_i32_0 = arith.constant 0 : i32
    %c0_i32_1 = arith.constant 0 : i32
    return %c0_i32, %c0_i32_0 : i32, i32
  }
  func.func @transform_6(%arg0: i32) -> (i32, i32) {
    %c0_i32 = arith.constant 0 : i32
    %c0_i32_0 = arith.constant 0 : i32
    %c0_i32_1 = arith.constant 0 : i32
    return %c0_i32, %c0_i32_0 : i32, i32
  }
  func.func @transform_7(%arg0: i32) -> (i32, i32) {
    %c0_i32 = arith.constant 0 : i32
    %c0_i32_0 = arith.constant 0 : i32
    %c0_i32_1 = arith.constant 0 : i32
    return %c0_i32, %c0_i32_0 : i32, i32
  }
  func.func @transform_8(%arg0: i32) -> (i32, i32) {
    %c0_i32 = arith.constant 0 : i32
    %c0_i32_0 = arith.constant 0 : i32
    %c0_i32_1 = arith.constant 0 : i32
    return %c0_i32, %c0_i32_0 : i32, i32
  }
  func.func @transform_9(%arg0: i32) -> (i32, i32) {
    %c0_i32 = arith.constant 0 : i32
    %c0_i32_0 = arith.constant 0 : i32
    return %arg0, %c0_i32 : i32, i32
  }
}

</mosaic_0001>

<llo_original>
// kernel: encoder_forward.1
$region0: #{encoder_forward.1}
  #allocation0 [shape = 'u32[]', space=smem, size = 0x4, offset = 0x4, fixed_abs, tag = 'smem constant byte address 0x4 - core index']
  #allocation1 [shape = 'u32[144,128]{1,0:T(1,128)}', space=vmem, size = 0x12000, scoped, tag = 'internal scratch']
  %s0 = inlined_call_operand.vmem [shape: bf16[16,128], index: 0, kind: input, shape index: {}]
  %s1 = inlined_call_operand.hbm [shape: bf16[128,512], index: 1, kind: input, shape index: {}]
  %s2 = inlined_call_operand.hbm [shape: f32[1,512], index: 2, kind: input, shape index: {}]
  %s3 = inlined_call_operand.hbm [shape: bf16[512,512], index: 3, kind: input, shape index: {}]
  %s4 = inlined_call_operand.hbm [shape: f32[1,512], index: 4, kind: input, shape index: {}]
  %s5 = inlined_call_operand.hbm [shape: bf16[512,2048], index: 5, kind: input, shape index: {}]
  %s6 = inlined_call_operand.hbm [shape: f32[1,2048], index: 6, kind: input, shape index: {}]
  %s7 = inlined_call_operand.hbm [shape: bf16[2048,128], index: 7, kind: input, shape index: {}]
  %s8 = inlined_call_operand.hbm [shape: f32[1,128], index: 8, kind: input, shape index: {}]
  %s9 = inlined_call_operand.hbm [shape: f32[16,128], index: 9, kind: output, shape index: {}]
  %s10 = sld [smem:[#allocation0]]
  $region78: #{encoder_forward.1} parent=0
    _
  %s12 = ssub.s32 1, %s10
  %s13 = scalar_select 0, %s12, %s10
  $region1: #{encoder_forward.1} parent=0
    #allocation2 [shape = 'u8[131072]{0}', space=vmem, size = 0x20000, scoped, tag = 'input window, operand 1, single buffered']
    #allocation3 [shape = 's32[1]{0}', space=sflag, size = 0x4, scoped, tag = 'scoped memory for encoder_forward.1']
    #allocation4 [shape = 's32[1]{0}', space=sflag, size = 0x4, scoped, tag = 'scoped memory for encoder_forward.1']
    #allocation5 [shape = 'u8[2048]{0}', space=vmem, size = 0x800, scoped, tag = 'input window, operand 2, single buffered']
    #allocation6 [shape = 's32[1]{0}', space=sflag, size = 0x4, scoped, tag = 'scoped memory for encoder_forward.1']
    #allocation7 [shape = 'u8[524288]{0}', space=vmem, size = 0x80000, scoped, tag = 'input window, operand 3, single buffered']
    #allocation8 [shape = 'u8[2048]{0}', space=vmem, size = 0x800, scoped, tag = 'input window, operand 4, single buffered']
    #allocation9 [shape = 's32[1]{0}', space=sflag, size = 0x4, scoped, tag = 'scoped memory for encoder_forward.1']
    #allocation10 [shape = 'u8[2097152]{0}', space=vmem, size = 0x200000, scoped, tag = 'input window, operand 5, single buffered']
    #allocation11 [shape = 'u8[8192]{0}', space=vmem, size = 0x2000, scoped, tag = 'input window, operand 6, single buffered']
    #allocation12 [shape = 's32[1]{0}', space=sflag, size = 0x4, scoped, tag = 'scoped memory for encoder_forward.1']
    #allocation13 [shape = 'u8[524288]{0}', space=vmem, size = 0x80000, scoped, tag = 'input window, operand 7, single buffered']
    #allocation14 [shape = 'u8[512]{0}', space=vmem, size = 0x400, scoped, tag = 'input window, operand 8, single buffered']
    #allocation15 [shape = 's32[1]{0}', space=sflag, size = 0x4, scoped, tag = 'scoped memory for encoder_forward.1']
    #allocation16 [shape = 'u8[8192]{0}', space=vmem, size = 0x2000, scoped, tag = 'output window, operand 0, single buffered']
    %14 = vsyncpa [#allocation3], 0
    %15 = vsyncpa [#allocation6], 0
    %16 = vsyncpa [#allocation9], 0
    %17 = vsyncpa [#allocation12], 0
    %18 = vsyncpa [#allocation15], 0
    %19 = vsyncpa [#allocation4], 0
    // Predicated region
    $region2: #{encoder_forward.1} parent=1 // pred_check
      _
    $region3: #{encoder_forward.1} parent=1 // pred_check_branch
      %21 = sbr.rel (0) target = $region5
    $region4: #{encoder_forward.1} parent=1 // pred_region
      _
    $region5: #{encoder_forward.1} parent=1 // pred_fallthru
      _
    // Predicated region
    $region6: #{encoder_forward.1} parent=1 // pred_check
      _
    $region7: #{encoder_forward.1} parent=1 // pred_check_branch
      %23 = sbr.rel (0) target = $region9
    $region8: #{encoder_forward.1} parent=1 // pred_region
      %s25 = ssub.s32 4096, 4096
      %26 = vsyncadd [#allocation3], %s25
      %s27 = sshll.u32 [#allocation2], 4
      %s28 = int_to_ptr.vmem [resolvable:$true] %s27
      %33 = dma.hbm_to_vmem [thread:$0]  %s1, 4096, %s28, [#allocation3], 256, 256, 16
    $region9: #{encoder_forward.1} parent=1 // pred_fallthru
      _
    // Predicated region
    $region10: #{encoder_forward.1} parent=1 // pred_check
      _
    $region11: #{encoder_forward.1} parent=1 // pred_check_branch
      %35 = sbr.rel (0) target = $region13
    $region12: #{encoder_forward.1} parent=1 // pred_region
      %s37 = ssub.s32 64, 64
      %38 = vsyncadd [#allocation6], %s37
      %s40 = sshll.u32 [#allocation5], 4
      %s41 = int_to_ptr.vmem [resolvable:$true] %s40
      %43 = dma.hbm_to_vmem [thread:$0]  %s2, 64, %s41, [#allocation6]
    $region13: #{encoder_forward.1} parent=1 // pred_fallthru
      _
    // Predicated region
    $region14: #{encoder_forward.1} parent=1 // pred_check
      _
    $region15: #{encoder_forward.1} parent=1 // pred_check_branch
      %45 = sbr.rel (0) target = $region17
    $region16: #{encoder_forward.1} parent=1 // pred_region
      %s47 = ssub.s32 16384, 16384
      %48 = vsyncadd [#allocation6], %s47
      %s49 = sshll.u32 [#allocation7], 4
      %s50 = int_to_ptr.vmem [resolvable:$true] %s49
      %55 = dma.hbm_to_vmem [thread:$0]  %s3, 16384, %s50, [#allocation6], 256, 256, 16
    $region17: #{encoder_forward.1} parent=1 // pred_fallthru
      _
    // Predicated region
    $region18: #{encoder_forward.1} parent=1 // pred_check
      _
    $region19: #{encoder_forward.1} parent=1 // pred_check_branch
      %57 = sbr.rel (0) target = $region21
    $region20: #{encoder_forward.1} parent=1 // pred_region
      %s59 = ssub.s32 64, 64
      %60 = vsyncadd [#allocation9], %s59
      %s62 = sshll.u32 [#allocation8], 4
      %s63 = int_to_ptr.vmem [resolvable:$true] %s62
      %65 = dma.hbm_to_vmem [thread:$0]  %s4, 64, %s63, [#allocation9]
    $region21: #{encoder_forward.1} parent=1 // pred_fallthru
      _
    // Predicated region
    $region22: #{encoder_forward.1} parent=1 // pred_check
      _
    $region23: #{encoder_forward.1} parent=1 // pred_check_branch
      %67 = sbr.rel (0) target = $region25
    $region24: #{encoder_forward.1} parent=1 // pred_region
      %s69 = ssub.s32 65536, 65536
      %70 = vsyncadd [#allocation9], %s69
      %s71 = sshll.u32 [#allocation10], 4
      %s72 = int_to_ptr.vmem [resolvable:$true] %s71
      %77 = dma.hbm_to_vmem [thread:$0]  %s5, 65536, %s72, [#allocation9], 1024, 1024, 64
    $region25: #{encoder_forward.1} parent=1 // pred_fallthru
      _
    // Predicated region
    $region26: #{encoder_forward.1} parent=1 // pred_check
      _
    $region27: #{encoder_forward.1} parent=1 // pred_check_branch
      %79 = sbr.rel (0) target = $region29
    $region28: #{encoder_forward.1} parent=1 // pred_region
      %s81 = ssub.s32 256, 256
      %82 = vsyncadd [#allocation12], %s81
      %s84 = sshll.u32 [#allocation11], 4
      %s85 = int_to_ptr.vmem [resolvable:$true] %s84
      %87 = dma.hbm_to_vmem [thread:$0]  %s6, 256, %s85, [#allocation12]
    $region29: #{encoder_forward.1} parent=1 // pred_fallthru
      _
    // Predicated region
    $region30: #{encoder_forward.1} parent=1 // pred_check
      _
    $region31: #{encoder_forward.1} parent=1 // pred_check_branch
      %89 = sbr.rel (0) target = $region33
    $region32: #{encoder_forward.1} parent=1 // pred_region
      %s91 = ssub.s32 16384, 16384
      %92 = vsyncadd [#allocation12], %s91
      %s93 = sshll.u32 [#allocation13], 4
      %s94 = int_to_ptr.vmem [resolvable:$true] %s93
      %99 = dma.hbm_to_vmem [thread:$0]  %s7, 16384, %s94, [#allocation12], 64, 64, 4
    $region33: #{encoder_forward.1} parent=1 // pred_fallthru
      _
    // Predicated region
    $region34: #{encoder_forward.1} parent=1 // pred_check
      _
    $region35: #{encoder_forward.1} parent=1 // pred_check_branch
      %101 = sbr.rel (0) target = $region37
    $region36: #{encoder_forward.1} parent=1 // pred_region
      %s103 = ssub.s32 16, 16
      %104 = vsyncadd [#allocation15], %s103
      %s106 = sshll.u32 [#allocation14], 4
      %s107 = int_to_ptr.vmem [resolvable:$true] %s106
      %109 = dma.hbm_to_vmem [thread:$0]  %s8, 16, %s107, [#allocation15]
    $region37: #{encoder_forward.1} parent=1 // pred_fallthru
      _
    // Predicated region
    $region38: #{encoder_forward.1} parent=1 // pred_check
      _
    $region39: #{encoder_forward.1} parent=1 // pred_check_branch
      %111 = sbr.rel (0) target = $region41
    $region40: #{encoder_forward.1} parent=1 // pred_region
      %112 = dma.done [#allocation3], 4096
    $region41: #{encoder_forward.1} parent=1 // pred_fallthru
      _
    // Predicated region
    $region42: #{encoder_forward.1} parent=1 // pred_check
      _
    $region43: #{encoder_forward.1} parent=1 // pred_check_branch
      %114 = sbr.rel (0) target = $region45
    $region44: #{encoder_forward.1} parent=1 // pred_region
      %115 = dma.done [#allocation6], 64
    $region45: #{encoder_forward.1} parent=1 // pred_fallthru
      _
    // Predicated region
    $region46: #{encoder_forward.1} parent=1 // pred_check
      _
    $region47: #{encoder_forward.1} parent=1 // pred_check_branch
      %117 = sbr.rel (0) target = $region49
    $region48: #{encoder_forward.1} parent=1 // pred_region
      %118 = dma.done [#allocation6], 16384
    $region49: #{encoder_forward.1} parent=1 // pred_fallthru
      _
    // Predicated region
    $region50: #{encoder_forward.1} parent=1 // pred_check
      _
    $region51: #{encoder_forward.1} parent=1 // pred_check_branch
      %120 = sbr.rel (0) target = $region53
    $region52: #{encoder_forward.1} parent=1 // pred_region
      %121 = dma.done [#allocation9], 64
    $region53: #{encoder_forward.1} parent=1 // pred_fallthru
      _
    // Predicated region
    $region54: #{encoder_forward.1} parent=1 // pred_check
      _
    $region55: #{encoder_forward.1} parent=1 // pred_check_branch
      %123 = sbr.rel (0) target = $region57
    $region56: #{encoder_forward.1} parent=1 // pred_region
      %124 = dma.done [#allocation9], 65536
    $region57: #{encoder_forward.1} parent=1 // pred_fallthru
      _
    // Predicated region
    $region58: #{encoder_forward.1} parent=1 // pred_check
      _
    $region59: #{encoder_forward.1} parent=1 // pred_check_branch
      %126 = sbr.rel (0) target = $region61
    $region60: #{encoder_forward.1} parent=1 // pred_region
      %127 = dma.done [#allocation12], 256
    $region61: #{encoder_forward.1} parent=1 // pred_fallthru
      _
    // Predicated region
    $region62: #{encoder_forward.1} parent=1 // pred_check
      _
    $region63: #{encoder_forward.1} parent=1 // pred_check_branch
      %129 = sbr.rel (0) target = $region65
    $region64: #{encoder_forward.1} parent=1 // pred_region
      %130 = dma.done [#allocation12], 16384
    $region65: #{encoder_forward.1} parent=1 // pred_fallthru
      _
    // Predicated region
    $region66: #{encoder_forward.1} parent=1 // pred_check
      _
    $region67: #{encoder_forward.1} parent=1 // pred_check_branch
      %132 = sbr.rel (0) target = $region69
    $region68: #{encoder_forward.1} parent=1 // pred_region
      %133 = dma.done [#allocation15], 16
    $region69: #{encoder_forward.1} parent=1 // pred_fallthru
      _
    %v135 = vld [vmem:[%s0] sm:$0xf]
    %v136 = vld [vmem:[%s0 + $0x4] sm:$0xf]
    %v137 = vld [vmem:[#allocation2] sm:$0xff]
    %v138 = vld [vmem:[#allocation2 + $0x8] sm:$0xff]
    %v139 = vld [vmem:[#allocation2 + $0x10] sm:$0xff]
    %v140 = vld [vmem:[#allocation2 + $0x18] sm:$0xff]
    %v141 = vld [vmem:[#allocation2 + $0x20] sm:$0xff]
    %v142 = vld [vmem:[#allocation2 + $0x28] sm:$0xff]
    %v143 = vld [vmem:[#allocation2 + $0x30] sm:$0xff]
    %v144 = vld [vmem:[#allocation2 + $0x38] sm:$0xff]
    %v145 = vld [vmem:[#allocation2 + $0x40] sm:$0xff]
    %v146 = vld [vmem:[#allocation2 + $0x48] sm:$0xff]
    %v147 = vld [vmem:[#allocation2 + $0x50] sm:$0xff]
    %v148 = vld [vmem:[#allocation2 + $0x58] sm:$0xff]
    %v149 = vld [vmem:[#allocation2 + $0x60] sm:$0xff]
    %v150 = vld [vmem:[#allocation2 + $0x68] sm:$0xff]
    %v151 = vld [vmem:[#allocation2 + $0x70] sm:$0xff]
    %v152 = vld [vmem:[#allocation2 + $0x78] sm:$0xff]
    %v153 = vld [vmem:[#allocation2 + $0x80] sm:$0xff]
    %v154 = vld [vmem:[#allocation2 + $0x88] sm:$0xff]
    %v155 = vld [vmem:[#allocation2 + $0x90] sm:$0xff]
    %v156 = vld [vmem:[#allocation2 + $0x98] sm:$0xff]
    %v157 = vld [vmem:[#allocation2 + $0xa0] sm:$0xff]
    %v158 = vld [vmem:[#allocation2 + $0xa8] sm:$0xff]
    %v159 = vld [vmem:[#allocation2 + $0xb0] sm:$0xff]
    %v160 = vld [vmem:[#allocation2 + $0xb8] sm:$0xff]
    %v161 = vld [vmem:[#allocation2 + $0xc0] sm:$0xff]
    %v162 = vld [vmem:[#allocation2 + $0xc8] sm:$0xff]
    %v163 = vld [vmem:[#allocation2 + $0xd0] sm:$0xff]
    %v164 = vld [vmem:[#allocation2 + $0xd8] sm:$0xff]
    %v165 = vld [vmem:[#allocation2 + $0xe0] sm:$0xff]
    %v166 = vld [vmem:[#allocation2 + $0xe8] sm:$0xff]
    %v167 = vld [vmem:[#allocation2 + $0xf0] sm:$0xff]
    %v168 = vld [vmem:[#allocation2 + $0xf8] sm:$0xff]
    %v169 = vld [vmem:[#allocation5] sm:$0xf]
    %v171 = vlaneseq
    %v172 = vshrl.u32 %v171, 7
    %v173 = vsub.s32 0, %v172
    %v174 = vrot.slane %v169, %v173
    %v175 = vlaneseq
    %v176 = vshrl.u32 %v175, 7
    %v177 = vsub.s32 1, %v176
    %v178 = vrot.slane %v169, %v177
    %v179 = vlaneseq
    %v180 = vshrl.u32 %v179, 7
    %v181 = vsub.s32 2, %v180
    %v182 = vrot.slane %v169, %v181
    %v183 = vlaneseq
    %v184 = vshrl.u32 %v183, 7
    %v185 = vsub.s32 3, %v184
    %v186 = vrot.slane %v169, %v185
    %v193 = vunpack.c.l.b16 %v135
    %v194 = vunpack.c.l.b16 %v136
    %v195 = vpack.c.b16 %v194, %v193
    %v229 = vunpack.c.l.b16 %v137
    %v230 = vunpack.c.h.b16 %v137
    %v231 = vunpack.c.l.b16 %v138
    %v232 = vunpack.c.h.b16 %v138
    %v233 = vunpack.c.l.b16 %v139
    %v234 = vunpack.c.h.b16 %v139
    %v235 = vunpack.c.l.b16 %v140
    %v236 = vunpack.c.h.b16 %v140
    %v237 = vunpack.c.l.b16 %v141
    %v238 = vunpack.c.h.b16 %v141
    %v239 = vunpack.c.l.b16 %v142
    %v240 = vunpack.c.h.b16 %v142
    %v241 = vunpack.c.l.b16 %v143
    %v242 = vunpack.c.h.b16 %v143
    %v243 = vunpack.c.l.b16 %v144
    %v244 = vunpack.c.h.b16 %v144
    %v245 = vunpack.c.l.b16 %v145
    %v246 = vunpack.c.h.b16 %v145
    %v247 = vunpack.c.l.b16 %v146
    %v248 = vunpack.c.h.b16 %v146
    %v249 = vunpack.c.l.b16 %v147
    %v250 = vunpack.c.h.b16 %v147
    %v251 = vunpack.c.l.b16 %v148
    %v252 = vunpack.c.h.b16 %v148
    %v253 = vunpack.c.l.b16 %v149
    %v254 = vunpack.c.h.b16 %v149
    %v255 = vunpack.c.l.b16 %v150
    %v256 = vunpack.c.h.b16 %v150
    %v257 = vunpack.c.l.b16 %v151
    %v258 = vunpack.c.h.b16 %v151
    %v259 = vunpack.c.l.b16 %v152
    %v260 = vunpack.c.h.b16 %v152
    %v261 = vunpack.c.l.b16 %v153
    %v262 = vunpack.c.h.b16 %v153
    %v263 = vunpack.c.l.b16 %v154
    %v264 = vunpack.c.h.b16 %v154
    %v265 = vunpack.c.l.b16 %v155
    %v266 = vunpack.c.h.b16 %v155
    %v267 = vunpack.c.l.b16 %v156
    %v268 = vunpack.c.h.b16 %v156
    %v269 = vunpack.c.l.b16 %v157
    %v270 = vunpack.c.h.b16 %v157
    %v271 = vunpack.c.l.b16 %v158
    %v272 = vunpack.c.h.b16 %v158
    %v273 = vunpack.c.l.b16 %v159
    %v274 = vunpack.c.h.b16 %v159
    %v275 = vunpack.c.l.b16 %v160
    %v276 = vunpack.c.h.b16 %v160
    %v277 = vunpack.c.l.b16 %v161
    %v278 = vunpack.c.h.b16 %v161
    %v279 = vunpack.c.l.b16 %v162
    %v280 = vunpack.c.h.b16 %v162
    %v281 = vunpack.c.l.b16 %v163
    %v282 = vunpack.c.h.b16 %v163
    %v283 = vunpack.c.l.b16 %v164
    %v284 = vunpack.c.h.b16 %v164
    %v285 = vunpack.c.l.b16 %v165
    %v286 = vunpack.c.h.b16 %v165
    %v287 = vunpack.c.l.b16 %v166
    %v288 = vunpack.c.h.b16 %v166
    %v289 = vunpack.c.l.b16 %v167
    %v290 = vunpack.c.h.b16 %v167
    %v291 = vunpack.c.l.b16 %v168
    %v292 = vunpack.c.h.b16 %v168
    %v293 = vpack.c.b16 %v233, %v229
    %v294 = vpack.c.b16 %v234, %v230
    %v295 = vpack.c.b16 %v235, %v231
    %v296 = vpack.c.b16 %v236, %v232
    %v297 = vpack.c.b16 %v241, %v237
    %v298 = vpack.c.b16 %v242, %v238
    %v299 = vpack.c.b16 %v243, %v239
    %v300 = vpack.c.b16 %v244, %v240
    %v301 = vpack.c.b16 %v249, %v245
    %v302 = vpack.c.b16 %v250, %v246
    %v303 = vpack.c.b16 %v251, %v247
    %v304 = vpack.c.b16 %v252, %v248
    %v305 = vpack.c.b16 %v257, %v253
    %v306 = vpack.c.b16 %v258, %v254
    %v307 = vpack.c.b16 %v259, %v255
    %v308 = vpack.c.b16 %v260, %v256
    %v309 = vpack.c.b16 %v265, %v261
    %v310 = vpack.c.b16 %v266, %v262
    %v311 = vpack.c.b16 %v267, %v263
    %v312 = vpack.c.b16 %v268, %v264
    %v313 = vpack.c.b16 %v273, %v269
    %v314 = vpack.c.b16 %v274, %v270
    %v315 = vpack.c.b16 %v275, %v271
    %v316 = vpack.c.b16 %v276, %v272
    %v317 = vpack.c.b16 %v281, %v277
    %v318 = vpack.c.b16 %v282, %v278
    %v319 = vpack.c.b16 %v283, %v279
    %v320 = vpack.c.b16 %v284, %v280
    %v321 = vpack.c.b16 %v289, %v285
    %v322 = vpack.c.b16 %v290, %v286
    %v323 = vpack.c.b16 %v291, %v287
    %v324 = vpack.c.b16 %v292, %v288
    %357 = vmatprep.subr.bf16.mxu0 %v322
    %358 = vmatpush1.bf16.msra.mxu0 %v321
    %359 = vmatprep.subr.bf16.mxu0 %v318
    %360 = vmatpush1.bf16.msra.mxu0 %v317
    %361 = vmatprep.subr.bf16.mxu0 %v314
    %362 = vmatpush1.bf16.msra.mxu0 %v313
    %363 = vmatprep.subr.bf16.mxu0 %v310
    %364 = vmatpush1.bf16.msra.mxu0 %v309
    %365 = vmatprep.subr.bf16.mxu0 %v306
    %366 = vmatpush1.bf16.msra.mxu0 %v305
    %367 = vmatprep.subr.bf16.mxu0 %v302
    %368 = vmatpush1.bf16.msra.mxu0 %v301
    %369 = vmatprep.subr.bf16.mxu0 %v298
    %370 = vmatpush1.bf16.msra.mxu0 %v297
    %371 = vmatprep.subr.bf16.mxu0 %v294
    %372 = vmatpush1.bf16.msra.mxu0 %v293
    %373 = vmatprep.subr.bf16.mxu0 0
    %374 = vmatpush2.bf16.msra.mxu0 0
    %375 = vmatprep.subr.bf16.mxu0 0
    %376 = vmatpush2.bf16.msra.mxu0 0
    %377 = vmatprep.subr.bf16.mxu0 0
    %378 = vmatpush2.bf16.msra.mxu0 0
    %379 = vmatprep.subr.bf16.mxu0 0
    %380 = vmatpush2.bf16.msra.mxu0 0
    %381 = vmatprep.subr.bf16.mxu0 0
    %382 = vmatpush2.bf16.msra.mxu0 0
    %383 = vmatprep.subr.bf16.mxu0 0
    %384 = vmatpush2.bf16.msra.mxu0 0
    %385 = vmatprep.subr.bf16.mxu0 0
    %386 = vmatpush2.bf16.msra.mxu0 0
    %387 = vmatprep.subr.bf16.mxu0 0
    %388 = vmatpush2.bf16.msra.mxu0 0
    %389 = vmatprep.mubr.bf16.mxu0 0
    %390 = vmatmul.mubr.bf16.gmra.mxu0 %v195
    %v391 = vpop.f32.mrf.mxu0
    %v392 = vadd.f32 %v174, %v391
    %v393 = vpop.f32.mrf.mxu0
    %v394 = vadd.f32 %v178, %v393
    %v395 = vpop.f32.mrf.mxu0
    %v396 = vadd.f32 %v174, %v395
    %v397 = vpop.f32.mrf.mxu0
    %v398 = vadd.f32 %v178, %v397
    %399 = vdwg.mxu0
    %400 = vmatprep.subr.bf16.mxu0 %v324
    %401 = vmatpush1.bf16.msra.mxu0 %v323
    %402 = vmatprep.subr.bf16.mxu0 %v320
    %403 = vmatpush1.bf16.msra.mxu0 %v319
    %404 = vmatprep.subr.bf16.mxu0 %v316
    %405 = vmatpush1.bf16.msra.mxu0 %v315
    %406 = vmatprep.subr.bf16.mxu0 %v312
    %407 = vmatpush1.bf16.msra.mxu0 %v311
    %408 = vmatprep.subr.bf16.mxu0 %v308
    %409 = vmatpush1.bf16.msra.mxu0 %v307
    %410 = vmatprep.subr.bf16.mxu0 %v304
    %411 = vmatpush1.bf16.msra.mxu0 %v303
    %412 = vmatprep.subr.bf16.mxu0 %v300
    %413 = vmatpush1.bf16.msra.mxu0 %v299
    %414 = vmatprep.subr.bf16.mxu0 %v296
    %415 = vmatpush1.bf16.msra.mxu0 %v295
    %416 = vmatprep.subr.bf16.mxu0 0
    %417 = vmatpush2.bf16.msra.mxu0 0
    %418 = vmatprep.subr.bf16.mxu0 0
    %419 = vmatpush2.bf16.msra.mxu0 0
    %420 = vmatprep.subr.bf16.mxu0 0
    %421 = vmatpush2.bf16.msra.mxu0 0
    %422 = vmatprep.subr.bf16.mxu0 0
    %423 = vmatpush2.bf16.msra.mxu0 0
    %424 = vmatprep.subr.bf16.mxu0 0
    %425 = vmatpush2.bf16.msra.mxu0 0
    %426 = vmatprep.subr.bf16.mxu0 0
    %427 = vmatpush2.bf16.msra.mxu0 0
    %428 = vmatprep.subr.bf16.mxu0 0
    %429 = vmatpush2.bf16.msra.mxu0 0
    %430 = vmatprep.subr.bf16.mxu0 0
    %431 = vmatpush2.bf16.msra.mxu0 0
    %432 = vmatprep.mubr.bf16.mxu0 0
    %433 = vmatmul.mubr.bf16.gmra.mxu0 %v195
    %v434 = vpop.f32.mrf.mxu0
    %v435 = vadd.f32 %v182, %v434
    %v436 = vpop.f32.mrf.mxu0
    %v437 = vadd.f32 %v186, %v436
    %v438 = vpop.f32.mrf.mxu0
    %v439 = vadd.f32 %v182, %v438
    %v440 = vpop.f32.mrf.mxu0
    %v441 = vadd.f32 %v186, %v440
    %442 = vdwg.mxu0
    %v443 = vmax.f32 %v392, 0.0
    %v444 = vmax.f32 %v394, 0.0
    %v445 = vmax.f32 %v435, 0.0
    %v446 = vmax.f32 %v437, 0.0
    %v447 = vmax.f32 %v396, 0.0
    %v448 = vmax.f32 %v398, 0.0
    %v449 = vmax.f32 %v439, 0.0
    %v450 = vmax.f32 %v441, 0.0
    %v451 = vpack.c.bf16 %v447, %v443
    %v452 = vpack.c.bf16 %v448, %v444
    %v453 = vpack.c.bf16 %v449, %v445
    %v454 = vpack.c.bf16 %v450, %v446
    %v455 = vld [vmem:[#allocation7] sm:$0xff]
    %v456 = vld [vmem:[#allocation7 + $0x8] sm:$0xff]
    %v457 = vld [vmem:[#allocation7 + $0x10] sm:$0xff]
    %v458 = vld [vmem:[#allocation7 + $0x18] sm:$0xff]
    %v459 = vld [vmem:[#allocation7 + $0x20] sm:$0xff]
    %v460 = vld [vmem:[#allocation7 + $0x28] sm:$0xff]
    %v461 = vld [vmem:[#allocation7 + $0x30] sm:$0xff]
    %v462 = vld [vmem:[#allocation7 + $0x38] sm:$0xff]
    %v463 = vld [vmem:[#allocation7 + $0x40] sm:$0xff]
    %v464 = vld [vmem:[#allocation7 + $0x48] sm:$0xff]
    %v465 = vld [vmem:[#allocation7 + $0x50] sm:$0xff]
    %v466 = vld [vmem:[#allocation7 + $0x58] sm:$0xff]
    %v467 = vld [vmem:[#allocation7 + $0x60] sm:$0xff]
    %v468 = vld [vmem:[#allocation7 + $0x68] sm:$0xff]
    %v469 = vld [vmem:[#allocation7 + $0x70] sm:$0xff]
    %v470 = vld [vmem:[#allocation7 + $0x78] sm:$0xff]
    %v471 = vld [vmem:[#allocation7 + $0x80] sm:$0xff]
    %v472 = vld [vmem:[#allocation7 + $0x88] sm:$0xff]
    %v473 = vld [vmem:[#allocation7 + $0x90] sm:$0xff]
    %v474 = vld [vmem:[#allocation7 + $0x98] sm:$0xff]
    %v475 = vld [vmem:[#allocation7 + $0xa0] sm:$0xff]
    %v476 = vld [vmem:[#allocation7 + $0xa8] sm:$0xff]
    %v477 = vld [vmem:[#allocation7 + $0xb0] sm:$0xff]
    %v478 = vld [vmem:[#allocation7 + $0xb8] sm:$0xff]
    %v479 = vld [vmem:[#allocation7 + $0xc0] sm:$0xff]
    %v480 = vld [vmem:[#allocation7 + $0xc8] sm:$0xff]
    %v481 = vld [vmem:[#allocation7 + $0xd0] sm:$0xff]
    %v482 = vld [vmem:[#allocation7 + $0xd8] sm:$0xff]
    %v483 = vld [vmem:[#allocation7 + $0xe0] sm:$0xff]
    %v484 = vld [vmem:[#allocation7 + $0xe8] sm:$0xff]
    %v485 = vld [vmem:[#allocation7 + $0xf0] sm:$0xff]
    %v486 = vld [vmem:[#allocation7 + $0xf8] sm:$0xff]
    %v487 = vld [vmem:[#allocation7 + $0x100] sm:$0xff]
    %v488 = vld [vmem:[#allocation7 + $0x108] sm:$0xff]
    %v489 = vld [vmem:[#allocation7 + $0x110] sm:$0xff]
    %v490 = vld [vmem:[#allocation7 + $0x118] sm:$0xff]
    %v491 = vld [vmem:[#allocation7 + $0x120] sm:$0xff]
    %v492 = vld [vmem:[#allocation7 + $0x128] sm:$0xff]
    %v493 = vld [vmem:[#allocation7 + $0x130] sm:$0xff]
    %v494 = vld [vmem:[#allocation7 + $0x138] sm:$0xff]
    %v495 = vld [vmem:[#allocation7 + $0x140] sm:$0xff]
    %v496 = vld [vmem:[#allocation7 + $0x148] sm:$0xff]
    %v497 = vld [vmem:[#allocation7 + $0x150] sm:$0xff]
    %v498 = vld [vmem:[#allocation7 + $0x158] sm:$0xff]
    %v499 = vld [vmem:[#allocation7 + $0x160] sm:$0xff]
    %v500 = vld [vmem:[#allocation7 + $0x168] sm:$0xff]
    %v501 = vld [vmem:[#allocation7 + $0x170] sm:$0xff]
    %v502 = vld [vmem:[#allocation7 + $0x178] sm:$0xff]
    %v503 = vld [vmem:[#allocation7 + $0x180] sm:$0xff]
    %v504 = vld [vmem:[#allocation7 + $0x188] sm:$0xff]
    %v505 = vld [vmem:[#allocation7 + $0x190] sm:$0xff]
    %v506 = vld [vmem:[#allocation7 + $0x198] sm:$0xff]
    %v507 = vld [vmem:[#allocation7 + $0x1a0] sm:$0xff]
    %v508 = vld [vmem:[#allocation7 + $0x1a8] sm:$0xff]
    %v509 = vld [vmem:[#allocation7 + $0x1b0] sm:$0xff]
    %v510 = vld [vmem:[#allocation7 + $0x1b8] sm:$0xff]
    %v511 = vld [vmem:[#allocation7 + $0x1c0] sm:$0xff]
    %v512 = vld [vmem:[#allocation7 + $0x1c8] sm:$0xff]
    %v513 = vld [vmem:[#allocation7 + $0x1d0] sm:$0xff]
    %v514 = vld [vmem:[#allocation7 + $0x1d8] sm:$0xff]
    %v515 = vld [vmem:[#allocation7 + $0x1e0] sm:$0xff]
    %v516 = vld [vmem:[#allocation7 + $0x1e8] sm:$0xff]
    %v517 = vld [vmem:[#allocation7 + $0x1f0] sm:$0xff]
    %v518 = vld [vmem:[#allocation7 + $0x1f8] sm:$0xff]
    %v519 = vld [vmem:[#allocation7 + $0x200] sm:$0xff]
    %v520 = vld [vmem:[#allocation7 + $0x208] sm:$0xff]
    %v521 = vld [vmem:[#allocation7 + $0x210] sm:$0xff]
    %v522 = vld [vmem:[#allocation7 + $0x218] sm:$0xff]
    %v523 = vld [vmem:[#allocation7 + $0x220] sm:$0xff]
    %v524 = vld [vmem:[#allocation7 + $0x228] sm:$0xff]
    %v525 = vld [vmem:[#allocation7 + $0x230] sm:$0xff]
    %v526 = vld [vmem:[#allocation7 + $0x238] sm:$0xff]
    %v527 = vld [vmem:[#allocation7 + $0x240] sm:$0xff]
    %v528 = vld [vmem:[#allocation7 + $0x248] sm:$0xff]
    %v529 = vld [vmem:[#allocation7 + $0x250] sm:$0xff]
    %v530 = vld [vmem:[#allocation7 + $0x258] sm:$0xff]
    %v531 = vld [vmem:[#allocation7 + $0x260] sm:$0xff]
    %v532 = vld [vmem:[#allocation7 + $0x268] sm:$0xff]
    %v533 = vld [vmem:[#allocation7 + $0x270] sm:$0xff]
    %v534 = vld [vmem:[#allocation7 + $0x278] sm:$0xff]
    %v535 = vld [vmem:[#allocation7 + $0x280] sm:$0xff]
    %v536 = vld [vmem:[#allocation7 + $0x288] sm:$0xff]
    %v537 = vld [vmem:[#allocation7 + $0x290] sm:$0xff]
    %v538 = vld [vmem:[#allocation7 + $0x298] sm:$0xff]
    %v539 = vld [vmem:[#allocation7 + $0x2a0] sm:$0xff]
    %v540 = vld [vmem:[#allocation7 + $0x2a8] sm:$0xff]
    %v541 = vld [vmem:[#allocation7 + $0x2b0] sm:$0xff]
    %v542 = vld [vmem:[#allocation7 + $0x2b8] sm:$0xff]
    %v543 = vld [vmem:[#allocation7 + $0x2c0] sm:$0xff]
    %v544 = vld [vmem:[#allocation7 + $0x2c8] sm:$0xff]
    %v545 = vld [vmem:[#allocation7 + $0x2d0] sm:$0xff]
    %v546 = vld [vmem:[#allocation7 + $0x2d8] sm:$0xff]
    %v547 = vld [vmem:[#allocation7 + $0x2e0] sm:$0xff]
    %v548 = vld [vmem:[#allocation7 + $0x2e8] sm:$0xff]
    %v549 = vld [vmem:[#allocation7 + $0x2f0] sm:$0xff]
    %v550 = vld [vmem:[#allocation7 + $0x2f8] sm:$0xff]
    %v551 = vld [vmem:[#allocation7 + $0x300] sm:$0xff]
    %v552 = vld [vmem:[#allocation7 + $0x308] sm:$0xff]
    %v553 = vld [vmem:[#allocation7 + $0x310] sm:$0xff]
    %v554 = vld [vmem:[#allocation7 + $0x318] sm:$0xff]
    %v555 = vld [vmem:[#allocation7 + $0x320] sm:$0xff]
    %v556 = vld [vmem:[#allocation7 + $0x328] sm:$0xff]
    %v557 = vld [vmem:[#allocation7 + $0x330] sm:$0xff]
    %v558 = vld [vmem:[#allocation7 + $0x338] sm:$0xff]
    %v559 = vld [vmem:[#allocation7 + $0x340] sm:$0xff]
    %v560 = vld [vmem:[#allocation7 + $0x348] sm:$0xff]
    %v561 = vld [vmem:[#allocation7 + $0x350] sm:$0xff]
    %v562 = vld [vmem:[#allocation7 + $0x358] sm:$0xff]
    %v563 = vld [vmem:[#allocation7 + $0x360] sm:$0xff]
    %v564 = vld [vmem:[#allocation7 + $0x368] sm:$0xff]
    %v565 = vld [vmem:[#allocation7 + $0x370] sm:$0xff]
    %v566 = vld [vmem:[#allocation7 + $0x378] sm:$0xff]
    %v567 = vld [vmem:[#allocation7 + $0x380] sm:$0xff]
    %v568 = vld [vmem:[#allocation7 + $0x388] sm:$0xff]
    %v569 = vld [vmem:[#allocation7 + $0x390] sm:$0xff]
    %v570 = vld [vmem:[#allocation7 + $0x398] sm:$0xff]
    %v571 = vld [vmem:[#allocation7 + $0x3a0] sm:$0xff]
    %v572 = vld [vmem:[#allocation7 + $0x3a8] sm:$0xff]
    %v573 = vld [vmem:[#allocation7 + $0x3b0] sm:$0xff]
    %v574 = vld [vmem:[#allocation7 + $0x3b8] sm:$0xff]
    %v575 = vld [vmem:[#allocation7 + $0x3c0] sm:$0xff]
    %v576 = vld [vmem:[#allocation7 + $0x3c8] sm:$0xff]
    %v577 = vld [vmem:[#allocation7 + $0x3d0] sm:$0xff]
    %v578 = vld [vmem:[#allocation7 + $0x3d8] sm:$0xff]
    %v579 = vld [vmem:[#allocation7 + $0x3e0] sm:$0xff]
    %v580 = vld [vmem:[#allocation7 + $0x3e8] sm:$0xff]
    %v581 = vld [vmem:[#allocation7 + $0x3f0] sm:$0xff]
    %v582 = vld [vmem:[#allocation7 + $0x3f8] sm:$0xff]
    %v583 = vld [vmem:[#allocation8] sm:$0xf]
    %v585 = vlaneseq
    %v586 = vshrl.u32 %v585, 7
    %v587 = vsub.s32 0, %v586
    %v588 = vrot.slane %v583, %v587
    %v589 = vlaneseq
    %v590 = vshrl.u32 %v589, 7
    %v591 = vsub.s32 1, %v590
    %v592 = vrot.slane %v583, %v591
    %v593 = vlaneseq
    %v594 = vshrl.u32 %v593, 7
    %v595 = vsub.s32 2, %v594
    %v596 = vrot.slane %v583, %v595
    %v597 = vlaneseq
    %v598 = vshrl.u32 %v597, 7
    %v599 = vsub.s32 3, %v598
    %v600 = vrot.slane %v583, %v599
    %v733 = vunpack.c.l.b16 %v455
    %v734 = vunpack.c.h.b16 %v455
    %v735 = vunpack.c.l.b16 %v456
    %v736 = vunpack.c.h.b16 %v456
    %v737 = vunpack.c.l.b16 %v457
    %v738 = vunpack.c.h.b16 %v457
    %v739 = vunpack.c.l.b16 %v458
    %v740 = vunpack.c.h.b16 %v458
    %v741 = vunpack.c.l.b16 %v459
    %v742 = vunpack.c.h.b16 %v459
    %v743 = vunpack.c.l.b16 %v460
    %v744 = vunpack.c.h.b16 %v460
    %v745 = vunpack.c.l.b16 %v461
    %v746 = vunpack.c.h.b16 %v461
    %v747 = vunpack.c.l.b16 %v462
    %v748 = vunpack.c.h.b16 %v462
    %v749 = vunpack.c.l.b16 %v463
    %v750 = vunpack.c.h.b16 %v463
    %v751 = vunpack.c.l.b16 %v464
    %v752 = vunpack.c.h.b16 %v464
    %v753 = vunpack.c.l.b16 %v465
    %v754 = vunpack.c.h.b16 %v465
    %v755 = vunpack.c.l.b16 %v466
    %v756 = vunpack.c.h.b16 %v466
    %v757 = vunpack.c.l.b16 %v467
    %v758 = vunpack.c.h.b16 %v467
    %v759 = vunpack.c.l.b16 %v468
    %v760 = vunpack.c.h.b16 %v468
    %v761 = vunpack.c.l.b16 %v469
    %v762 = vunpack.c.h.b16 %v469
    %v763 = vunpack.c.l.b16 %v470
    %v764 = vunpack.c.h.b16 %v470
    %v765 = vunpack.c.l.b16 %v471
    %v766 = vunpack.c.h.b16 %v471
    %v767 = vunpack.c.l.b16 %v472
    %v768 = vunpack.c.h.b16 %v472
    %v769 = vunpack.c.l.b16 %v473
    %v770 = vunpack.c.h.b16 %v473
    %v771 = vunpack.c.l.b16 %v474
    %v772 = vunpack.c.h.b16 %v474
    %v773 = vunpack.c.l.b16 %v475
    %v774 = vunpack.c.h.b16 %v475
    %v775 = vunpack.c.l.b16 %v476
    %v776 = vunpack.c.h.b16 %v476
    %v777 = vunpack.c.l.b16 %v477
    %v778 = vunpack.c.h.b16 %v477
    %v779 = vunpack.c.l.b16 %v478
    %v780 = vunpack.c.h.b16 %v478
    %v781 = vunpack.c.l.b16 %v479
    %v782 = vunpack.c.h.b16 %v479
    %v783 = vunpack.c.l.b16 %v480
    %v784 = vunpack.c.h.b16 %v480
    %v785 = vunpack.c.l.b16 %v481
    %v786 = vunpack.c.h.b16 %v481
    %v787 = vunpack.c.l.b16 %v482
    %v788 = vunpack.c.h.b16 %v482
    %v789 = vunpack.c.l.b16 %v483
    %v790 = vunpack.c.h.b16 %v483
    %v791 = vunpack.c.l.b16 %v484
    %v792 = vunpack.c.h.b16 %v484
    %v793 = vunpack.c.l.b16 %v485
    %v794 = vunpack.c.h.b16 %v485
    %v795 = vunpack.c.l.b16 %v486
    %v796 = vunpack.c.h.b16 %v486
    %v797 = vunpack.c.l.b16 %v487
    %v798 = vunpack.c.h.b16 %v487
    %v799 = vunpack.c.l.b16 %v488
    %v800 = vunpack.c.h.b16 %v488
    %v801 = vunpack.c.l.b16 %v489
    %v802 = vunpack.c.h.b16 %v489
    %v803 = vunpack.c.l.b16 %v490
    %v804 = vunpack.c.h.b16 %v490
    %v805 = vunpack.c.l.b16 %v491
    %v806 = vunpack.c.h.b16 %v491
    %v807 = vunpack.c.l.b16 %v492
    %v808 = vunpack.c.h.b16 %v492
    %v809 = vunpack.c.l.b16 %v493
    %v810 = vunpack.c.h.b16 %v493
    %v811 = vunpack.c.l.b16 %v494
    %v812 = vunpack.c.h.b16 %v494
    %v813 = vunpack.c.l.b16 %v495
    %v814 = vunpack.c.h.b16 %v495
    %v815 = vunpack.c.l.b16 %v496
    %v816 = vunpack.c.h.b16 %v496
    %v817 = vunpack.c.l.b16 %v497
    %v818 = vunpack.c.h.b16 %v497
    %v819 = vunpack.c.l.b16 %v498
    %v820 = vunpack.c.h.b16 %v498
    %v821 = vunpack.c.l.b16 %v499
    %v822 = vunpack.c.h.b16 %v499
    %v823 = vunpack.c.l.b16 %v500
    %v824 = vunpack.c.h.b16 %v500
    %v825 = vunpack.c.l.b16 %v501
    %v826 = vunpack.c.h.b16 %v501
    %v827 = vunpack.c.l.b16 %v502
    %v828 = vunpack.c.h.b16 %v502
    %v829 = vunpack.c.l.b16 %v503
    %v830 = vunpack.c.h.b16 %v503
    %v831 = vunpack.c.l.b16 %v504
    %v832 = vunpack.c.h.b16 %v504
    %v833 = vunpack.c.l.b16 %v505
    %v834 = vunpack.c.h.b16 %v505
    %v835 = vunpack.c.l.b16 %v506
    %v836 = vunpack.c.h.b16 %v506
    %v837 = vunpack.c.l.b16 %v507
    %v838 = vunpack.c.h.b16 %v507
    %v839 = vunpack.c.l.b16 %v508
    %v840 = vunpack.c.h.b16 %v508
    %v841 = vunpack.c.l.b16 %v509
    %v842 = vunpack.c.h.b16 %v509
    %v843 = vunpack.c.l.b16 %v510
    %v844 = vunpack.c.h.b16 %v510
    %v845 = vunpack.c.l.b16 %v511
    %v846 = vunpack.c.h.b16 %v511
    %v847 = vunpack.c.l.b16 %v512
    %v848 = vunpack.c.h.b16 %v512
    %v849 = vunpack.c.l.b16 %v513
    %v850 = vunpack.c.h.b16 %v513
    %v851 = vunpack.c.l.b16 %v514
    %v852 = vunpack.c.h.b16 %v514
    %v853 = vunpack.c.l.b16 %v515
    %v854 = vunpack.c.h.b16 %v515
    %v855 = vunpack.c.l.b16 %v516
    %v856 = vunpack.c.h.b16 %v516
    %v857 = vunpack.c.l.b16 %v517
    %v858 = vunpack.c.h.b16 %v517
    %v859 = vunpack.c.l.b16 %v518
    %v860 = vunpack.c.h.b16 %v518
    %v861 = vunpack.c.l.b16 %v519
    %v862 = vunpack.c.h.b16 %v519
    %v863 = vunpack.c.l.b16 %v520
    %v864 = vunpack.c.h.b16 %v520
    %v865 = vunpack.c.l.b16 %v521
    %v866 = vunpack.c.h.b16 %v521
    %v867 = vunpack.c.l.b16 %v522
    %v868 = vunpack.c.h.b16 %v522
    %v869 = vunpack.c.l.b16 %v523
    %v870 = vunpack.c.h.b16 %v523
    %v871 = vunpack.c.l.b16 %v524
    %v872 = vunpack.c.h.b16 %v524
    %v873 = vunpack.c.l.b16 %v525
    %v874 = vunpack.c.h.b16 %v525
    %v875 = vunpack.c.l.b16 %v526
    %v876 = vunpack.c.h.b16 %v526
    %v877 = vunpack.c.l.b16 %v527
    %v878 = vunpack.c.h.b16 %v527
    %v879 = vunpack.c.l.b16 %v528
    %v880 = vunpack.c.h.b16 %v528
    %v881 = vunpack.c.l.b16 %v529
    %v882 = vunpack.c.h.b16 %v529
    %v883 = vunpack.c.l.b16 %v530
    %v884 = vunpack.c.h.b16 %v530
    %v885 = vunpack.c.l.b16 %v531
    %v886 = vunpack.c.h.b16 %v531
    %v887 = vunpack.c.l.b16 %v532
    %v888 = vunpack.c.h.b16 %v532
    %v889 = vunpack.c.l.b16 %v533
    %v890 = vunpack.c.h.b16 %v533
    %v891 = vunpack.c.l.b16 %v534
    %v892 = vunpack.c.h.b16 %v534
    %v893 = vunpack.c.l.b16 %v535
    %v894 = vunpack.c.h.b16 %v535
    %v895 = vunpack.c.l.b16 %v536
    %v896 = vunpack.c.h.b16 %v536
    %v897 = vunpack.c.l.b16 %v537
    %v898 = vunpack.c.h.b16 %v537
    %v899 = vunpack.c.l.b16 %v538
    %v900 = vunpack.c.h.b16 %v538
    %v901 = vunpack.c.l.b16 %v539
    %v902 = vunpack.c.h.b16 %v539
    %v903 = vunpack.c.l.b16 %v540
    %v904 = vunpack.c.h.b16 %v540
    %v905 = vunpack.c.l.b16 %v541
    %v906 = vunpack.c.h.b16 %v541
    %v907 = vunpack.c.l.b16 %v542
    %v908 = vunpack.c.h.b16 %v542
    %v909 = vunpack.c.l.b16 %v543
    %v910 = vunpack.c.h.b16 %v543
    %v911 = vunpack.c.l.b16 %v544
    %v912 = vunpack.c.h.b16 %v544
    %v913 = vunpack.c.l.b16 %v545
    %v914 = vunpack.c.h.b16 %v545
    %v915 = vunpack.c.l.b16 %v546
    %v916 = vunpack.c.h.b16 %v546
    %v917 = vunpack.c.l.b16 %v547
    %v918 = vunpack.c.h.b16 %v547
    %v919 = vunpack.c.l.b16 %v548
    %v920 = vunpack.c.h.b16 %v548
    %v921 = vunpack.c.l.b16 %v549
    %v922 = vunpack.c.h.b16 %v549
    %v923 = vunpack.c.l.b16 %v550
    %v924 = vunpack.c.h.b16 %v550
    %v925 = vunpack.c.l.b16 %v551
    %v926 = vunpack.c.h.b16 %v551
    %v927 = vunpack.c.l.b16 %v552
    %v928 = vunpack.c.h.b16 %v552
    %v929 = vunpack.c.l.b16 %v553
    %v930 = vunpack.c.h.b16 %v553
    %v931 = vunpack.c.l.b16 %v554
    %v932 = vunpack.c.h.b16 %v554
    %v933 = vunpack.c.l.b16 %v555
    %v934 = vunpack.c.h.b16 %v555
    %v935 = vunpack.c.l.b16 %v556
    %v936 = vunpack.c.h.b16 %v556
    %v937 = vunpack.c.l.b16 %v557
    %v938 = vunpack.c.h.b16 %v557
    %v939 = vunpack.c.l.b16 %v558
    %v940 = vunpack.c.h.b16 %v558
    %v941 = vunpack.c.l.b16 %v559
    %v942 = vunpack.c.h.b16 %v559
    %v943 = vunpack.c.l.b16 %v560
    %v944 = vunpack.c.h.b16 %v560
    %v945 = vunpack.c.l.b16 %v561
    %v946 = vunpack.c.h.b16 %v561
    %v947 = vunpack.c.l.b16 %v562
    %v948 = vunpack.c.h.b16 %v562
    %v949 = vunpack.c.l.b16 %v563
    %v950 = vunpack.c.h.b16 %v563
    %v951 = vunpack.c.l.b16 %v564
    %v952 = vunpack.c.h.b16 %v564
    %v953 = vunpack.c.l.b16 %v565
    %v954 = vunpack.c.h.b16 %v565
    %v955 = vunpack.c.l.b16 %v566
    %v956 = vunpack.c.h.b16 %v566
    %v957 = vunpack.c.l.b16 %v567
    %v958 = vunpack.c.h.b16 %v567
    %v959 = vunpack.c.l.b16 %v568
    %v960 = vunpack.c.h.b16 %v568
    %v961 = vunpack.c.l.b16 %v569
    %v962 = vunpack.c.h.b16 %v569
    %v963 = vunpack.c.l.b16 %v570
    %v964 = vunpack.c.h.b16 %v570
    %v965 = vunpack.c.l.b16 %v571
    %v966 = vunpack.c.h.b16 %v571
    %v967 = vunpack.c.l.b16 %v572
    %v968 = vunpack.c.h.b16 %v572
    %v969 = vunpack.c.l.b16 %v573
    %v970 = vunpack.c.h.b16 %v573
    %v971 = vunpack.c.l.b16 %v574
    %v972 = vunpack.c.h.b16 %v574
    %v973 = vunpack.c.l.b16 %v575
    %v974 = vunpack.c.h.b16 %v575
    %v975 = vunpack.c.l.b16 %v576
    %v976 = vunpack.c.h.b16 %v576
    %v977 = vunpack.c.l.b16 %v577
    %v978 = vunpack.c.h.b16 %v577
    %v979 = vunpack.c.l.b16 %v578
    %v980 = vunpack.c.h.b16 %v578
    %v981 = vunpack.c.l.b16 %v579
    %v982 = vunpack.c.h.b16 %v579
    %v983 = vunpack.c.l.b16 %v580
    %v984 = vunpack.c.h.b16 %v580
    %v985 = vunpack.c.l.b16 %v581
    %v986 = vunpack.c.h.b16 %v581
    %v987 = vunpack.c.l.b16 %v582
    %v988 = vunpack.c.h.b16 %v582
    %v989 = vpack.c.b16 %v737, %v733
    %v990 = vpack.c.b16 %v738, %v734
    %v991 = vpack.c.b16 %v739, %v735
    %v992 = vpack.c.b16 %v740, %v736
    %v993 = vpack.c.b16 %v745, %v741
    %v994 = vpack.c.b16 %v746, %v742
    %v995 = vpack.c.b16 %v747, %v743
    %v996 = vpack.c.b16 %v748, %v744
    %v997 = vpack.c.b16 %v753, %v749
    %v998 = vpack.c.b16 %v754, %v750
    %v999 = vpack.c.b16 %v755, %v751
    %v1000 = vpack.c.b16 %v756, %v752
    %v1001 = vpack.c.b16 %v761, %v757
    %v1002 = vpack.c.b16 %v762, %v758
    %v1003 = vpack.c.b16 %v763, %v759
    %v1004 = vpack.c.b16 %v764, %v760
    %v1005 = vpack.c.b16 %v769, %v765
    %v1006 = vpack.c.b16 %v770, %v766
    %v1007 = vpack.c.b16 %v771, %v767
    %v1008 = vpack.c.b16 %v772, %v768
    %v1009 = vpack.c.b16 %v777, %v773
    %v1010 = vpack.c.b16 %v778, %v774
    %v1011 = vpack.c.b16 %v779, %v775
    %v1012 = vpack.c.b16 %v780, %v776
    %v1013 = vpack.c.b16 %v785, %v781
    %v1014 = vpack.c.b16 %v786, %v782
    %v1015 = vpack.c.b16 %v787, %v783
    %v1016 = vpack.c.b16 %v788, %v784
    %v1017 = vpack.c.b16 %v793, %v789
    %v1018 = vpack.c.b16 %v794, %v790
    %v1019 = vpack.c.b16 %v795, %v791
    %v1020 = vpack.c.b16 %v796, %v792
    %v1021 = vpack.c.b16 %v801, %v797
    %v1022 = vpack.c.b16 %v802, %v798
    %v1023 = vpack.c.b16 %v803, %v799
    %v1024 = vpack.c.b16 %v804, %v800
    %v1025 = vpack.c.b16 %v809, %v805
    %v1026 = vpack.c.b16 %v810, %v806
    %v1027 = vpack.c.b16 %v811, %v807
    %v1028 = vpack.c.b16 %v812, %v808
    %v1029 = vpack.c.b16 %v817, %v813
    %v1030 = vpack.c.b16 %v818, %v814
    %v1031 = vpack.c.b16 %v819, %v815
    %v1032 = vpack.c.b16 %v820, %v816
    %v1033 = vpack.c.b16 %v825, %v821
    %v1034 = vpack.c.b16 %v826, %v822
    %v1035 = vpack.c.b16 %v827, %v823
    %v1036 = vpack.c.b16 %v828, %v824
    %v1037 = vpack.c.b16 %v833, %v829
    %v1038 = vpack.c.b16 %v834, %v830
    %v1039 = vpack.c.b16 %v835, %v831
    %v1040 = vpack.c.b16 %v836, %v832
    %v1041 = vpack.c.b16 %v841, %v837
    %v1042 = vpack.c.b16 %v842, %v838
    %v1043 = vpack.c.b16 %v843, %v839
    %v1044 = vpack.c.b16 %v844, %v840
    %v1045 = vpack.c.b16 %v849, %v845
    %v1046 = vpack.c.b16 %v850, %v846
    %v1047 = vpack.c.b16 %v851, %v847
    %v1048 = vpack.c.b16 %v852, %v848
    %v1049 = vpack.c.b16 %v857, %v853
    %v1050 = vpack.c.b16 %v858, %v854
    %v1051 = vpack.c.b16 %v859, %v855
    %v1052 = vpack.c.b16 %v860, %v856
    %v1053 = vpack.c.b16 %v865, %v861
    %v1054 = vpack.c.b16 %v866, %v862
    %v1055 = vpack.c.b16 %v867, %v863
    %v1056 = vpack.c.b16 %v868, %v864
    %v1057 = vpack.c.b16 %v873, %v869
    %v1058 = vpack.c.b16 %v874, %v870
    %v1059 = vpack.c.b16 %v875, %v871
    %v1060 = vpack.c.b16 %v876, %v872
    %v1061 = vpack.c.b16 %v881, %v877
    %v1062 = vpack.c.b16 %v882, %v878
    %v1063 = vpack.c.b16 %v883, %v879
    %v1064 = vpack.c.b16 %v884, %v880
    %v1065 = vpack.c.b16 %v889, %v885
    %v1066 = vpack.c.b16 %v890, %v886
    %v1067 = vpack.c.b16 %v891, %v887
    %v1068 = vpack.c.b16 %v892, %v888
    %v1069 = vpack.c.b16 %v897, %v893
    %v1070 = vpack.c.b16 %v898, %v894
    %v1071 = vpack.c.b16 %v899, %v895
    %v1072 = vpack.c.b16 %v900, %v896
    %v1073 = vpack.c.b16 %v905, %v901
    %v1074 = vpack.c.b16 %v906, %v902
    %v1075 = vpack.c.b16 %v907, %v903
    %v1076 = vpack.c.b16 %v908, %v904
    %v1077 = vpack.c.b16 %v913, %v909
    %v1078 = vpack.c.b16 %v914, %v910
    %v1079 = vpack.c.b16 %v915, %v911
    %v1080 = vpack.c.b16 %v916, %v912
    %v1081 = vpack.c.b16 %v921, %v917
    %v1082 = vpack.c.b16 %v922, %v918
    %v1083 = vpack.c.b16 %v923, %v919
    %v1084 = vpack.c.b16 %v924, %v920
    %v1085 = vpack.c.b16 %v929, %v925
    %v1086 = vpack.c.b16 %v930, %v926
    %v1087 = vpack.c.b16 %v931, %v927
    %v1088 = vpack.c.b16 %v932, %v928
    %v1089 = vpack.c.b16 %v937, %v933
    %v1090 = vpack.c.b16 %v938, %v934
    %v1091 = vpack.c.b16 %v939, %v935
    %v1092 = vpack.c.b16 %v940, %v936
    %v1093 = vpack.c.b16 %v945, %v941
    %v1094 = vpack.c.b16 %v946, %v942
    %v1095 = vpack.c.b16 %v947, %v943
    %v1096 = vpack.c.b16 %v948, %v944
    %v1097 = vpack.c.b16 %v953, %v949
    %v1098 = vpack.c.b16 %v954, %v950
    %v1099 = vpack.c.b16 %v955, %v951
    %v1100 = vpack.c.b16 %v956, %v952
    %v1101 = vpack.c.b16 %v961, %v957
    %v1102 = vpack.c.b16 %v962, %v958
    %v1103 = vpack.c.b16 %v963, %v959
    %v1104 = vpack.c.b16 %v964, %v960
    %v1105 = vpack.c.b16 %v969, %v965
    %v1106 = vpack.c.b16 %v970, %v966
    %v1107 = vpack.c.b16 %v971, %v967
    %v1108 = vpack.c.b16 %v972, %v968
    %v1109 = vpack.c.b16 %v977, %v973
    %v1110 = vpack.c.b16 %v978, %v974
    %v1111 = vpack.c.b16 %v979, %v975
    %v1112 = vpack.c.b16 %v980, %v976
    %v1113 = vpack.c.b16 %v985, %v981
    %v1114 = vpack.c.b16 %v986, %v982
    %v1115 = vpack.c.b16 %v987, %v983
    %v1116 = vpack.c.b16 %v988, %v984
    %1245 = vmatprep.subr.bf16.mxu0 %v1018
    %1246 = vmatpush1.bf16.msra.mxu0 %v1017
    %1247 = vmatprep.subr.bf16.mxu0 %v1014
    %1248 = vmatpush1.bf16.msra.mxu0 %v1013
    %1249 = vmatprep.subr.bf16.mxu0 %v1010
    %1250 = vmatpush1.bf16.msra.mxu0 %v1009
    %1251 = vmatprep.subr.bf16.mxu0 %v1006
    %1252 = vmatpush1.bf16.msra.mxu0 %v1005
    %1253 = vmatprep.subr.bf16.mxu0 %v1002
    %1254 = vmatpush1.bf16.msra.mxu0 %v1001
    %1255 = vmatprep.subr.bf16.mxu0 %v998
    %1256 = vmatpush1.bf16.msra.mxu0 %v997
    %1257 = vmatprep.subr.bf16.mxu0 %v994
    %1258 = vmatpush1.bf16.msra.mxu0 %v993
    %1259 = vmatprep.subr.bf16.mxu0 %v990
    %1260 = vmatpush1.bf16.msra.mxu0 %v989
    %1261 = vmatprep.subr.bf16.mxu0 %v1050
    %1262 = vmatpush2.bf16.msra.mxu0 %v1049
    %1263 = vmatprep.subr.bf16.mxu0 %v1046
    %1264 = vmatpush2.bf16.msra.mxu0 %v1045
    %1265 = vmatprep.subr.bf16.mxu0 %v1042
    %1266 = vmatpush2.bf16.msra.mxu0 %v1041
    %1267 = vmatprep.subr.bf16.mxu0 %v1038
    %1268 = vmatpush2.bf16.msra.mxu0 %v1037
    %1269 = vmatprep.subr.bf16.mxu0 %v1034
    %1270 = vmatpush2.bf16.msra.mxu0 %v1033
    %1271 = vmatprep.subr.bf16.mxu0 %v1030
    %1272 = vmatpush2.bf16.msra.mxu0 %v1029
    %1273 = vmatprep.subr.bf16.mxu0 %v1026
    %1274 = vmatpush2.bf16.msra.mxu0 %v1025
    %1275 = vmatprep.subr.bf16.mxu0 %v1022
    %1276 = vmatpush2.bf16.msra.mxu0 %v1021
    %1277 = vmatprep.mubr.bf16.mxu0 %v452
    %1278 = vmatmul.mubr.bf16.gmra.mxu0 %v451
    %v1279 = vpop.f32.mrf.mxu0
    %v1280 = vadd.f32 %v588, %v1279
    %v1281 = vpop.f32.mrf.mxu0
    %v1282 = vadd.f32 %v592, %v1281
    %v1283 = vpop.f32.mrf.mxu0
    %v1284 = vadd.f32 %v588, %v1283
    %v1285 = vpop.f32.mrf.mxu0
    %v1286 = vadd.f32 %v592, %v1285
    %1287 = vdwg.mxu0
    %1288 = vmatprep.subr.bf16.mxu0 %v1082
    %1289 = vmatpush1.bf16.msra.mxu0 %v1081
    %1290 = vmatprep.subr.bf16.mxu0 %v1078
    %1291 = vmatpush1.bf16.msra.mxu0 %v1077
    %1292 = vmatprep.subr.bf16.mxu0 %v1074
    %1293 = vmatpush1.bf16.msra.mxu0 %v1073
    %1294 = vmatprep.subr.bf16.mxu0 %v1070
    %1295 = vmatpush1.bf16.msra.mxu0 %v1069
    %1296 = vmatprep.subr.bf16.mxu0 %v1066
    %1297 = vmatpush1.bf16.msra.mxu0 %v1065
    %1298 = vmatprep.subr.bf16.mxu0 %v1062
    %1299 = vmatpush1.bf16.msra.mxu0 %v1061
    %1300 = vmatprep.subr.bf16.mxu0 %v1058
    %1301 = vmatpush1.bf16.msra.mxu0 %v1057
    %1302 = vmatprep.subr.bf16.mxu0 %v1054
    %1303 = vmatpush1.bf16.msra.mxu0 %v1053
    %1304 = vmatprep.subr.bf16.mxu0 %v1114
    %1305 = vmatpush2.bf16.msra.mxu0 %v1113
    %1306 = vmatprep.subr.bf16.mxu0 %v1110
    %1307 = vmatpush2.bf16.msra.mxu0 %v1109
    %1308 = vmatprep.subr.bf16.mxu0 %v1106
    %1309 = vmatpush2.bf16.msra.mxu0 %v1105
    %1310 = vmatprep.subr.bf16.mxu0 %v1102
    %1311 = vmatpush2.bf16.msra.mxu0 %v1101
    %1312 = vmatprep.subr.bf16.mxu0 %v1098
    %1313 = vmatpush2.bf16.msra.mxu0 %v1097
    %1314 = vmatprep.subr.bf16.mxu0 %v1094
    %1315 = vmatpush2.bf16.msra.mxu0 %v1093
    %1316 = vmatprep.subr.bf16.mxu0 %v1090
    %1317 = vmatpush2.bf16.msra.mxu0 %v1089
    %1318 = vmatprep.subr.bf16.mxu0 %v1086
    %1319 = vmatpush2.bf16.msra.mxu0 %v1085
    %1320 = vmatprep.mubr.bf16.mxu0 %v454
    %1321 = vmatmul.mubr.bf16.gmra.mxu0 %v453
    %v1322 = vpop.f32.mrf.mxu0
    %v1323 = vadd.f32 %v1280, %v1322
    %v1324 = vpop.f32.mrf.mxu0
    %v1325 = vadd.f32 %v1282, %v1324
    %v1326 = vpop.f32.mrf.mxu0
    %v1327 = vadd.f32 %v1284, %v1326
    %v1328 = vpop.f32.mrf.mxu0
    %v1329 = vadd.f32 %v1286, %v1328
    %1330 = vdwg.mxu0
    %1331 = vmatprep.subr.bf16.mxu0 %v1020
    %1332 = vmatpush1.bf16.msra.mxu0 %v1019
    %1333 = vmatprep.subr.bf16.mxu0 %v1016
    %1334 = vmatpush1.bf16.msra.mxu0 %v1015
    %1335 = vmatprep.subr.bf16.mxu0 %v1012
    %1336 = vmatpush1.bf16.msra.mxu0 %v1011
    %1337 = vmatprep.subr.bf16.mxu0 %v1008
    %1338 = vmatpush1.bf16.msra.mxu0 %v1007
    %1339 = vmatprep.subr.bf16.mxu0 %v1004
    %1340 = vmatpush1.bf16.msra.mxu0 %v1003
    %1341 = vmatprep.subr.bf16.mxu0 %v1000
    %1342 = vmatpush1.bf16.msra.mxu0 %v999
    %1343 = vmatprep.subr.bf16.mxu0 %v996
    %1344 = vmatpush1.bf16.msra.mxu0 %v995
    %1345 = vmatprep.subr.bf16.mxu0 %v992
    %1346 = vmatpush1.bf16.msra.mxu0 %v991
    %1347 = vmatprep.subr.bf16.mxu0 %v1052
    %1348 = vmatpush2.bf16.msra.mxu0 %v1051
    %1349 = vmatprep.subr.bf16.mxu0 %v1048
    %1350 = vmatpush2.bf16.msra.mxu0 %v1047
    %1351 = vmatprep.subr.bf16.mxu0 %v1044
    %1352 = vmatpush2.bf16.msra.mxu0 %v1043
    %1353 = vmatprep.subr.bf16.mxu0 %v1040
    %1354 = vmatpush2.bf16.msra.mxu0 %v1039
    %1355 = vmatprep.subr.bf16.mxu0 %v1036
    %1356 = vmatpush2.bf16.msra.mxu0 %v1035
    %1357 = vmatprep.subr.bf16.mxu0 %v1032
    %1358 = vmatpush2.bf16.msra.mxu0 %v1031
    %1359 = vmatprep.subr.bf16.mxu0 %v1028
    %1360 = vmatpush2.bf16.msra.mxu0 %v1027
    %1361 = vmatprep.subr.bf16.mxu0 %v1024
    %1362 = vmatpush2.bf16.msra.mxu0 %v1023
    %1363 = vmatprep.mubr.bf16.mxu0 %v452
    %1364 = vmatmul.mubr.bf16.gmra.mxu0 %v451
    %v1365 = vpop.f32.mrf.mxu0
    %v1366 = vadd.f32 %v596, %v1365
    %v1367 = vpop.f32.mrf.mxu0
    %v1368 = vadd.f32 %v600, %v1367
    %v1369 = vpop.f32.mrf.mxu0
    %v1370 = vadd.f32 %v596, %v1369
    %v1371 = vpop.f32.mrf.mxu0
    %v1372 = vadd.f32 %v600, %v1371
    %1373 = vdwg.mxu0
    %1374 = vmatprep.subr.bf16.mxu0 %v1084
    %1375 = vmatpush1.bf16.msra.mxu0 %v1083
    %1376 = vmatprep.subr.bf16.mxu0 %v1080
    %1377 = vmatpush1.bf16.msra.mxu0 %v1079
    %1378 = vmatprep.subr.bf16.mxu0 %v1076
    %1379 = vmatpush1.bf16.msra.mxu0 %v1075
    %1380 = vmatprep.subr.bf16.mxu0 %v1072
    %1381 = vmatpush1.bf16.msra.mxu0 %v1071
    %1382 = vmatprep.subr.bf16.mxu0 %v1068
    %1383 = vmatpush1.bf16.msra.mxu0 %v1067
    %1384 = vmatprep.subr.bf16.mxu0 %v1064
    %1385 = vmatpush1.bf16.msra.mxu0 %v1063
    %1386 = vmatprep.subr.bf16.mxu0 %v1060
    %1387 = vmatpush1.bf16.msra.mxu0 %v1059
    %1388 = vmatprep.subr.bf16.mxu0 %v1056
    %1389 = vmatpush1.bf16.msra.mxu0 %v1055
    %1390 = vmatprep.subr.bf16.mxu0 %v1116
    %1391 = vmatpush2.bf16.msra.mxu0 %v1115
    %1392 = vmatprep.subr.bf16.mxu0 %v1112
    %1393 = vmatpush2.bf16.msra.mxu0 %v1111
    %1394 = vmatprep.subr.bf16.mxu0 %v1108
    %1395 = vmatpush2.bf16.msra.mxu0 %v1107
    %1396 = vmatprep.subr.bf16.mxu0 %v1104
    %1397 = vmatpush2.bf16.msra.mxu0 %v1103
    %1398 = vmatprep.subr.bf16.mxu0 %v1100
    %1399 = vmatpush2.bf16.msra.mxu0 %v1099
    %1400 = vmatprep.subr.bf16.mxu0 %v1096
    %1401 = vmatpush2.bf16.msra.mxu0 %v1095
    %1402 = vmatprep.subr.bf16.mxu0 %v1092
    %1403 = vmatpush2.bf16.msra.mxu0 %v1091
    %1404 = vmatprep.subr.bf16.mxu0 %v1088
    %1405 = vmatpush2.bf16.msra.mxu0 %v1087
    %1406 = vmatprep.mubr.bf16.mxu0 %v454
    %1407 = vmatmul.mubr.bf16.gmra.mxu0 %v453
    %v1408 = vpop.f32.mrf.mxu0
    %v1409 = vadd.f32 %v1366, %v1408
    %v1410 = vpop.f32.mrf.mxu0
    %v1411 = vadd.f32 %v1368, %v1410
    %v1412 = vpop.f32.mrf.mxu0
    %v1413 = vadd.f32 %v1370, %v1412
    %v1414 = vpop.f32.mrf.mxu0
    %v1415 = vadd.f32 %v1372, %v1414
    %1416 = vdwg.mxu0
    %v1417 = vmax.f32 %v1323, 0.0
    %v1418 = vmax.f32 %v1325, 0.0
    %v1419 = vmax.f32 %v1409, 0.0
    %v1420 = vmax.f32 %v1411, 0.0
    %v1421 = vmax.f32 %v1327, 0.0
    %v1422 = vmax.f32 %v1329, 0.0
    %v1423 = vmax.f32 %v1413, 0.0
    %v1424 = vmax.f32 %v1415, 0.0
    %v1425 = vpack.c.bf16 %v1421, %v1417
    %v1426 = vpack.c.bf16 %v1422, %v1418
    %v1427 = vpack.c.bf16 %v1423, %v1419
    %v1428 = vpack.c.bf16 %v1424, %v1420
    %v1429 = vld [vmem:[#allocation10] sm:$0xff]
    %v1430 = vld [vmem:[#allocation10 + $0x8] sm:$0xff]
    %v1431 = vld [vmem:[#allocation10 + $0x10] sm:$0xff]
    %v1432 = vld [vmem:[#allocation10 + $0x18] sm:$0xff]
    %v1433 = vld [vmem:[#allocation10 + $0x20] sm:$0xff]
    %v1434 = vld [vmem:[#allocation10 + $0x28] sm:$0xff]
    %v1435 = vld [vmem:[#allocation10 + $0x30] sm:$0xff]
    %v1436 = vld [vmem:[#allocation10 + $0x38] sm:$0xff]
    %v1437 = vld [vmem:[#allocation10 + $0x40] sm:$0xff]
    %v1438 = vld [vmem:[#allocation10 + $0x48] sm:$0xff]
    %v1439 = vld [vmem:[#allocation10 + $0x50] sm:$0xff]
    %v1440 = vld [vmem:[#allocation10 + $0x58] sm:$0xff]
    %v1441 = vld [vmem:[#allocation10 + $0x60] sm:$0xff]
    %v1442 = vld [vmem:[#allocation10 + $0x68] sm:$0xff]
    %v1443 = vld [vmem:[#allocation10 + $0x70] sm:$0xff]
    %v1444 = vld [vmem:[#allocation10 + $0x78] sm:$0xff]
    %v1445 = vld [vmem:[#allocation10 + $0x80] sm:$0xff]
    %v1446 = vld [vmem:[#allocation10 + $0x88] sm:$0xff]
    %v1447 = vld [vmem:[#allocation10 + $0x90] sm:$0xff]
    %v1448 = vld [vmem:[#allocation10 + $0x98] sm:$0xff]
    %v1449 = vld [vmem:[#allocation10 + $0xa0] sm:$0xff]
    %v1450 = vld [vmem:[#allocation10 + $0xa8] sm:$0xff]
    %v1451 = vld [vmem:[#allocation10 + $0xb0] sm:$0xff]
    %v1452 = vld [vmem:[#allocation10 + $0xb8] sm:$0xff]
    %v1453 = vld [vmem:[#allocation10 + $0xc0] sm:$0xff]
    %v1454 = vld [vmem:[#allocation10 + $0xc8] sm:$0xff]
    %v1455 = vld [vmem:[#allocation10 + $0xd0] sm:$0xff]
    %v1456 = vld [vmem:[#allocation10 + $0xd8] sm:$0xff]
    %v1457 = vld [vmem:[#allocation10 + $0xe0] sm:$0xff]
    %v1458 = vld [vmem:[#allocation10 + $0xe8] sm:$0xff]
    %v1459 = vld [vmem:[#allocation10 + $0xf0] sm:$0xff]
    %v1460 = vld [vmem:[#allocation10 + $0xf8] sm:$0xff]
    %v1461 = vld [vmem:[#allocation10 + $0x100] sm:$0xff]
    %v1462 = vld [vmem:[#allocation10 + $0x108] sm:$0xff]
    %v1463 = vld [vmem:[#allocation10 + $0x110] sm:$0xff]
    %v1464 = vld [vmem:[#allocation10 + $0x118] sm:$0xff]
    %v1465 = vld [vmem:[#allocation10 + $0x120] sm:$0xff]
    %v1466 = vld [vmem:[#allocation10 + $0x128] sm:$0xff]
    %v1467 = vld [vmem:[#allocation10 + $0x130] sm:$0xff]
    %v1468 = vld [vmem:[#allocation10 + $0x138] sm:$0xff]
    %v1469 = vld [vmem:[#allocation10 + $0x140] sm:$0xff]
    %v1470 = vld [vmem:[#allocation10 + $0x148] sm:$0xff]
    %v1471 = vld [vmem:[#allocation10 + $0x150] sm:$0xff]
    %v1472 = vld [vmem:[#allocation10 + $0x158] sm:$0xff]
    %v1473 = vld [vmem:[#allocation10 + $0x160] sm:$0xff]
    %v1474 = vld [vmem:[#allocation10 + $0x168] sm:$0xff]
    %v1475 = vld [vmem:[#allocation10 + $0x170] sm:$0xff]
    %v1476 = vld [vmem:[#allocation10 + $0x178] sm:$0xff]
    %v1477 = vld [vmem:[#allocation10 + $0x180] sm:$0xff]
    %v1478 = vld [vmem:[#allocation10 + $0x188] sm:$0xff]
    %v1479 = vld [vmem:[#allocation10 + $0x190] sm:$0xff]
    %v1480 = vld [vmem:[#allocation10 + $0x198] sm:$0xff]
    %v1481 = vld [vmem:[#allocation10 + $0x1a0] sm:$0xff]
    %v1482 = vld [vmem:[#allocation10 + $0x1a8] sm:$0xff]
    %v1483 = vld [vmem:[#allocation10 + $0x1b0] sm:$0xff]
    %v1484 = vld [vmem:[#allocation10 + $0x1b8] sm:$0xff]
    %v1485 = vld [vmem:[#allocation10 + $0x1c0] sm:$0xff]
    %v1486 = vld [vmem:[#allocation10 + $0x1c8] sm:$0xff]
    %v1487 = vld [vmem:[#allocation10 + $0x1d0] sm:$0xff]
    %v1488 = vld [vmem:[#allocation10 + $0x1d8] sm:$0xff]
    %v1489 = vld [vmem:[#allocation10 + $0x1e0] sm:$0xff]
    %v1490 = vld [vmem:[#allocation10 + $0x1e8] sm:$0xff]
    %v1491 = vld [vmem:[#allocation10 + $0x1f0] sm:$0xff]
    %v1492 = vld [vmem:[#allocation10 + $0x1f8] sm:$0xff]
    %v1493 = vld [vmem:[#allocation10 + $0x200] sm:$0xff]
    %v1494 = vld [vmem:[#allocation10 + $0x208] sm:$0xff]
    %v1495 = vld [vmem:[#allocation10 + $0x210] sm:$0xff]
    %v1496 = vld [vmem:[#allocation10 + $0x218] sm:$0xff]
    %v1497 = vld [vmem:[#allocation10 + $0x220] sm:$0xff]
    %v1498 = vld [vmem:[#allocation10 + $0x228] sm:$0xff]
    %v1499 = vld [vmem:[#allocation10 + $0x230] sm:$0xff]
    %v1500 = vld [vmem:[#allocation10 + $0x238] sm:$0xff]
    %v1501 = vld [vmem:[#allocation10 + $0x240] sm:$0xff]
    %v1502 = vld [vmem:[#allocation10 + $0x248] sm:$0xff]
    %v1503 = vld [vmem:[#allocation10 + $0x250] sm:$0xff]
    %v1504 = vld [vmem:[#allocation10 + $0x258] sm:$0xff]
    %v1505 = vld [vmem:[#allocation10 + $0x260] sm:$0xff]
    %v1506 = vld [vmem:[#allocation10 + $0x268] sm:$0xff]
    %v1507 = vld [vmem:[#allocation10 + $0x270] sm:$0xff]
    %v1508 = vld [vmem:[#allocation10 + $0x278] sm:$0xff]
    %v1509 = vld [vmem:[#allocation10 + $0x280] sm:$0xff]
    %v1510 = vld [vmem:[#allocation10 + $0x288] sm:$0xff]
    %v1511 = vld [vmem:[#allocation10 + $0x290] sm:$0xff]
    %v1512 = vld [vmem:[#allocation10 + $0x298] sm:$0xff]
    %v1513 = vld [vmem:[#allocation10 + $0x2a0] sm:$0xff]
    %v1514 = vld [vmem:[#allocation10 + $0x2a8] sm:$0xff]
    %v1515 = vld [vmem:[#allocation10 + $0x2b0] sm:$0xff]
    %v1516 = vld [vmem:[#allocation10 + $0x2b8] sm:$0xff]
    %v1517 = vld [vmem:[#allocation10 + $0x2c0] sm:$0xff]
    %v1518 = vld [vmem:[#allocation10 + $0x2c8] sm:$0xff]
    %v1519 = vld [vmem:[#allocation10 + $0x2d0] sm:$0xff]
    %v1520 = vld [vmem:[#allocation10 + $0x2d8] sm:$0xff]
    %v1521 = vld [vmem:[#allocation10 + $0x2e0] sm:$0xff]
    %v1522 = vld [vmem:[#allocation10 + $0x2e8] sm:$0xff]
    %v1523 = vld [vmem:[#allocation10 + $0x2f0] sm:$0xff]
    %v1524 = vld [vmem:[#allocation10 + $0x2f8] sm:$0xff]
    %v1525 = vld [vmem:[#allocation10 + $0x300] sm:$0xff]
    %v1526 = vld [vmem:[#allocation10 + $0x308] sm:$0xff]
    %v1527 = vld [vmem:[#allocation10 + $0x310] sm:$0xff]
    %v1528 = vld [vmem:[#allocation10 + $0x318] sm:$0xff]
    %v1529 = vld [vmem:[#allocation10 + $0x320] sm:$0xff]
    %v1530 = vld [vmem:[#allocation10 + $0x328] sm:$0xff]
    %v1531 = vld [vmem:[#allocation10 + $0x330] sm:$0xff]
    %v1532 = vld [vmem:[#allocation10 + $0x338] sm:$0xff]
    %v1533 = vld [vmem:[#allocation10 + $0x340] sm:$0xff]
    %v1534 = vld [vmem:[#allocation10 + $0x348] sm:$0xff]
    %v1535 = vld [vmem:[#allocation10 + $0x350] sm:$0xff]
    %v1536 = vld [vmem:[#allocation10 + $0x358] sm:$0xff]
    %v1537 = vld [vmem:[#allocation10 + $0x360] sm:$0xff]
    %v1538 = vld [vmem:[#allocation10 + $0x368] sm:$0xff]
    %v1539 = vld [vmem:[#allocation10 + $0x370] sm:$0xff]
    %v1540 = vld [vmem:[#allocation10 + $0x378] sm:$0xff]
    %v1541 = vld [vmem:[#allocation10 + $0x380] sm:$0xff]
    %v1542 = vld [vmem:[#allocation10 + $0x388] sm:$0xff]
    %v1543 = vld [vmem:[#allocation10 + $0x390] sm:$0xff]
    %v1544 = vld [vmem:[#allocation10 + $0x398] sm:$0xff]
    %v1545 = vld [vmem:[#allocation10 + $0x3a0] sm:$0xff]
    %v1546 = vld [vmem:[#allocation10 + $0x3a8] sm:$0xff]
    %v1547 = vld [vmem:[#allocation10 + $0x3b0] sm:$0xff]
    %v1548 = vld [vmem:[#allocation10 + $0x3b8] sm:$0xff]
    %v1549 = vld [vmem:[#allocation10 + $0x3c0] sm:$0xff]
    %v1550 = vld [vmem:[#allocation10 + $0x3c8] sm:$0xff]
    %v1551 = vld [vmem:[#allocation10 + $0x3d0] sm:$0xff]
    %v1552 = vld [vmem:[#allocation10 + $0x3d8] sm:$0xff]
    %v1553 = vld [vmem:[#allocation10 + $0x3e0] sm:$0xff]
    %v1554 = vld [vmem:[#allocation10 + $0x3e8] sm:$0xff]
    %v1555 = vld [vmem:[#allocation10 + $0x3f0] sm:$0xff]
    %v1556 = vld [vmem:[#allocation10 + $0x3f8] sm:$0xff]
    %v1557 = vld [vmem:[#allocation10 + $0x400] sm:$0xff]
    %v1558 = vld [vmem:[#allocation10 + $0x408] sm:$0xff]
    %v1559 = vld [vmem:[#allocation10 + $0x410] sm:$0xff]
    %v1560 = vld [vmem:[#allocation10 + $0x418] sm:$0xff]
    %v1561 = vld [vmem:[#allocation10 + $0x420] sm:$0xff]
    %v1562 = vld [vmem:[#allocation10 + $0x428] sm:$0xff]
    %v1563 = vld [vmem:[#allocation10 + $0x430] sm:$0xff]
    %v1564 = vld [vmem:[#allocation10 + $0x438] sm:$0xff]
    %v1565 = vld [vmem:[#allocation10 + $0x440] sm:$0xff]
    %v1566 = vld [vmem:[#allocation10 + $0x448] sm:$0xff]
    %v1567 = vld [vmem:[#allocation10 + $0x450] sm:$0xff]
    %v1568 = vld [vmem:[#allocation10 + $0x458] sm:$0xff]
    %v1569 = vld [vmem:[#allocation10 + $0x460] sm:$0xff]
    %v1570 = vld [vmem:[#allocation10 + $0x468] sm:$0xff]
    %v1571 = vld [vmem:[#allocation10 + $0x470] sm:$0xff]
    %v1572 = vld [vmem:[#allocation10 + $0x478] sm:$0xff]
    %v1573 = vld [vmem:[#allocation10 + $0x480] sm:$0xff]
    %v1574 = vld [vmem:[#allocation10 + $0x488] sm:$0xff]
    %v1575 = vld [vmem:[#allocation10 + $0x490] sm:$0xff]
    %v1576 = vld [vmem:[#allocation10 + $0x498] sm:$0xff]
    %v1577 = vld [vmem:[#allocation10 + $0x4a0] sm:$0xff]
    %v1578 = vld [vmem:[#allocation10 + $0x4a8] sm:$0xff]
    %v1579 = vld [vmem:[#allocation10 + $0x4b0] sm:$0xff]
    %v1580 = vld [vmem:[#allocation10 + $0x4b8] sm:$0xff]
    %v1581 = vld [vmem:[#allocation10 + $0x4c0] sm:$0xff]
    %v1582 = vld [vmem:[#allocation10 + $0x4c8] sm:$0xff]
    %v1583 = vld [vmem:[#allocation10 + $0x4d0] sm:$0xff]
    %v1584 = vld [vmem:[#allocation10 + $0x4d8] sm:$0xff]
    %v1585 = vld [vmem:[#allocation10 + $0x4e0] sm:$0xff]
    %v1586 = vld [vmem:[#allocation10 + $0x4e8] sm:$0xff]
    %v1587 = vld [vmem:[#allocation10 + $0x4f0] sm:$0xff]
    %v1588 = vld [vmem:[#allocation10 + $0x4f8] sm:$0xff]
    %v1589 = vld [vmem:[#allocation10 + $0x500] sm:$0xff]
    %v1590 = vld [vmem:[#allocation10 + $0x508] sm:$0xff]
    %v1591 = vld [vmem:[#allocation10 + $0x510] sm:$0xff]
    %v1592 = vld [vmem:[#allocation10 + $0x518] sm:$0xff]
    %v1593 = vld [vmem:[#allocation10 + $0x520] sm:$0xff]
    %v1594 = vld [vmem:[#allocation10 + $0x528] sm:$0xff]
    %v1595 = vld [vmem:[#allocation10 + $0x530] sm:$0xff]
    %v1596 = vld [vmem:[#allocation10 + $0x538] sm:$0xff]
    %v1597 = vld [vmem:[#allocation10 + $0x540] sm:$0xff]
    %v1598 = vld [vmem:[#allocation10 + $0x548] sm:$0xff]
    %v1599 = vld [vmem:[#allocation10 + $0x550] sm:$0xff]
    %v1600 = vld [vmem:[#allocation10 + $0x558] sm:$0xff]
    %v1601 = vld [vmem:[#allocation10 + $0x560] sm:$0xff]
    %v1602 = vld [vmem:[#allocation10 + $0x568] sm:$0xff]
    %v1603 = vld [vmem:[#allocation10 + $0x570] sm:$0xff]
    %v1604 = vld [vmem:[#allocation10 + $0x578] sm:$0xff]
    %v1605 = vld [vmem:[#allocation10 + $0x580] sm:$0xff]
    %v1606 = vld [vmem:[#allocation10 + $0x588] sm:$0xff]
    %v1607 = vld [vmem:[#allocation10 + $0x590] sm:$0xff]
    %v1608 = vld [vmem:[#allocation10 + $0x598] sm:$0xff]
    %v1609 = vld [vmem:[#allocation10 + $0x5a0] sm:$0xff]
    %v1610 = vld [vmem:[#allocation10 + $0x5a8] sm:$0xff]
    %v1611 = vld [vmem:[#allocation10 + $0x5b0] sm:$0xff]
    %v1612 = vld [vmem:[#allocation10 + $0x5b8] sm:$0xff]
    %v1613 = vld [vmem:[#allocation10 + $0x5c0] sm:$0xff]
    %v1614 = vld [vmem:[#allocation10 + $0x5c8] sm:$0xff]
    %v1615 = vld [vmem:[#allocation10 + $0x5d0] sm:$0xff]
    %v1616 = vld [vmem:[#allocation10 + $0x5d8] sm:$0xff]
    %v1617 = vld [vmem:[#allocation10 + $0x5e0] sm:$0xff]
    %v1618 = vld [vmem:[#allocation10 + $0x5e8] sm:$0xff]
    %v1619 = vld [vmem:[#allocation10 + $0x5f0] sm:$0xff]
    %v1620 = vld [vmem:[#allocation10 + $0x5f8] sm:$0xff]
    %v1621 = vld [vmem:[#allocation10 + $0x600] sm:$0xff]
    %v1622 = vld [vmem:[#allocation10 + $0x608] sm:$0xff]
    %v1623 = vld [vmem:[#allocation10 + $0x610] sm:$0xff]
    %v1624 = vld [vmem:[#allocation10 + $0x618] sm:$0xff]
    %v1625 = vld [vmem:[#allocation10 + $0x620] sm:$0xff]
    %v1626 = vld [vmem:[#allocation10 + $0x628] sm:$0xff]
    %v1627 = vld [vmem:[#allocation10 + $0x630] sm:$0xff]
    %v1628 = vld [vmem:[#allocation10 + $0x638] sm:$0xff]
    %v1629 = vld [vmem:[#allocation10 + $0x640] sm:$0xff]
    %v1630 = vld [vmem:[#allocation10 + $0x648] sm:$0xff]
    %v1631 = vld [vmem:[#allocation10 + $0x650] sm:$0xff]
    %v1632 = vld [vmem:[#allocation10 + $0x658] sm:$0xff]
    %v1633 = vld [vmem:[#allocation10 + $0x660] sm:$0xff]
    %v1634 = vld [vmem:[#allocation10 + $0x668] sm:$0xff]
    %v1635 = vld [vmem:[#allocation10 + $0x670] sm:$0xff]
    %v1636 = vld [vmem:[#allocation10 + $0x678] sm:$0xff]
    %v1637 = vld [vmem:[#allocation10 + $0x680] sm:$0xff]
    %v1638 = vld [vmem:[#allocation10 + $0x688] sm:$0xff]
    %v1639 = vld [vmem:[#allocation10 + $0x690] sm:$0xff]
    %v1640 = vld [vmem:[#allocation10 + $0x698] sm:$0xff]
    %v1641 = vld [vmem:[#allocation10 + $0x6a0] sm:$0xff]
    %v1642 = vld [vmem:[#allocation10 + $0x6a8] sm:$0xff]
    %v1643 = vld [vmem:[#allocation10 + $0x6b0] sm:$0xff]
    %v1644 = vld [vmem:[#allocation10 + $0x6b8] sm:$0xff]
    %v1645 = vld [vmem:[#allocation10 + $0x6c0] sm:$0xff]
    %v1646 = vld [vmem:[#allocation10 + $0x6c8] sm:$0xff]
    %v1647 = vld [vmem:[#allocation10 + $0x6d0] sm:$0xff]
    %v1648 = vld [vmem:[#allocation10 + $0x6d8] sm:$0xff]
    %v1649 = vld [vmem:[#allocation10 + $0x6e0] sm:$0xff]
    %v1650 = vld [vmem:[#allocation10 + $0x6e8] sm:$0xff]
    %v1651 = vld [vmem:[#allocation10 + $0x6f0] sm:$0xff]
    %v1652 = vld [vmem:[#allocation10 + $0x6f8] sm:$0xff]
    %v1653 = vld [vmem:[#allocation10 + $0x700] sm:$0xff]
    %v1654 = vld [vmem:[#allocation10 + $0x708] sm:$0xff]
    %v1655 = vld [vmem:[#allocation10 + $0x710] sm:$0xff]
    %v1656 = vld [vmem:[#allocation10 + $0x718] sm:$0xff]
    %v1657 = vld [vmem:[#allocation10 + $0x720] sm:$0xff]
    %v1658 = vld [vmem:[#allocation10 + $0x728] sm:$0xff]
    %v1659 = vld [vmem:[#allocation10 + $0x730] sm:$0xff]
    %v1660 = vld [vmem:[#allocation10 + $0x738] sm:$0xff]
    %v1661 = vld [vmem:[#allocation10 + $0x740] sm:$0xff]
    %v1662 = vld [vmem:[#allocation10 + $0x748] sm:$0xff]
    %v1663 = vld [vmem:[#allocation10 + $0x750] sm:$0xff]
    %v1664 = vld [vmem:[#allocation10 + $0x758] sm:$0xff]
    %v1665 = vld [vmem:[#allocation10 + $0x760] sm:$0xff]
    %v1666 = vld [vmem:[#allocation10 + $0x768] sm:$0xff]
    %v1667 = vld [vmem:[#allocation10 + $0x770] sm:$0xff]
    %v1668 = vld [vmem:[#allocation10 + $0x778] sm:$0xff]
    %v1669 = vld [vmem:[#allocation10 + $0x780] sm:$0xff]
    %v1670 = vld [vmem:[#allocation10 + $0x788] sm:$0xff]
    %v1671 = vld [vmem:[#allocation10 + $0x790] sm:$0xff]
    %v1672 = vld [vmem:[#allocation10 + $0x798] sm:$0xff]
    %v1673 = vld [vmem:[#allocation10 + $0x7a0] sm:$0xff]
    %v1674 = vld [vmem:[#allocation10 + $0x7a8] sm:$0xff]
    %v1675 = vld [vmem:[#allocation10 + $0x7b0] sm:$0xff]
    %v1676 = vld [vmem:[#allocation10 + $0x7b8] sm:$0xff]
    %v1677 = vld [vmem:[#allocation10 + $0x7c0] sm:$0xff]
    %v1678 = vld [vmem:[#allocation10 + $0x7c8] sm:$0xff]
    %v1679 = vld [vmem:[#allocation10 + $0x7d0] sm:$0xff]
    %v1680 = vld [vmem:[#allocation10 + $0x7d8] sm:$0xff]
    %v1681 = vld [vmem:[#allocation10 + $0x7e0] sm:$0xff]
    %v1682 = vld [vmem:[#allocation10 + $0x7e8] sm:$0xff]
    %v1683 = vld [vmem:[#allocation10 + $0x7f0] sm:$0xff]
    %v1684 = vld [vmem:[#allocation10 + $0x7f8] sm:$0xff]
    %v1685 = vld [vmem:[#allocation10 + $0x800] sm:$0xff]
    %v1686 = vld [vmem:[#allocation10 + $0x808] sm:$0xff]
    %v1687 = vld [vmem:[#allocation10 + $0x810] sm:$0xff]
    %v1688 = vld [vmem:[#allocation10 + $0x818] sm:$0xff]
    %v1689 = vld [vmem:[#allocation10 + $0x820] sm:$0xff]
    %v1690 = vld [vmem:[#allocation10 + $0x828] sm:$0xff]
    %v1691 = vld [vmem:[#allocation10 + $0x830] sm:$0xff]
    %v1692 = vld [vmem:[#allocation10 + $0x838] sm:$0xff]
    %v1693 = vld [vmem:[#allocation10 + $0x840] sm:$0xff]
    %v1694 = vld [vmem:[#allocation10 + $0x848] sm:$0xff]
    %v1695 = vld [vmem:[#allocation10 + $0x850] sm:$0xff]
    %v1696 = vld [vmem:[#allocation10 + $0x858] sm:$0xff]
    %v1697 = vld [vmem:[#allocation10 + $0x860] sm:$0xff]
    %v1698 = vld [vmem:[#allocation10 + $0x868] sm:$0xff]
    %v1699 = vld [vmem:[#allocation10 + $0x870] sm:$0xff]
    %v1700 = vld [vmem:[#allocation10 + $0x878] sm:$0xff]
    %v1701 = vld [vmem:[#allocation10 + $0x880] sm:$0xff]
    %v1702 = vld [vmem:[#allocation10 + $0x888] sm:$0xff]
    %v1703 = vld [vmem:[#allocation10 + $0x890] sm:$0xff]
    %v1704 = vld [vmem:[#allocation10 + $0x898] sm:$0xff]
    %v1705 = vld [vmem:[#allocation10 + $0x8a0] sm:$0xff]
    %v1706 = vld [vmem:[#allocation10 + $0x8a8] sm:$0xff]
    %v1707 = vld [vmem:[#allocation10 + $0x8b0] sm:$0xff]
    %v1708 = vld [vmem:[#allocation10 + $0x8b8] sm:$0xff]
    %v1709 = vld [vmem:[#allocation10 + $0x8c0] sm:$0xff]
    %v1710 = vld [vmem:[#allocation10 + $0x8c8] sm:$0xff]
    %v1711 = vld [vmem:[#allocation10 + $0x8d0] sm:$0xff]
    %v1712 = vld [vmem:[#allocation10 + $0x8d8] sm:$0xff]
    %v1713 = vld [vmem:[#allocation10 + $0x8e0] sm:$0xff]
    %v1714 = vld [vmem:[#allocation10 + $0x8e8] sm:$0xff]
    %v1715 = vld [vmem:[#allocation10 + $0x8f0] sm:$0xff]
    %v1716 = vld [vmem:[#allocation10 + $0x8f8] sm:$0xff]
    %v1717 = vld [vmem:[#allocation10 + $0x900] sm:$0xff]
    %v1718 = vld [vmem:[#allocation10 + $0x908] sm:$0xff]
    %v1719 = vld [vmem:[#allocation10 + $0x910] sm:$0xff]
    %v1720 = vld [vmem:[#allocation10 + $0x918] sm:$0xff]
    %v1721 = vld [vmem:[#allocation10 + $0x920] sm:$0xff]
    %v1722 = vld [vmem:[#allocation10 + $0x928] sm:$0xff]
    %v1723 = vld [vmem:[#allocation10 + $0x930] sm:$0xff]
    %v1724 = vld [vmem:[#allocation10 + $0x938] sm:$0xff]
    %v1725 = vld [vmem:[#allocation10 + $0x940] sm:$0xff]
    %v1726 = vld [vmem:[#allocation10 + $0x948] sm:$0xff]
    %v1727 = vld [vmem:[#allocation10 + $0x950] sm:$0xff]
    %v1728 = vld [vmem:[#allocation10 + $0x958] sm:$0xff]
    %v1729 = vld [vmem:[#allocation10 + $0x960] sm:$0xff]
    %v1730 = vld [vmem:[#allocation10 + $0x968] sm:$0xff]
    %v1731 = vld [vmem:[#allocation10 + $0x970] sm:$0xff]
    %v1732 = vld [vmem:[#allocation10 + $0x978] sm:$0xff]
    %v1733 = vld [vmem:[#allocation10 + $0x980] sm:$0xff]
    %v1734 = vld [vmem:[#allocation10 + $0x988] sm:$0xff]
    %v1735 = vld [vmem:[#allocation10 + $0x990] sm:$0xff]
    %v1736 = vld [vmem:[#allocation10 + $0x998] sm:$0xff]
    %v1737 = vld [vmem:[#allocation10 + $0x9a0] sm:$0xff]
    %v1738 = vld [vmem:[#allocation10 + $0x9a8] sm:$0xff]
    %v1739 = vld [vmem:[#allocation10 + $0x9b0] sm:$0xff]
    %v1740 = vld [vmem:[#allocation10 + $0x9b8] sm:$0xff]
    %v1741 = vld [vmem:[#allocation10 + $0x9c0] sm:$0xff]
    %v1742 = vld [vmem:[#allocation10 + $0x9c8] sm:$0xff]
    %v1743 = vld [vmem:[#allocation10 + $0x9d0] sm:$0xff]
    %v1744 = vld [vmem:[#allocation10 + $0x9d8] sm:$0xff]
    %v1745 = vld [vmem:[#allocation10 + $0x9e0] sm:$0xff]
    %v1746 = vld [vmem:[#allocation10 + $0x9e8] sm:$0xff]
    %v1747 = vld [vmem:[#allocation10 + $0x9f0] sm:$0xff]
    %v1748 = vld [vmem:[#allocation10 + $0x9f8] sm:$0xff]
    %v1749 = vld [vmem:[#allocation10 + $0xa00] sm:$0xff]
    %v1750 = vld [vmem:[#allocation10 + $0xa08] sm:$0xff]
    %v1751 = vld [vmem:[#allocation10 + $0xa10] sm:$0xff]
    %v1752 = vld [vmem:[#allocation10 + $0xa18] sm:$0xff]
    %v1753 = vld [vmem:[#allocation10 + $0xa20] sm:$0xff]
    %v1754 = vld [vmem:[#allocation10 + $0xa28] sm:$0xff]
    %v1755 = vld [vmem:[#allocation10 + $0xa30] sm:$0xff]
    %v1756 = vld [vmem:[#allocation10 + $0xa38] sm:$0xff]
    %v1757 = vld [vmem:[#allocation10 + $0xa40] sm:$0xff]
    %v1758 = vld [vmem:[#allocation10 + $0xa48] sm:$0xff]
    %v1759 = vld [vmem:[#allocation10 + $0xa50] sm:$0xff]
    %v1760 = vld [vmem:[#allocation10 + $0xa58] sm:$0xff]
    %v1761 = vld [vmem:[#allocation10 + $0xa60] sm:$0xff]
    %v1762 = vld [vmem:[#allocation10 + $0xa68] sm:$0xff]
    %v1763 = vld [vmem:[#allocation10 + $0xa70] sm:$0xff]
    %v1764 = vld [vmem:[#allocation10 + $0xa78] sm:$0xff]
    %v1765 = vld [vmem:[#allocation10 + $0xa80] sm:$0xff]
    %v1766 = vld [vmem:[#allocation10 + $0xa88] sm:$0xff]
    %v1767 = vld [vmem:[#allocation10 + $0xa90] sm:$0xff]
    %v1768 = vld [vmem:[#allocation10 + $0xa98] sm:$0xff]
    %v1769 = vld [vmem:[#allocation10 + $0xaa0] sm:$0xff]
    %v1770 = vld [vmem:[#allocation10 + $0xaa8] sm:$0xff]
    %v1771 = vld [vmem:[#allocation10 + $0xab0] sm:$0xff]
    %v1772 = vld [vmem:[#allocation10 + $0xab8] sm:$0xff]
    %v1773 = vld [vmem:[#allocation10 + $0xac0] sm:$0xff]
    %v1774 = vld [vmem:[#allocation10 + $0xac8] sm:$0xff]
    %v1775 = vld [vmem:[#allocation10 + $0xad0] sm:$0xff]
    %v1776 = vld [vmem:[#allocation10 + $0xad8] sm:$0xff]
    %v1777 = vld [vmem:[#allocation10 + $0xae0] sm:$0xff]
    %v1778 = vld [vmem:[#allocation10 + $0xae8] sm:$0xff]
    %v1779 = vld [vmem:[#allocation10 + $0xaf0] sm:$0xff]
    %v1780 = vld [vmem:[#allocation10 + $0xaf8] sm:$0xff]
    %v1781 = vld [vmem:[#allocation10 + $0xb00] sm:$0xff]
    %v1782 = vld [vmem:[#allocation10 + $0xb08] sm:$0xff]
    %v1783 = vld [vmem:[#allocation10 + $0xb10] sm:$0xff]
    %v1784 = vld [vmem:[#allocation10 + $0xb18] sm:$0xff]
    %v1785 = vld [vmem:[#allocation10 + $0xb20] sm:$0xff]
    %v1786 = vld [vmem:[#allocation10 + $0xb28] sm:$0xff]
    %v1787 = vld [vmem:[#allocation10 + $0xb30] sm:$0xff]
    %v1788 = vld [vmem:[#allocation10 + $0xb38] sm:$0xff]
    %v1789 = vld [vmem:[#allocation10 + $0xb40] sm:$0xff]
    %v1790 = vld [vmem:[#allocation10 + $0xb48] sm:$0xff]
    %v1791 = vld [vmem:[#allocation10 + $0xb50] sm:$0xff]
    %v1792 = vld [vmem:[#allocation10 + $0xb58] sm:$0xff]
    %v1793 = vld [vmem:[#allocation10 + $0xb60] sm:$0xff]
    %v1794 = vld [vmem:[#allocation10 + $0xb68] sm:$0xff]
    %v1795 = vld [vmem:[#allocation10 + $0xb70] sm:$0xff]
    %v1796 = vld [vmem:[#allocation10 + $0xb78] sm:$0xff]
    %v1797 = vld [vmem:[#allocation10 + $0xb80] sm:$0xff]
    %v1798 = vld [vmem:[#allocation10 + $0xb88] sm:$0xff]
    %v1799 = vld [vmem:[#allocation10 + $0xb90] sm:$0xff]
    %v1800 = vld [vmem:[#allocation10 + $0xb98] sm:$0xff]
    %v1801 = vld [vmem:[#allocation10 + $0xba0] sm:$0xff]
    %v1802 = vld [vmem:[#allocation10 + $0xba8] sm:$0xff]
    %v1803 = vld [vmem:[#allocation10 + $0xbb0] sm:$0xff]
    %v1804 = vld [vmem:[#allocation10 + $0xbb8] sm:$0xff]
    %v1805 = vld [vmem:[#allocation10 + $0xbc0] sm:$0xff]
    %v1806 = vld [vmem:[#allocation10 + $0xbc8] sm:$0xff]
    %v1807 = vld [vmem:[#allocation10 + $0xbd0] sm:$0xff]
    %v1808 = vld [vmem:[#allocation10 + $0xbd8] sm:$0xff]
    %v1809 = vld [vmem:[#allocation10 + $0xbe0] sm:$0xff]
    %v1810 = vld [vmem:[#allocation10 + $0xbe8] sm:$0xff]
    %v1811 = vld [vmem:[#allocation10 + $0xbf0] sm:$0xff]
    %v1812 = vld [vmem:[#allocation10 + $0xbf8] sm:$0xff]
    %v1813 = vld [vmem:[#allocation10 + $0xc00] sm:$0xff]
    %v1814 = vld [vmem:[#allocation10 + $0xc08] sm:$0xff]
    %v1815 = vld [vmem:[#allocation10 + $0xc10] sm:$0xff]
    %v1816 = vld [vmem:[#allocation10 + $0xc18] sm:$0xff]
    %v1817 = vld [vmem:[#allocation10 + $0xc20] sm:$0xff]
    %v1818 = vld [vmem:[#allocation10 + $0xc28] sm:$0xff]
    %v1819 = vld [vmem:[#allocation10 + $0xc30] sm:$0xff]
    %v1820 = vld [vmem:[#allocation10 + $0xc38] sm:$0xff]
    %v1821 = vld [vmem:[#allocation10 + $0xc40] sm:$0xff]
    %v1822 = vld [vmem:[#allocation10 + $0xc48] sm:$0xff]
    %v1823 = vld [vmem:[#allocation10 + $0xc50] sm:$0xff]
    %v1824 = vld [vmem:[#allocation10 + $0xc58] sm:$0xff]
    %v1825 = vld [vmem:[#allocation10 + $0xc60] sm:$0xff]
    %v1826 = vld [vmem:[#allocation10 + $0xc68] sm:$0xff]
    %v1827 = vld [vmem:[#allocation10 + $0xc70] sm:$0xff]
    %v1828 = vld [vmem:[#allocation10 + $0xc78] sm:$0xff]
    %v1829 = vld [vmem:[#allocation10 + $0xc80] sm:$0xff]
    %v1830 = vld [vmem:[#allocation10 + $0xc88] sm:$0xff]
    %v1831 = vld [vmem:[#allocation10 + $0xc90] sm:$0xff]
    %v1832 = vld [vmem:[#allocation10 + $0xc98] sm:$0xff]
    %v1833 = vld [vmem:[#allocation10 + $0xca0] sm:$0xff]
    %v1834 = vld [vmem:[#allocation10 + $0xca8] sm:$0xff]
    %v1835 = vld [vmem:[#allocation10 + $0xcb0] sm:$0xff]
    %v1836 = vld [vmem:[#allocation10 + $0xcb8] sm:$0xff]
    %v1837 = vld [vmem:[#allocation10 + $0xcc0] sm:$0xff]
    %v1838 = vld [vmem:[#allocation10 + $0xcc8] sm:$0xff]
    %v1839 = vld [vmem:[#allocation10 + $0xcd0] sm:$0xff]
    %v1840 = vld [vmem:[#allocation10 + $0xcd8] sm:$0xff]
    %v1841 = vld [vmem:[#allocation10 + $0xce0] sm:$0xff]
    %v1842 = vld [vmem:[#allocation10 + $0xce8] sm:$0xff]
    %v1843 = vld [vmem:[#allocation10 + $0xcf0] sm:$0xff]
    %v1844 = vld [vmem:[#allocation10 + $0xcf8] sm:$0xff]
    %v1845 = vld [vmem:[#allocation10 + $0xd00] sm:$0xff]
    %v1846 = vld [vmem:[#allocation10 + $0xd08] sm:$0xff]
    %v1847 = vld [vmem:[#allocation10 + $0xd10] sm:$0xff]
    %v1848 = vld [vmem:[#allocation10 + $0xd18] sm:$0xff]
    %v1849 = vld [vmem:[#allocation10 + $0xd20] sm:$0xff]
    %v1850 = vld [vmem:[#allocation10 + $0xd28] sm:$0xff]
    %v1851 = vld [vmem:[#allocation10 + $0xd30] sm:$0xff]
    %v1852 = vld [vmem:[#allocation10 + $0xd38] sm:$0xff]
    %v1853 = vld [vmem:[#allocation10 + $0xd40] sm:$0xff]
    %v1854 = vld [vmem:[#allocation10 + $0xd48] sm:$0xff]
    %v1855 = vld [vmem:[#allocation10 + $0xd50] sm:$0xff]
    %v1856 = vld [vmem:[#allocation10 + $0xd58] sm:$0xff]
    %v1857 = vld [vmem:[#allocation10 + $0xd60] sm:$0xff]
    %v1858 = vld [vmem:[#allocation10 + $0xd68] sm:$0xff]
    %v1859 = vld [vmem:[#allocation10 + $0xd70] sm:$0xff]
    %v1860 = vld [vmem:[#allocation10 + $0xd78] sm:$0xff]
    %v1861 = vld [vmem:[#allocation10 + $0xd80] sm:$0xff]
    %v1862 = vld [vmem:[#allocation10 + $0xd88] sm:$0xff]
    %v1863 = vld [vmem:[#allocation10 + $0xd90] sm:$0xff]
    %v1864 = vld [vmem:[#allocation10 + $0xd98] sm:$0xff]
    %v1865 = vld [vmem:[#allocation10 + $0xda0] sm:$0xff]
    %v1866 = vld [vmem:[#allocation10 + $0xda8] sm:$0xff]
    %v1867 = vld [vmem:[#allocation10 + $0xdb0] sm:$0xff]
    %v1868 = vld [vmem:[#allocation10 + $0xdb8] sm:$0xff]
    %v1869 = vld [vmem:[#allocation10 + $0xdc0] sm:$0xff]
    %v1870 = vld [vmem:[#allocation10 + $0xdc8] sm:$0xff]
    %v1871 = vld [vmem:[#allocation10 + $0xdd0] sm:$0xff]
    %v1872 = vld [vmem:[#allocation10 + $0xdd8] sm:$0xff]
    %v1873 = vld [vmem:[#allocation10 + $0xde0] sm:$0xff]
    %v1874 = vld [vmem:[#allocation10 + $0xde8] sm:$0xff]
    %v1875 = vld [vmem:[#allocation10 + $0xdf0] sm:$0xff]
    %v1876 = vld [vmem:[#allocation10 + $0xdf8] sm:$0xff]
    %v1877 = vld [vmem:[#allocation10 + $0xe00] sm:$0xff]
    %v1878 = vld [vmem:[#allocation10 + $0xe08] sm:$0xff]
    %v1879 = vld [vmem:[#allocation10 + $0xe10] sm:$0xff]
    %v1880 = vld [vmem:[#allocation10 + $0xe18] sm:$0xff]
    %v1881 = vld [vmem:[#allocation10 + $0xe20] sm:$0xff]
    %v1882 = vld [vmem:[#allocation10 + $0xe28] sm:$0xff]
    %v1883 = vld [vmem:[#allocation10 + $0xe30] sm:$0xff]
    %v1884 = vld [vmem:[#allocation10 + $0xe38] sm:$0xff]
    %v1885 = vld [vmem:[#allocation10 + $0xe40] sm:$0xff]
    %v1886 = vld [vmem:[#allocation10 + $0xe48] sm:$0xff]
    %v1887 = vld [vmem:[#allocation10 + $0xe50] sm:$0xff]
    %v1888 = vld [vmem:[#allocation10 + $0xe58] sm:$0xff]
    %v1889 = vld [vmem:[#allocation10 + $0xe60] sm:$0xff]
    %v1890 = vld [vmem:[#allocation10 + $0xe68] sm:$0xff]
    %v1891 = vld [vmem:[#allocation10 + $0xe70] sm:$0xff]
    %v1892 = vld [vmem:[#allocation10 + $0xe78] sm:$0xff]
    %v1893 = vld [vmem:[#allocation10 + $0xe80] sm:$0xff]
    %v1894 = vld [vmem:[#allocation10 + $0xe88] sm:$0xff]
    %v1895 = vld [vmem:[#allocation10 + $0xe90] sm:$0xff]
    %v1896 = vld [vmem:[#allocation10 + $0xe98] sm:$0xff]
    %v1897 = vld [vmem:[#allocation10 + $0xea0] sm:$0xff]
    %v1898 = vld [vmem:[#allocation10 + $0xea8] sm:$0xff]
    %v1899 = vld [vmem:[#allocation10 + $0xeb0] sm:$0xff]
    %v1900 = vld [vmem:[#allocation10 + $0xeb8] sm:$0xff]
    %v1901 = vld [vmem:[#allocation10 + $0xec0] sm:$0xff]
    %v1902 = vld [vmem:[#allocation10 + $0xec8] sm:$0xff]
    %v1903 = vld [vmem:[#allocation10 + $0xed0] sm:$0xff]
    %v1904 = vld [vmem:[#allocation10 + $0xed8] sm:$0xff]
    %v1905 = vld [vmem:[#allocation10 + $0xee0] sm:$0xff]
    %v1906 = vld [vmem:[#allocation10 + $0xee8] sm:$0xff]
    %v1907 = vld [vmem:[#allocation10 + $0xef0] sm:$0xff]
    %v1908 = vld [vmem:[#allocation10 + $0xef8] sm:$0xff]
    %v1909 = vld [vmem:[#allocation10 + $0xf00] sm:$0xff]
    %v1910 = vld [vmem:[#allocation10 + $0xf08] sm:$0xff]
    %v1911 = vld [vmem:[#allocation10 + $0xf10] sm:$0xff]
    %v1912 = vld [vmem:[#allocation10 + $0xf18] sm:$0xff]
    %v1913 = vld [vmem:[#allocation10 + $0xf20] sm:$0xff]
    %v1914 = vld [vmem:[#allocation10 + $0xf28] sm:$0xff]
    %v1915 = vld [vmem:[#allocation10 + $0xf30] sm:$0xff]
    %v1916 = vld [vmem:[#allocation10 + $0xf38] sm:$0xff]
    %v1917 = vld [vmem:[#allocation10 + $0xf40] sm:$0xff]
    %v1918 = vld [vmem:[#allocation10 + $0xf48] sm:$0xff]
    %v1919 = vld [vmem:[#allocation10 + $0xf50] sm:$0xff]
    %v1920 = vld [vmem:[#allocation10 + $0xf58] sm:$0xff]
    %v1921 = vld [vmem:[#allocation10 + $0xf60] sm:$0xff]
    %v1922 = vld [vmem:[#allocation10 + $0xf68] sm:$0xff]
    %v1923 = vld [vmem:[#allocation10 + $0xf70] sm:$0xff]
    %v1924 = vld [vmem:[#allocation10 + $0xf78] sm:$0xff]
    %v1925 = vld [vmem:[#allocation10 + $0xf80] sm:$0xff]
    %v1926 = vld [vmem:[#allocation10 + $0xf88] sm:$0xff]
    %v1927 = vld [vmem:[#allocation10 + $0xf90] sm:$0xff]
    %v1928 = vld [vmem:[#allocation10 + $0xf98] sm:$0xff]
    %v1929 = vld [vmem:[#allocation10 + $0xfa0] sm:$0xff]
    %v1930 = vld [vmem:[#allocation10 + $0xfa8] sm:$0xff]
    %v1931 = vld [vmem:[#allocation10 + $0xfb0] sm:$0xff]
    %v1932 = vld [vmem:[#allocation10 + $0xfb8] sm:$0xff]
    %v1933 = vld [vmem:[#allocation10 + $0xfc0] sm:$0xff]
    %v1934 = vld [vmem:[#allocation10 + $0xfc8] sm:$0xff]
    %v1935 = vld [vmem:[#allocation10 + $0xfd0] sm:$0xff]
    %v1936 = vld [vmem:[#allocation10 + $0xfd8] sm:$0xff]
    %v1937 = vld [vmem:[#allocation10 + $0xfe0] sm:$0xff]
    %v1938 = vld [vmem:[#allocation10 + $0xfe8] sm:$0xff]
    %v1939 = vld [vmem:[#allocation10 + $0xff0] sm:$0xff]
    %v1940 = vld [vmem:[#allocation10 + $0xff8] sm:$0xff]
    %v1941 = vld [vmem:[#allocation11] sm:$0xff]
    %v1942 = vld [vmem:[#allocation11 + $0x8] sm:$0xff]
    %v1945 = vlaneseq
    %v1946 = vshrl.u32 %v1945, 7
    %v1947 = vsub.s32 0, %v1946
    %v1948 = vrot.slane %v1941, %v1947
    %v1949 = vlaneseq
    %v1950 = vshrl.u32 %v1949, 7
    %v1951 = vsub.s32 1, %v1950
    %v1952 = vrot.slane %v1941, %v1951
    %v1953 = vlaneseq
    %v1954 = vshrl.u32 %v1953, 7
    %v1955 = vsub.s32 2, %v1954
    %v1956 = vrot.slane %v1941, %v1955
    %v1957 = vlaneseq
    %v1958 = vshrl.u32 %v1957, 7
    %v1959 = vsub.s32 3, %v1958
    %v1960 = vrot.slane %v1941, %v1959
    %v1961 = vlaneseq
    %v1962 = vshrl.u32 %v1961, 7
    %v1963 = vsub.s32 4, %v1962
    %v1964 = vrot.slane %v1941, %v1963
    %v1965 = vlaneseq
    %v1966 = vshrl.u32 %v1965, 7
    %v1967 = vsub.s32 5, %v1966
    %v1968 = vrot.slane %v1941, %v1967
    %v1969 = vlaneseq
    %v1970 = vshrl.u32 %v1969, 7
    %v1971 = vsub.s32 6, %v1970
    %v1972 = vrot.slane %v1941, %v1971
    %v1973 = vlaneseq
    %v1974 = vshrl.u32 %v1973, 7
    %v1975 = vsub.s32 7, %v1974
    %v1976 = vrot.slane %v1941, %v1975
    %v1977 = vlaneseq
    %v1978 = vshrl.u32 %v1977, 7
    %v1979 = vsub.s32 0, %v1978
    %v1980 = vrot.slane %v1942, %v1979
    %v1981 = vlaneseq
    %v1982 = vshrl.u32 %v1981, 7
    %v1983 = vsub.s32 1, %v1982
    %v1984 = vrot.slane %v1942, %v1983
    %v1985 = vlaneseq
    %v1986 = vshrl.u32 %v1985, 7
    %v1987 = vsub.s32 2, %v1986
    %v1988 = vrot.slane %v1942, %v1987
    %v1989 = vlaneseq
    %v1990 = vshrl.u32 %v1989, 7
    %v1991 = vsub.s32 3, %v1990
    %v1992 = vrot.slane %v1942, %v1991
    %v1993 = vlaneseq
    %v1994 = vshrl.u32 %v1993, 7
    %v1995 = vsub.s32 4, %v1994
    %v1996 = vrot.slane %v1942, %v1995
    %v1997 = vlaneseq
    %v1998 = vshrl.u32 %v1997, 7
    %v1999 = vsub.s32 5, %v1998
    %v2000 = vrot.slane %v1942, %v1999
    %v2001 = vlaneseq
    %v2002 = vshrl.u32 %v2001, 7
    %v2003 = vsub.s32 6, %v2002
    %v2004 = vrot.slane %v1942, %v2003
    %v2005 = vlaneseq
    %v2006 = vshrl.u32 %v2005, 7
    %v2007 = vsub.s32 7, %v2006
    %v2008 = vrot.slane %v1942, %v2007
    %v2537 = vunpack.c.l.b16 %v1429
    %v2538 = vunpack.c.h.b16 %v1429
    %v2539 = vunpack.c.l.b16 %v1430
    %v2540 = vunpack.c.h.b16 %v1430
    %v2541 = vunpack.c.l.b16 %v1431
    %v2542 = vunpack.c.h.b16 %v1431
    %v2543 = vunpack.c.l.b16 %v1432
    %v2544 = vunpack.c.h.b16 %v1432
    %v2545 = vunpack.c.l.b16 %v1433
    %v2546 = vunpack.c.h.b16 %v1433
    %v2547 = vunpack.c.l.b16 %v1434
    %v2548 = vunpack.c.h.b16 %v1434
    %v2549 = vunpack.c.l.b16 %v1435
    %v2550 = vunpack.c.h.b16 %v1435
    %v2551 = vunpack.c.l.b16 %v1436
    %v2552 = vunpack.c.h.b16 %v1436
    %v2553 = vunpack.c.l.b16 %v1437
    %v2554 = vunpack.c.h.b16 %v1437
    %v2555 = vunpack.c.l.b16 %v1438
    %v2556 = vunpack.c.h.b16 %v1438
    %v2557 = vunpack.c.l.b16 %v1439
    %v2558 = vunpack.c.h.b16 %v1439
    %v2559 = vunpack.c.l.b16 %v1440
    %v2560 = vunpack.c.h.b16 %v1440
    %v2561 = vunpack.c.l.b16 %v1441
    %v2562 = vunpack.c.h.b16 %v1441
    %v2563 = vunpack.c.l.b16 %v1442
    %v2564 = vunpack.c.h.b16 %v1442
    %v2565 = vunpack.c.l.b16 %v1443
    %v2566 = vunpack.c.h.b16 %v1443
    %v2567 = vunpack.c.l.b16 %v1444
    %v2568 = vunpack.c.h.b16 %v1444
    %v2569 = vunpack.c.l.b16 %v1445
    %v2570 = vunpack.c.h.b16 %v1445
    %v2571 = vunpack.c.l.b16 %v1446
    %v2572 = vunpack.c.h.b16 %v1446
    %v2573 = vunpack.c.l.b16 %v1447
    %v2574 = vunpack.c.h.b16 %v1447
    %v2575 = vunpack.c.l.b16 %v1448
    %v2576 = vunpack.c.h.b16 %v1448
    %v2577 = vunpack.c.l.b16 %v1449
    %v2578 = vunpack.c.h.b16 %v1449
    %v2579 = vunpack.c.l.b16 %v1450
    %v2580 = vunpack.c.h.b16 %v1450
    %v2581 = vunpack.c.l.b16 %v1451
    %v2582 = vunpack.c.h.b16 %v1451
    %v2583 = vunpack.c.l.b16 %v1452
    %v2584 = vunpack.c.h.b16 %v1452
    %v2585 = vunpack.c.l.b16 %v1453
    %v2586 = vunpack.c.h.b16 %v1453
    %v2587 = vunpack.c.l.b16 %v1454
    %v2588 = vunpack.c.h.b16 %v1454
    %v2589 = vunpack.c.l.b16 %v1455
    %v2590 = vunpack.c.h.b16 %v1455
    %v2591 = vunpack.c.l.b16 %v1456
    %v2592 = vunpack.c.h.b16 %v1456
    %v2593 = vunpack.c.l.b16 %v1457
    %v2594 = vunpack.c.h.b16 %v1457
    %v2595 = vunpack.c.l.b16 %v1458
    %v2596 = vunpack.c.h.b16 %v1458
    %v2597 = vunpack.c.l.b16 %v1459
    %v2598 = vunpack.c.h.b16 %v1459
    %v2599 = vunpack.c.l.b16 %v1460
    %v2600 = vunpack.c.h.b16 %v1460
    %v2601 = vunpack.c.l.b16 %v1461
    %v2602 = vunpack.c.h.b16 %v1461
    %v2603 = vunpack.c.l.b16 %v1462
    %v2604 = vunpack.c.h.b16 %v1462
    %v2605 = vunpack.c.l.b16 %v1463
    %v2606 = vunpack.c.h.b16 %v1463
    %v2607 = vunpack.c.l.b16 %v1464
    %v2608 = vunpack.c.h.b16 %v1464
    %v2609 = vunpack.c.l.b16 %v1465
    %v2610 = vunpack.c.h.b16 %v1465
    %v2611 = vunpack.c.l.b16 %v1466
    %v2612 = vunpack.c.h.b16 %v1466
    %v2613 = vunpack.c.l.b16 %v1467
    %v2614 = vunpack.c.h.b16 %v1467
    %v2615 = vunpack.c.l.b16 %v1468
    %v2616 = vunpack.c.h.b16 %v1468
    %v2617 = vunpack.c.l.b16 %v1469
    %v2618 = vunpack.c.h.b16 %v1469
    %v2619 = vunpack.c.l.b16 %v1470
    %v2620 = vunpack.c.h.b16 %v1470
    %v2621 = vunpack.c.l.b16 %v1471
    %v2622 = vunpack.c.h.b16 %v1471
    %v2623 = vunpack.c.l.b16 %v1472
    %v2624 = vunpack.c.h.b16 %v1472
    %v2625 = vunpack.c.l.b16 %v1473
    %v2626 = vunpack.c.h.b16 %v1473
    %v2627 = vunpack.c.l.b16 %v1474
    %v2628 = vunpack.c.h.b16 %v1474
    %v2629 = vunpack.c.l.b16 %v1475
    %v2630 = vunpack.c.h.b16 %v1475
    %v2631 = vunpack.c.l.b16 %v1476
    %v2632 = vunpack.c.h.b16 %v1476
    %v2633 = vunpack.c.l.b16 %v1477
    %v2634 = vunpack.c.h.b16 %v1477
    %v2635 = vunpack.c.l.b16 %v1478
    %v2636 = vunpack.c.h.b16 %v1478
    %v2637 = vunpack.c.l.b16 %v1479
    %v2638 = vunpack.c.h.b16 %v1479
    %v2639 = vunpack.c.l.b16 %v1480
    %v2640 = vunpack.c.h.b16 %v1480
    %v2641 = vunpack.c.l.b16 %v1481
    %v2642 = vunpack.c.h.b16 %v1481
    %v2643 = vunpack.c.l.b16 %v1482
    %v2644 = vunpack.c.h.b16 %v1482
    %v2645 = vunpack.c.l.b16 %v1483
    %v2646 = vunpack.c.h.b16 %v1483
    %v2647 = vunpack.c.l.b16 %v1484
    %v2648 = vunpack.c.h.b16 %v1484
    %v2649 = vunpack.c.l.b16 %v1485
    %v2650 = vunpack.c.h.b16 %v1485
    %v2651 = vunpack.c.l.b16 %v1486
    %v2652 = vunpack.c.h.b16 %v1486
    %v2653 = vunpack.c.l.b16 %v1487
    %v2654 = vunpack.c.h.b16 %v1487
    %v2655 = vunpack.c.l.b16 %v1488
    %v2656 = vunpack.c.h.b16 %v1488
    %v2657 = vunpack.c.l.b16 %v1489
    %v2658 = vunpack.c.h.b16 %v1489
    %v2659 = vunpack.c.l.b16 %v1490
    %v2660 = vunpack.c.h.b16 %v1490
    %v2661 = vunpack.c.l.b16 %v1491
    %v2662 = vunpack.c.h.b16 %v1491
    %v2663 = vunpack.c.l.b16 %v1492
    %v2664 = vunpack.c.h.b16 %v1492
    %v2665 = vunpack.c.l.b16 %v1493
    %v2666 = vunpack.c.h.b16 %v1493
    %v2667 = vunpack.c.l.b16 %v1494
    %v2668 = vunpack.c.h.b16 %v1494
    %v2669 = vunpack.c.l.b16 %v1495
    %v2670 = vunpack.c.h.b16 %v1495
    %v2671 = vunpack.c.l.b16 %v1496
    %v2672 = vunpack.c.h.b16 %v1496
    %v2673 = vunpack.c.l.b16 %v1497
    %v2674 = vunpack.c.h.b16 %v1497
    %v2675 = vunpack.c.l.b16 %v1498
    %v2676 = vunpack.c.h.b16 %v1498
    %v2677 = vunpack.c.l.b16 %v1499
    %v2678 = vunpack.c.h.b16 %v1499
    %v2679 = vunpack.c.l.b16 %v1500
    %v2680 = vunpack.c.h.b16 %v1500
    %v2681 = vunpack.c.l.b16 %v1501
    %v2682 = vunpack.c.h.b16 %v1501
    %v2683 = vunpack.c.l.b16 %v1502
    %v2684 = vunpack.c.h.b16 %v1502
    %v2685 = vunpack.c.l.b16 %v1503
    %v2686 = vunpack.c.h.b16 %v1503
    %v2687 = vunpack.c.l.b16 %v1504
    %v2688 = vunpack.c.h.b16 %v1504
    %v2689 = vunpack.c.l.b16 %v1505
    %v2690 = vunpack.c.h.b16 %v1505
    %v2691 = vunpack.c.l.b16 %v1506
    %v2692 = vunpack.c.h.b16 %v1506
    %v2693 = vunpack.c.l.b16 %v1507
    %v2694 = vunpack.c.h.b16 %v1507
    %v2695 = vunpack.c.l.b16 %v1508
    %v2696 = vunpack.c.h.b16 %v1508
    %v2697 = vunpack.c.l.b16 %v1509
    %v2698 = vunpack.c.h.b16 %v1509
    %v2699 = vunpack.c.l.b16 %v1510
    %v2700 = vunpack.c.h.b16 %v1510
    %v2701 = vunpack.c.l.b16 %v1511
    %v2702 = vunpack.c.h.b16 %v1511
    %v2703 = vunpack.c.l.b16 %v1512
    %v2704 = vunpack.c.h.b16 %v1512
    %v2705 = vunpack.c.l.b16 %v1513
    %v2706 = vunpack.c.h.b16 %v1513
    %v2707 = vunpack.c.l.b16 %v1514
    %v2708 = vunpack.c.h.b16 %v1514
    %v2709 = vunpack.c.l.b16 %v1515
    %v2710 = vunpack.c.h.b16 %v1515
    %v2711 = vunpack.c.l.b16 %v1516
    %v2712 = vunpack.c.h.b16 %v1516
    %v2713 = vunpack.c.l.b16 %v1517
    %v2714 = vunpack.c.h.b16 %v1517
    %v2715 = vunpack.c.l.b16 %v1518
    %v2716 = vunpack.c.h.b16 %v1518
    %v2717 = vunpack.c.l.b16 %v1519
    %v2718 = vunpack.c.h.b16 %v1519
    %v2719 = vunpack.c.l.b16 %v1520
    %v2720 = vunpack.c.h.b16 %v1520
    %v2721 = vunpack.c.l.b16 %v1521
    %v2722 = vunpack.c.h.b16 %v1521
    %v2723 = vunpack.c.l.b16 %v1522
    %v2724 = vunpack.c.h.b16 %v1522
    %v2725 = vunpack.c.l.b16 %v1523
    %v2726 = vunpack.c.h.b16 %v1523
    %v2727 = vunpack.c.l.b16 %v1524
    %v2728 = vunpack.c.h.b16 %v1524
    %v2729 = vunpack.c.l.b16 %v1525
    %v2730 = vunpack.c.h.b16 %v1525
    %v2731 = vunpack.c.l.b16 %v1526
    %v2732 = vunpack.c.h.b16 %v1526
    %v2733 = vunpack.c.l.b16 %v1527
    %v2734 = vunpack.c.h.b16 %v1527
    %v2735 = vunpack.c.l.b16 %v1528
    %v2736 = vunpack.c.h.b16 %v1528
    %v2737 = vunpack.c.l.b16 %v1529
    %v2738 = vunpack.c.h.b16 %v1529
    %v2739 = vunpack.c.l.b16 %v1530
    %v2740 = vunpack.c.h.b16 %v1530
    %v2741 = vunpack.c.l.b16 %v1531
    %v2742 = vunpack.c.h.b16 %v1531
    %v2743 = vunpack.c.l.b16 %v1532
    %v2744 = vunpack.c.h.b16 %v1532
    %v2745 = vunpack.c.l.b16 %v1533
    %v2746 = vunpack.c.h.b16 %v1533
    %v2747 = vunpack.c.l.b16 %v1534
    %v2748 = vunpack.c.h.b16 %v1534
    %v2749 = vunpack.c.l.b16 %v1535
    %v2750 = vunpack.c.h.b16 %v1535
    %v2751 = vunpack.c.l.b16 %v1536
    %v2752 = vunpack.c.h.b16 %v1536
    %v2753 = vunpack.c.l.b16 %v1537
    %v2754 = vunpack.c.h.b16 %v1537
    %v2755 = vunpack.c.l.b16 %v1538
    %v2756 = vunpack.c.h.b16 %v1538
    %v2757 = vunpack.c.l.b16 %v1539
    %v2758 = vunpack.c.h.b16 %v1539
    %v2759 = vunpack.c.l.b16 %v1540
    %v2760 = vunpack.c.h.b16 %v1540
    %v2761 = vunpack.c.l.b16 %v1541
    %v2762 = vunpack.c.h.b16 %v1541
    %v2763 = vunpack.c.l.b16 %v1542
    %v2764 = vunpack.c.h.b16 %v1542
    %v2765 = vunpack.c.l.b16 %v1543
    %v2766 = vunpack.c.h.b16 %v1543
    %v2767 = vunpack.c.l.b16 %v1544
    %v2768 = vunpack.c.h.b16 %v1544
    %v2769 = vunpack.c.l.b16 %v1545
    %v2770 = vunpack.c.h.b16 %v1545
    %v2771 = vunpack.c.l.b16 %v1546
    %v2772 = vunpack.c.h.b16 %v1546
    %v2773 = vunpack.c.l.b16 %v1547
    %v2774 = vunpack.c.h.b16 %v1547
    %v2775 = vunpack.c.l.b16 %v1548
    %v2776 = vunpack.c.h.b16 %v1548
    %v2777 = vunpack.c.l.b16 %v1549
    %v2778 = vunpack.c.h.b16 %v1549
    %v2779 = vunpack.c.l.b16 %v1550
    %v2780 = vunpack.c.h.b16 %v1550
    %v2781 = vunpack.c.l.b16 %v1551
    %v2782 = vunpack.c.h.b16 %v1551
    %v2783 = vunpack.c.l.b16 %v1552
    %v2784 = vunpack.c.h.b16 %v1552
    %v2785 = vunpack.c.l.b16 %v1553
    %v2786 = vunpack.c.h.b16 %v1553
    %v2787 = vunpack.c.l.b16 %v1554
    %v2788 = vunpack.c.h.b16 %v1554
    %v2789 = vunpack.c.l.b16 %v1555
    %v2790 = vunpack.c.h.b16 %v1555
    %v2791 = vunpack.c.l.b16 %v1556
    %v2792 = vunpack.c.h.b16 %v1556
    %v2793 = vunpack.c.l.b16 %v1557
    %v2794 = vunpack.c.h.b16 %v1557
    %v2795 = vunpack.c.l.b16 %v1558
    %v2796 = vunpack.c.h.b16 %v1558
    %v2797 = vunpack.c.l.b16 %v1559
    %v2798 = vunpack.c.h.b16 %v1559
    %v2799 = vunpack.c.l.b16 %v1560
    %v2800 = vunpack.c.h.b16 %v1560
    %v2801 = vunpack.c.l.b16 %v1561
    %v2802 = vunpack.c.h.b16 %v1561
    %v2803 = vunpack.c.l.b16 %v1562
    %v2804 = vunpack.c.h.b16 %v1562
    %v2805 = vunpack.c.l.b16 %v1563
    %v2806 = vunpack.c.h.b16 %v1563
    %v2807 = vunpack.c.l.b16 %v1564
    %v2808 = vunpack.c.h.b16 %v1564
    %v2809 = vunpack.c.l.b16 %v1565
    %v2810 = vunpack.c.h.b16 %v1565
    %v2811 = vunpack.c.l.b16 %v1566
    %v2812 = vunpack.c.h.b16 %v1566
    %v2813 = vunpack.c.l.b16 %v1567
    %v2814 = vunpack.c.h.b16 %v1567
    %v2815 = vunpack.c.l.b16 %v1568
    %v2816 = vunpack.c.h.b16 %v1568
    %v2817 = vunpack.c.l.b16 %v1569
    %v2818 = vunpack.c.h.b16 %v1569
    %v2819 = vunpack.c.l.b16 %v1570
    %v2820 = vunpack.c.h.b16 %v1570
    %v2821 = vunpack.c.l.b16 %v1571
    %v2822 = vunpack.c.h.b16 %v1571
    %v2823 = vunpack.c.l.b16 %v1572
    %v2824 = vunpack.c.h.b16 %v1572
    %v2825 = vunpack.c.l.b16 %v1573
    %v2826 = vunpack.c.h.b16 %v1573
    %v2827 = vunpack.c.l.b16 %v1574
    %v2828 = vunpack.c.h.b16 %v1574
    %v2829 = vunpack.c.l.b16 %v1575
    %v2830 = vunpack.c.h.b16 %v1575
    %v2831 = vunpack.c.l.b16 %v1576
    %v2832 = vunpack.c.h.b16 %v1576
    %v2833 = vunpack.c.l.b16 %v1577
    %v2834 = vunpack.c.h.b16 %v1577
    %v2835 = vunpack.c.l.b16 %v1578
    %v2836 = vunpack.c.h.b16 %v1578
    %v2837 = vunpack.c.l.b16 %v1579
    %v2838 = vunpack.c.h.b16 %v1579
    %v2839 = vunpack.c.l.b16 %v1580
    %v2840 = vunpack.c.h.b16 %v1580
    %v2841 = vunpack.c.l.b16 %v1581
    %v2842 = vunpack.c.h.b16 %v1581
    %v2843 = vunpack.c.l.b16 %v1582
    %v2844 = vunpack.c.h.b16 %v1582
    %v2845 = vunpack.c.l.b16 %v1583
    %v2846 = vunpack.c.h.b16 %v1583
    %v2847 = vunpack.c.l.b16 %v1584
    %v2848 = vunpack.c.h.b16 %v1584
    %v2849 = vunpack.c.l.b16 %v1585
    %v2850 = vunpack.c.h.b16 %v1585
    %v2851 = vunpack.c.l.b16 %v1586
    %v2852 = vunpack.c.h.b16 %v1586
    %v2853 = vunpack.c.l.b16 %v1587
    %v2854 = vunpack.c.h.b16 %v1587
    %v2855 = vunpack.c.l.b16 %v1588
    %v2856 = vunpack.c.h.b16 %v1588
    %v2857 = vunpack.c.l.b16 %v1589
    %v2858 = vunpack.c.h.b16 %v1589
    %v2859 = vunpack.c.l.b16 %v1590
    %v2860 = vunpack.c.h.b16 %v1590
    %v2861 = vunpack.c.l.b16 %v1591
    %v2862 = vunpack.c.h.b16 %v1591
    %v2863 = vunpack.c.l.b16 %v1592
    %v2864 = vunpack.c.h.b16 %v1592
    %v2865 = vunpack.c.l.b16 %v1593
    %v2866 = vunpack.c.h.b16 %v1593
    %v2867 = vunpack.c.l.b16 %v1594
    %v2868 = vunpack.c.h.b16 %v1594
    %v2869 = vunpack.c.l.b16 %v1595
    %v2870 = vunpack.c.h.b16 %v1595
    %v2871 = vunpack.c.l.b16 %v1596
    %v2872 = vunpack.c.h.b16 %v1596
    %v2873 = vunpack.c.l.b16 %v1597
    %v2874 = vunpack.c.h.b16 %v1597
    %v2875 = vunpack.c.l.b16 %v1598
    %v2876 = vunpack.c.h.b16 %v1598
    %v2877 = vunpack.c.l.b16 %v1599
    %v2878 = vunpack.c.h.b16 %v1599
    %v2879 = vunpack.c.l.b16 %v1600
    %v2880 = vunpack.c.h.b16 %v1600
    %v2881 = vunpack.c.l.b16 %v1601
    %v2882 = vunpack.c.h.b16 %v1601
    %v2883 = vunpack.c.l.b16 %v1602
    %v2884 = vunpack.c.h.b16 %v1602
    %v2885 = vunpack.c.l.b16 %v1603
    %v2886 = vunpack.c.h.b16 %v1603
    %v2887 = vunpack.c.l.b16 %v1604
    %v2888 = vunpack.c.h.b16 %v1604
    %v2889 = vunpack.c.l.b16 %v1605
    %v2890 = vunpack.c.h.b16 %v1605
    %v2891 = vunpack.c.l.b16 %v1606
    %v2892 = vunpack.c.h.b16 %v1606
    %v2893 = vunpack.c.l.b16 %v1607
    %v2894 = vunpack.c.h.b16 %v1607
    %v2895 = vunpack.c.l.b16 %v1608
    %v2896 = vunpack.c.h.b16 %v1608
    %v2897 = vunpack.c.l.b16 %v1609
    %v2898 = vunpack.c.h.b16 %v1609
    %v2899 = vunpack.c.l.b16 %v1610
    %v2900 = vunpack.c.h.b16 %v1610
    %v2901 = vunpack.c.l.b16 %v1611
    %v2902 = vunpack.c.h.b16 %v1611
    %v2903 = vunpack.c.l.b16 %v1612
    %v2904 = vunpack.c.h.b16 %v1612
    %v2905 = vunpack.c.l.b16 %v1613
    %v2906 = vunpack.c.h.b16 %v1613
    %v2907 = vunpack.c.l.b16 %v1614
    %v2908 = vunpack.c.h.b16 %v1614
    %v2909 = vunpack.c.l.b16 %v1615
    %v2910 = vunpack.c.h.b16 %v1615
    %v2911 = vunpack.c.l.b16 %v1616
    %v2912 = vunpack.c.h.b16 %v1616
    %v2913 = vunpack.c.l.b16 %v1617
    %v2914 = vunpack.c.h.b16 %v1617
    %v2915 = vunpack.c.l.b16 %v1618
    %v2916 = vunpack.c.h.b16 %v1618
    %v2917 = vunpack.c.l.b16 %v1619
    %v2918 = vunpack.c.h.b16 %v1619
    %v2919 = vunpack.c.l.b16 %v1620
    %v2920 = vunpack.c.h.b16 %v1620
    %v2921 = vunpack.c.l.b16 %v1621
    %v2922 = vunpack.c.h.b16 %v1621
    %v2923 = vunpack.c.l.b16 %v1622
    %v2924 = vunpack.c.h.b16 %v1622
    %v2925 = vunpack.c.l.b16 %v1623
    %v2926 = vunpack.c.h.b16 %v1623
    %v2927 = vunpack.c.l.b16 %v1624
    %v2928 = vunpack.c.h.b16 %v1624
    %v2929 = vunpack.c.l.b16 %v1625
    %v2930 = vunpack.c.h.b16 %v1625
    %v2931 = vunpack.c.l.b16 %v1626
    %v2932 = vunpack.c.h.b16 %v1626
    %v2933 = vunpack.c.l.b16 %v1627
    %v2934 = vunpack.c.h.b16 %v1627
    %v2935 = vunpack.c.l.b16 %v1628
    %v2936 = vunpack.c.h.b16 %v1628
    %v2937 = vunpack.c.l.b16 %v1629
    %v2938 = vunpack.c.h.b16 %v1629
    %v2939 = vunpack.c.l.b16 %v1630
    %v2940 = vunpack.c.h.b16 %v1630
    %v2941 = vunpack.c.l.b16 %v1631
    %v2942 = vunpack.c.h.b16 %v1631
    %v2943 = vunpack.c.l.b16 %v1632
    %v2944 = vunpack.c.h.b16 %v1632
    %v2945 = vunpack.c.l.b16 %v1633
    %v2946 = vunpack.c.h.b16 %v1633
    %v2947 = vunpack.c.l.b16 %v1634
    %v2948 = vunpack.c.h.b16 %v1634
    %v2949 = vunpack.c.l.b16 %v1635
    %v2950 = vunpack.c.h.b16 %v1635
    %v2951 = vunpack.c.l.b16 %v1636
    %v2952 = vunpack.c.h.b16 %v1636
    %v2953 = vunpack.c.l.b16 %v1637
    %v2954 = vunpack.c.h.b16 %v1637
    %v2955 = vunpack.c.l.b16 %v1638
    %v2956 = vunpack.c.h.b16 %v1638
    %v2957 = vunpack.c.l.b16 %v1639
    %v2958 = vunpack.c.h.b16 %v1639
    %v2959 = vunpack.c.l.b16 %v1640
    %v2960 = vunpack.c.h.b16 %v1640
    %v2961 = vunpack.c.l.b16 %v1641
    %v2962 = vunpack.c.h.b16 %v1641
    %v2963 = vunpack.c.l.b16 %v1642
    %v2964 = vunpack.c.h.b16 %v1642
    %v2965 = vunpack.c.l.b16 %v1643
    %v2966 = vunpack.c.h.b16 %v1643
    %v2967 = vunpack.c.l.b16 %v1644
    %v2968 = vunpack.c.h.b16 %v1644
    %v2969 = vunpack.c.l.b16 %v1645
    %v2970 = vunpack.c.h.b16 %v1645
    %v2971 = vunpack.c.l.b16 %v1646
    %v2972 = vunpack.c.h.b16 %v1646
    %v2973 = vunpack.c.l.b16 %v1647
    %v2974 = vunpack.c.h.b16 %v1647
    %v2975 = vunpack.c.l.b16 %v1648
    %v2976 = vunpack.c.h.b16 %v1648
    %v2977 = vunpack.c.l.b16 %v1649
    %v2978 = vunpack.c.h.b16 %v1649
    %v2979 = vunpack.c.l.b16 %v1650
    %v2980 = vunpack.c.h.b16 %v1650
    %v2981 = vunpack.c.l.b16 %v1651
    %v2982 = vunpack.c.h.b16 %v1651
    %v2983 = vunpack.c.l.b16 %v1652
    %v2984 = vunpack.c.h.b16 %v1652
    %v2985 = vunpack.c.l.b16 %v1653
    %v2986 = vunpack.c.h.b16 %v1653
    %v2987 = vunpack.c.l.b16 %v1654
    %v2988 = vunpack.c.h.b16 %v1654
    %v2989 = vunpack.c.l.b16 %v1655
    %v2990 = vunpack.c.h.b16 %v1655
    %v2991 = vunpack.c.l.b16 %v1656
    %v2992 = vunpack.c.h.b16 %v1656
    %v2993 = vunpack.c.l.b16 %v1657
    %v2994 = vunpack.c.h.b16 %v1657
    %v2995 = vunpack.c.l.b16 %v1658
    %v2996 = vunpack.c.h.b16 %v1658
    %v2997 = vunpack.c.l.b16 %v1659
    %v2998 = vunpack.c.h.b16 %v1659
    %v2999 = vunpack.c.l.b16 %v1660
    %v3000 = vunpack.c.h.b16 %v1660
    %v3001 = vunpack.c.l.b16 %v1661
    %v3002 = vunpack.c.h.b16 %v1661
    %v3003 = vunpack.c.l.b16 %v1662
    %v3004 = vunpack.c.h.b16 %v1662
    %v3005 = vunpack.c.l.b16 %v1663
    %v3006 = vunpack.c.h.b16 %v1663
    %v3007 = vunpack.c.l.b16 %v1664
    %v3008 = vunpack.c.h.b16 %v1664
    %v3009 = vunpack.c.l.b16 %v1665
    %v3010 = vunpack.c.h.b16 %v1665
    %v3011 = vunpack.c.l.b16 %v1666
    %v3012 = vunpack.c.h.b16 %v1666
    %v3013 = vunpack.c.l.b16 %v1667
    %v3014 = vunpack.c.h.b16 %v1667
    %v3015 = vunpack.c.l.b16 %v1668
    %v3016 = vunpack.c.h.b16 %v1668
    %v3017 = vunpack.c.l.b16 %v1669
    %v3018 = vunpack.c.h.b16 %v1669
    %v3019 = vunpack.c.l.b16 %v1670
    %v3020 = vunpack.c.h.b16 %v1670
    %v3021 = vunpack.c.l.b16 %v1671
    %v3022 = vunpack.c.h.b16 %v1671
    %v3023 = vunpack.c.l.b16 %v1672
    %v3024 = vunpack.c.h.b16 %v1672
    %v3025 = vunpack.c.l.b16 %v1673
    %v3026 = vunpack.c.h.b16 %v1673
    %v3027 = vunpack.c.l.b16 %v1674
    %v3028 = vunpack.c.h.b16 %v1674
    %v3029 = vunpack.c.l.b16 %v1675
    %v3030 = vunpack.c.h.b16 %v1675
    %v3031 = vunpack.c.l.b16 %v1676
    %v3032 = vunpack.c.h.b16 %v1676
    %v3033 = vunpack.c.l.b16 %v1677
    %v3034 = vunpack.c.h.b16 %v1677
    %v3035 = vunpack.c.l.b16 %v1678
    %v3036 = vunpack.c.h.b16 %v1678
    %v3037 = vunpack.c.l.b16 %v1679
    %v3038 = vunpack.c.h.b16 %v1679
    %v3039 = vunpack.c.l.b16 %v1680
    %v3040 = vunpack.c.h.b16 %v1680
    %v3041 = vunpack.c.l.b16 %v1681
    %v3042 = vunpack.c.h.b16 %v1681
    %v3043 = vunpack.c.l.b16 %v1682
    %v3044 = vunpack.c.h.b16 %v1682
    %v3045 = vunpack.c.l.b16 %v1683
    %v3046 = vunpack.c.h.b16 %v1683
    %v3047 = vunpack.c.l.b16 %v1684
    %v3048 = vunpack.c.h.b16 %v1684
    %v3049 = vunpack.c.l.b16 %v1685
    %v3050 = vunpack.c.h.b16 %v1685
    %v3051 = vunpack.c.l.b16 %v1686
    %v3052 = vunpack.c.h.b16 %v1686
    %v3053 = vunpack.c.l.b16 %v1687
    %v3054 = vunpack.c.h.b16 %v1687
    %v3055 = vunpack.c.l.b16 %v1688
    %v3056 = vunpack.c.h.b16 %v1688
    %v3057 = vunpack.c.l.b16 %v1689
    %v3058 = vunpack.c.h.b16 %v1689
    %v3059 = vunpack.c.l.b16 %v1690
    %v3060 = vunpack.c.h.b16 %v1690
    %v3061 = vunpack.c.l.b16 %v1691
    %v3062 = vunpack.c.h.b16 %v1691
    %v3063 = vunpack.c.l.b16 %v1692
    %v3064 = vunpack.c.h.b16 %v1692
    %v3065 = vunpack.c.l.b16 %v1693
    %v3066 = vunpack.c.h.b16 %v1693
    %v3067 = vunpack.c.l.b16 %v1694
    %v3068 = vunpack.c.h.b16 %v1694
    %v3069 = vunpack.c.l.b16 %v1695
    %v3070 = vunpack.c.h.b16 %v1695
    %v3071 = vunpack.c.l.b16 %v1696
    %v3072 = vunpack.c.h.b16 %v1696
    %v3073 = vunpack.c.l.b16 %v1697
    %v3074 = vunpack.c.h.b16 %v1697
    %v3075 = vunpack.c.l.b16 %v1698
    %v3076 = vunpack.c.h.b16 %v1698
    %v3077 = vunpack.c.l.b16 %v1699
    %v3078 = vunpack.c.h.b16 %v1699
    %v3079 = vunpack.c.l.b16 %v1700
    %v3080 = vunpack.c.h.b16 %v1700
    %v3081 = vunpack.c.l.b16 %v1701
    %v3082 = vunpack.c.h.b16 %v1701
    %v3083 = vunpack.c.l.b16 %v1702
    %v3084 = vunpack.c.h.b16 %v1702
    %v3085 = vunpack.c.l.b16 %v1703
    %v3086 = vunpack.c.h.b16 %v1703
    %v3087 = vunpack.c.l.b16 %v1704
    %v3088 = vunpack.c.h.b16 %v1704
    %v3089 = vunpack.c.l.b16 %v1705
    %v3090 = vunpack.c.h.b16 %v1705
    %v3091 = vunpack.c.l.b16 %v1706
    %v3092 = vunpack.c.h.b16 %v1706
    %v3093 = vunpack.c.l.b16 %v1707
    %v3094 = vunpack.c.h.b16 %v1707
    %v3095 = vunpack.c.l.b16 %v1708
    %v3096 = vunpack.c.h.b16 %v1708
    %v3097 = vunpack.c.l.b16 %v1709
    %v3098 = vunpack.c.h.b16 %v1709
    %v3099 = vunpack.c.l.b16 %v1710
    %v3100 = vunpack.c.h.b16 %v1710
    %v3101 = vunpack.c.l.b16 %v1711
    %v3102 = vunpack.c.h.b16 %v1711
    %v3103 = vunpack.c.l.b16 %v1712
    %v3104 = vunpack.c.h.b16 %v1712
    %v3105 = vunpack.c.l.b16 %v1713
    %v3106 = vunpack.c.h.b16 %v1713
    %v3107 = vunpack.c.l.b16 %v1714
    %v3108 = vunpack.c.h.b16 %v1714
    %v3109 = vunpack.c.l.b16 %v1715
    %v3110 = vunpack.c.h.b16 %v1715
    %v3111 = vunpack.c.l.b16 %v1716
    %v3112 = vunpack.c.h.b16 %v1716
    %v3113 = vunpack.c.l.b16 %v1717
    %v3114 = vunpack.c.h.b16 %v1717
    %v3115 = vunpack.c.l.b16 %v1718
    %v3116 = vunpack.c.h.b16 %v1718
    %v3117 = vunpack.c.l.b16 %v1719
    %v3118 = vunpack.c.h.b16 %v1719
    %v3119 = vunpack.c.l.b16 %v1720
    %v3120 = vunpack.c.h.b16 %v1720
    %v3121 = vunpack.c.l.b16 %v1721
    %v3122 = vunpack.c.h.b16 %v1721
    %v3123 = vunpack.c.l.b16 %v1722
    %v3124 = vunpack.c.h.b16 %v1722
    %v3125 = vunpack.c.l.b16 %v1723
    %v3126 = vunpack.c.h.b16 %v1723
    %v3127 = vunpack.c.l.b16 %v1724
    %v3128 = vunpack.c.h.b16 %v1724
    %v3129 = vunpack.c.l.b16 %v1725
    %v3130 = vunpack.c.h.b16 %v1725
    %v3131 = vunpack.c.l.b16 %v1726
    %v3132 = vunpack.c.h.b16 %v1726
    %v3133 = vunpack.c.l.b16 %v1727
    %v3134 = vunpack.c.h.b16 %v1727
    %v3135 = vunpack.c.l.b16 %v1728
    %v3136 = vunpack.c.h.b16 %v1728
    %v3137 = vunpack.c.l.b16 %v1729
    %v3138 = vunpack.c.h.b16 %v1729
    %v3139 = vunpack.c.l.b16 %v1730
    %v3140 = vunpack.c.h.b16 %v1730
    %v3141 = vunpack.c.l.b16 %v1731
    %v3142 = vunpack.c.h.b16 %v1731
    %v3143 = vunpack.c.l.b16 %v1732
    %v3144 = vunpack.c.h.b16 %v1732
    %v3145 = vunpack.c.l.b16 %v1733
    %v3146 = vunpack.c.h.b16 %v1733
    %v3147 = vunpack.c.l.b16 %v1734
    %v3148 = vunpack.c.h.b16 %v1734
    %v3149 = vunpack.c.l.b16 %v1735
    %v3150 = vunpack.c.h.b16 %v1735
    %v3151 = vunpack.c.l.b16 %v1736
    %v3152 = vunpack.c.h.b16 %v1736
    %v3153 = vunpack.c.l.b16 %v1737
    %v3154 = vunpack.c.h.b16 %v1737
    %v3155 = vunpack.c.l.b16 %v1738
    %v3156 = vunpack.c.h.b16 %v1738
    %v3157 = vunpack.c.l.b16 %v1739
    %v3158 = vunpack.c.h.b16 %v1739
    %v3159 = vunpack.c.l.b16 %v1740
    %v3160 = vunpack.c.h.b16 %v1740
    %v3161 = vunpack.c.l.b16 %v1741
    %v3162 = vunpack.c.h.b16 %v1741
    %v3163 = vunpack.c.l.b16 %v1742
    %v3164 = vunpack.c.h.b16 %v1742
    %v3165 = vunpack.c.l.b16 %v1743
    %v3166 = vunpack.c.h.b16 %v1743
    %v3167 = vunpack.c.l.b16 %v1744
    %v3168 = vunpack.c.h.b16 %v1744
    %v3169 = vunpack.c.l.b16 %v1745
    %v3170 = vunpack.c.h.b16 %v1745
    %v3171 = vunpack.c.l.b16 %v1746
    %v3172 = vunpack.c.h.b16 %v1746
    %v3173 = vunpack.c.l.b16 %v1747
    %v3174 = vunpack.c.h.b16 %v1747
    %v3175 = vunpack.c.l.b16 %v1748
    %v3176 = vunpack.c.h.b16 %v1748
    %v3177 = vunpack.c.l.b16 %v1749
    %v3178 = vunpack.c.h.b16 %v1749
    %v3179 = vunpack.c.l.b16 %v1750
    %v3180 = vunpack.c.h.b16 %v1750
    %v3181 = vunpack.c.l.b16 %v1751
    %v3182 = vunpack.c.h.b16 %v1751
    %v3183 = vunpack.c.l.b16 %v1752
    %v3184 = vunpack.c.h.b16 %v1752
    %v3185 = vunpack.c.l.b16 %v1753
    %v3186 = vunpack.c.h.b16 %v1753
    %v3187 = vunpack.c.l.b16 %v1754
    %v3188 = vunpack.c.h.b16 %v1754
    %v3189 = vunpack.c.l.b16 %v1755
    %v3190 = vunpack.c.h.b16 %v1755
    %v3191 = vunpack.c.l.b16 %v1756
    %v3192 = vunpack.c.h.b16 %v1756
    %v3193 = vunpack.c.l.b16 %v1757
    %v3194 = vunpack.c.h.b16 %v1757
    %v3195 = vunpack.c.l.b16 %v1758
    %v3196 = vunpack.c.h.b16 %v1758
    %v3197 = vunpack.c.l.b16 %v1759
    %v3198 = vunpack.c.h.b16 %v1759
    %v3199 = vunpack.c.l.b16 %v1760
    %v3200 = vunpack.c.h.b16 %v1760
    %v3201 = vunpack.c.l.b16 %v1761
    %v3202 = vunpack.c.h.b16 %v1761
    %v3203 = vunpack.c.l.b16 %v1762
    %v3204 = vunpack.c.h.b16 %v1762
    %v3205 = vunpack.c.l.b16 %v1763
    %v3206 = vunpack.c.h.b16 %v1763
    %v3207 = vunpack.c.l.b16 %v1764
    %v3208 = vunpack.c.h.b16 %v1764
    %v3209 = vunpack.c.l.b16 %v1765
    %v3210 = vunpack.c.h.b16 %v1765
    %v3211 = vunpack.c.l.b16 %v1766
    %v3212 = vunpack.c.h.b16 %v1766
    %v3213 = vunpack.c.l.b16 %v1767
    %v3214 = vunpack.c.h.b16 %v1767
    %v3215 = vunpack.c.l.b16 %v1768
    %v3216 = vunpack.c.h.b16 %v1768
    %v3217 = vunpack.c.l.b16 %v1769
    %v3218 = vunpack.c.h.b16 %v1769
    %v3219 = vunpack.c.l.b16 %v1770
    %v3220 = vunpack.c.h.b16 %v1770
    %v3221 = vunpack.c.l.b16 %v1771
    %v3222 = vunpack.c.h.b16 %v1771
    %v3223 = vunpack.c.l.b16 %v1772
    %v3224 = vunpack.c.h.b16 %v1772
    %v3225 = vunpack.c.l.b16 %v1773
    %v3226 = vunpack.c.h.b16 %v1773
    %v3227 = vunpack.c.l.b16 %v1774
    %v3228 = vunpack.c.h.b16 %v1774
    %v3229 = vunpack.c.l.b16 %v1775
    %v3230 = vunpack.c.h.b16 %v1775
    %v3231 = vunpack.c.l.b16 %v1776
    %v3232 = vunpack.c.h.b16 %v1776
    %v3233 = vunpack.c.l.b16 %v1777
    %v3234 = vunpack.c.h.b16 %v1777
    %v3235 = vunpack.c.l.b16 %v1778
    %v3236 = vunpack.c.h.b16 %v1778
    %v3237 = vunpack.c.l.b16 %v1779
    %v3238 = vunpack.c.h.b16 %v1779
    %v3239 = vunpack.c.l.b16 %v1780
    %v3240 = vunpack.c.h.b16 %v1780
    %v3241 = vunpack.c.l.b16 %v1781
    %v3242 = vunpack.c.h.b16 %v1781
    %v3243 = vunpack.c.l.b16 %v1782
    %v3244 = vunpack.c.h.b16 %v1782
    %v3245 = vunpack.c.l.b16 %v1783
    %v3246 = vunpack.c.h.b16 %v1783
    %v3247 = vunpack.c.l.b16 %v1784
    %v3248 = vunpack.c.h.b16 %v1784
    %v3249 = vunpack.c.l.b16 %v1785
    %v3250 = vunpack.c.h.b16 %v1785
    %v3251 = vunpack.c.l.b16 %v1786
    %v3252 = vunpack.c.h.b16 %v1786
    %v3253 = vunpack.c.l.b16 %v1787
    %v3254 = vunpack.c.h.b16 %v1787
    %v3255 = vunpack.c.l.b16 %v1788
    %v3256 = vunpack.c.h.b16 %v1788
    %v3257 = vunpack.c.l.b16 %v1789
    %v3258 = vunpack.c.h.b16 %v1789
    %v3259 = vunpack.c.l.b16 %v1790
    %v3260 = vunpack.c.h.b16 %v1790
    %v3261 = vunpack.c.l.b16 %v1791
    %v3262 = vunpack.c.h.b16 %v1791
    %v3263 = vunpack.c.l.b16 %v1792
    %v3264 = vunpack.c.h.b16 %v1792
    %v3265 = vunpack.c.l.b16 %v1793
    %v3266 = vunpack.c.h.b16 %v1793
    %v3267 = vunpack.c.l.b16 %v1794
    %v3268 = vunpack.c.h.b16 %v1794
    %v3269 = vunpack.c.l.b16 %v1795
    %v3270 = vunpack.c.h.b16 %v1795
    %v3271 = vunpack.c.l.b16 %v1796
    %v3272 = vunpack.c.h.b16 %v1796
    %v3273 = vunpack.c.l.b16 %v1797
    %v3274 = vunpack.c.h.b16 %v1797
    %v3275 = vunpack.c.l.b16 %v1798
    %v3276 = vunpack.c.h.b16 %v1798
    %v3277 = vunpack.c.l.b16 %v1799
    %v3278 = vunpack.c.h.b16 %v1799
    %v3279 = vunpack.c.l.b16 %v1800
    %v3280 = vunpack.c.h.b16 %v1800
    %v3281 = vunpack.c.l.b16 %v1801
    %v3282 = vunpack.c.h.b16 %v1801
    %v3283 = vunpack.c.l.b16 %v1802
    %v3284 = vunpack.c.h.b16 %v1802
    %v3285 = vunpack.c.l.b16 %v1803
    %v3286 = vunpack.c.h.b16 %v1803
    %v3287 = vunpack.c.l.b16 %v1804
    %v3288 = vunpack.c.h.b16 %v1804
    %v3289 = vunpack.c.l.b16 %v1805
    %v3290 = vunpack.c.h.b16 %v1805
    %v3291 = vunpack.c.l.b16 %v1806
    %v3292 = vunpack.c.h.b16 %v1806
    %v3293 = vunpack.c.l.b16 %v1807
    %v3294 = vunpack.c.h.b16 %v1807
    %v3295 = vunpack.c.l.b16 %v1808
    %v3296 = vunpack.c.h.b16 %v1808
    %v3297 = vunpack.c.l.b16 %v1809
    %v3298 = vunpack.c.h.b16 %v1809
    %v3299 = vunpack.c.l.b16 %v1810
    %v3300 = vunpack.c.h.b16 %v1810
    %v3301 = vunpack.c.l.b16 %v1811
    %v3302 = vunpack.c.h.b16 %v1811
    %v3303 = vunpack.c.l.b16 %v1812
    %v3304 = vunpack.c.h.b16 %v1812
    %v3305 = vunpack.c.l.b16 %v1813
    %v3306 = vunpack.c.h.b16 %v1813
    %v3307 = vunpack.c.l.b16 %v1814
    %v3308 = vunpack.c.h.b16 %v1814
    %v3309 = vunpack.c.l.b16 %v1815
    %v3310 = vunpack.c.h.b16 %v1815
    %v3311 = vunpack.c.l.b16 %v1816
    %v3312 = vunpack.c.h.b16 %v1816
    %v3313 = vunpack.c.l.b16 %v1817
    %v3314 = vunpack.c.h.b16 %v1817
    %v3315 = vunpack.c.l.b16 %v1818
    %v3316 = vunpack.c.h.b16 %v1818
    %v3317 = vunpack.c.l.b16 %v1819
    %v3318 = vunpack.c.h.b16 %v1819
    %v3319 = vunpack.c.l.b16 %v1820
    %v3320 = vunpack.c.h.b16 %v1820
    %v3321 = vunpack.c.l.b16 %v1821
    %v3322 = vunpack.c.h.b16 %v1821
    %v3323 = vunpack.c.l.b16 %v1822
    %v3324 = vunpack.c.h.b16 %v1822
    %v3325 = vunpack.c.l.b16 %v1823
    %v3326 = vunpack.c.h.b16 %v1823
    %v3327 = vunpack.c.l.b16 %v1824
    %v3328 = vunpack.c.h.b16 %v1824
    %v3329 = vunpack.c.l.b16 %v1825
    %v3330 = vunpack.c.h.b16 %v1825
    %v3331 = vunpack.c.l.b16 %v1826
    %v3332 = vunpack.c.h.b16 %v1826
    %v3333 = vunpack.c.l.b16 %v1827
    %v3334 = vunpack.c.h.b16 %v1827
    %v3335 = vunpack.c.l.b16 %v1828
    %v3336 = vunpack.c.h.b16 %v1828
    %v3337 = vunpack.c.l.b16 %v1829
    %v3338 = vunpack.c.h.b16 %v1829
    %v3339 = vunpack.c.l.b16 %v1830
    %v3340 = vunpack.c.h.b16 %v1830
    %v3341 = vunpack.c.l.b16 %v1831
    %v3342 = vunpack.c.h.b16 %v1831
    %v3343 = vunpack.c.l.b16 %v1832
    %v3344 = vunpack.c.h.b16 %v1832
    %v3345 = vunpack.c.l.b16 %v1833
    %v3346 = vunpack.c.h.b16 %v1833
    %v3347 = vunpack.c.l.b16 %v1834
    %v3348 = vunpack.c.h.b16 %v1834
    %v3349 = vunpack.c.l.b16 %v1835
    %v3350 = vunpack.c.h.b16 %v1835
    %v3351 = vunpack.c.l.b16 %v1836
    %v3352 = vunpack.c.h.b16 %v1836
    %v3353 = vunpack.c.l.b16 %v1837
    %v3354 = vunpack.c.h.b16 %v1837
    %v3355 = vunpack.c.l.b16 %v1838
    %v3356 = vunpack.c.h.b16 %v1838
    %v3357 = vunpack.c.l.b16 %v1839
    %v3358 = vunpack.c.h.b16 %v1839
    %v3359 = vunpack.c.l.b16 %v1840
    %v3360 = vunpack.c.h.b16 %v1840
    %v3361 = vunpack.c.l.b16 %v1841
    %v3362 = vunpack.c.h.b16 %v1841
    %v3363 = vunpack.c.l.b16 %v1842
    %v3364 = vunpack.c.h.b16 %v1842
    %v3365 = vunpack.c.l.b16 %v1843
    %v3366 = vunpack.c.h.b16 %v1843
    %v3367 = vunpack.c.l.b16 %v1844
    %v3368 = vunpack.c.h.b16 %v1844
    %v3369 = vunpack.c.l.b16 %v1845
    %v3370 = vunpack.c.h.b16 %v1845
    %v3371 = vunpack.c.l.b16 %v1846
    %v3372 = vunpack.c.h.b16 %v1846
    %v3373 = vunpack.c.l.b16 %v1847
    %v3374 = vunpack.c.h.b16 %v1847
    %v3375 = vunpack.c.l.b16 %v1848
    %v3376 = vunpack.c.h.b16 %v1848
    %v3377 = vunpack.c.l.b16 %v1849
    %v3378 = vunpack.c.h.b16 %v1849
    %v3379 = vunpack.c.l.b16 %v1850
    %v3380 = vunpack.c.h.b16 %v1850
    %v3381 = vunpack.c.l.b16 %v1851
    %v3382 = vunpack.c.h.b16 %v1851
    %v3383 = vunpack.c.l.b16 %v1852
    %v3384 = vunpack.c.h.b16 %v1852
    %v3385 = vunpack.c.l.b16 %v1853
    %v3386 = vunpack.c.h.b16 %v1853
    %v3387 = vunpack.c.l.b16 %v1854
    %v3388 = vunpack.c.h.b16 %v1854
    %v3389 = vunpack.c.l.b16 %v1855
    %v3390 = vunpack.c.h.b16 %v1855
    %v3391 = vunpack.c.l.b16 %v1856
    %v3392 = vunpack.c.h.b16 %v1856
    %v3393 = vunpack.c.l.b16 %v1857
    %v3394 = vunpack.c.h.b16 %v1857
    %v3395 = vunpack.c.l.b16 %v1858
    %v3396 = vunpack.c.h.b16 %v1858
    %v3397 = vunpack.c.l.b16 %v1859
    %v3398 = vunpack.c.h.b16 %v1859
    %v3399 = vunpack.c.l.b16 %v1860
    %v3400 = vunpack.c.h.b16 %v1860
    %v3401 = vunpack.c.l.b16 %v1861
    %v3402 = vunpack.c.h.b16 %v1861
    %v3403 = vunpack.c.l.b16 %v1862
    %v3404 = vunpack.c.h.b16 %v1862
    %v3405 = vunpack.c.l.b16 %v1863
    %v3406 = vunpack.c.h.b16 %v1863
    %v3407 = vunpack.c.l.b16 %v1864
    %v3408 = vunpack.c.h.b16 %v1864
    %v3409 = vunpack.c.l.b16 %v1865
    %v3410 = vunpack.c.h.b16 %v1865
    %v3411 = vunpack.c.l.b16 %v1866
    %v3412 = vunpack.c.h.b16 %v1866
    %v3413 = vunpack.c.l.b16 %v1867
    %v3414 = vunpack.c.h.b16 %v1867
    %v3415 = vunpack.c.l.b16 %v1868
    %v3416 = vunpack.c.h.b16 %v1868
    %v3417 = vunpack.c.l.b16 %v1869
    %v3418 = vunpack.c.h.b16 %v1869
    %v3419 = vunpack.c.l.b16 %v1870
    %v3420 = vunpack.c.h.b16 %v1870
    %v3421 = vunpack.c.l.b16 %v1871
    %v3422 = vunpack.c.h.b16 %v1871
    %v3423 = vunpack.c.l.b16 %v1872
    %v3424 = vunpack.c.h.b16 %v1872
    %v3425 = vunpack.c.l.b16 %v1873
    %v3426 = vunpack.c.h.b16 %v1873
    %v3427 = vunpack.c.l.b16 %v1874
    %v3428 = vunpack.c.h.b16 %v1874
    %v3429 = vunpack.c.l.b16 %v1875
    %v3430 = vunpack.c.h.b16 %v1875
    %v3431 = vunpack.c.l.b16 %v1876
    %v3432 = vunpack.c.h.b16 %v1876
    %v3433 = vunpack.c.l.b16 %v1877
    %v3434 = vunpack.c.h.b16 %v1877
    %v3435 = vunpack.c.l.b16 %v1878
    %v3436 = vunpack.c.h.b16 %v1878
    %v3437 = vunpack.c.l.b16 %v1879
    %v3438 = vunpack.c.h.b16 %v1879
    %v3439 = vunpack.c.l.b16 %v1880
    %v3440 = vunpack.c.h.b16 %v1880
    %v3441 = vunpack.c.l.b16 %v1881
    %v3442 = vunpack.c.h.b16 %v1881
    %v3443 = vunpack.c.l.b16 %v1882
    %v3444 = vunpack.c.h.b16 %v1882
    %v3445 = vunpack.c.l.b16 %v1883
    %v3446 = vunpack.c.h.b16 %v1883
    %v3447 = vunpack.c.l.b16 %v1884
    %v3448 = vunpack.c.h.b16 %v1884
    %v3449 = vunpack.c.l.b16 %v1885
    %v3450 = vunpack.c.h.b16 %v1885
    %v3451 = vunpack.c.l.b16 %v1886
    %v3452 = vunpack.c.h.b16 %v1886
    %v3453 = vunpack.c.l.b16 %v1887
    %v3454 = vunpack.c.h.b16 %v1887
    %v3455 = vunpack.c.l.b16 %v1888
    %v3456 = vunpack.c.h.b16 %v1888
    %v3457 = vunpack.c.l.b16 %v1889
    %v3458 = vunpack.c.h.b16 %v1889
    %v3459 = vunpack.c.l.b16 %v1890
    %v3460 = vunpack.c.h.b16 %v1890
    %v3461 = vunpack.c.l.b16 %v1891
    %v3462 = vunpack.c.h.b16 %v1891
    %v3463 = vunpack.c.l.b16 %v1892
    %v3464 = vunpack.c.h.b16 %v1892
    %v3465 = vunpack.c.l.b16 %v1893
    %v3466 = vunpack.c.h.b16 %v1893
    %v3467 = vunpack.c.l.b16 %v1894
    %v3468 = vunpack.c.h.b16 %v1894
    %v3469 = vunpack.c.l.b16 %v1895
    %v3470 = vunpack.c.h.b16 %v1895
    %v3471 = vunpack.c.l.b16 %v1896
    %v3472 = vunpack.c.h.b16 %v1896
    %v3473 = vunpack.c.l.b16 %v1897
    %v3474 = vunpack.c.h.b16 %v1897
    %v3475 = vunpack.c.l.b16 %v1898
    %v3476 = vunpack.c.h.b16 %v1898
    %v3477 = vunpack.c.l.b16 %v1899
    %v3478 = vunpack.c.h.b16 %v1899
    %v3479 = vunpack.c.l.b16 %v1900
    %v3480 = vunpack.c.h.b16 %v1900
    %v3481 = vunpack.c.l.b16 %v1901
    %v3482 = vunpack.c.h.b16 %v1901
    %v3483 = vunpack.c.l.b16 %v1902
    %v3484 = vunpack.c.h.b16 %v1902
    %v3485 = vunpack.c.l.b16 %v1903
    %v3486 = vunpack.c.h.b16 %v1903
    %v3487 = vunpack.c.l.b16 %v1904
    %v3488 = vunpack.c.h.b16 %v1904
    %v3489 = vunpack.c.l.b16 %v1905
    %v3490 = vunpack.c.h.b16 %v1905
    %v3491 = vunpack.c.l.b16 %v1906
    %v3492 = vunpack.c.h.b16 %v1906
    %v3493 = vunpack.c.l.b16 %v1907
    %v3494 = vunpack.c.h.b16 %v1907
    %v3495 = vunpack.c.l.b16 %v1908
    %v3496 = vunpack.c.h.b16 %v1908
    %v3497 = vunpack.c.l.b16 %v1909
    %v3498 = vunpack.c.h.b16 %v1909
    %v3499 = vunpack.c.l.b16 %v1910
    %v3500 = vunpack.c.h.b16 %v1910
    %v3501 = vunpack.c.l.b16 %v1911
    %v3502 = vunpack.c.h.b16 %v1911
    %v3503 = vunpack.c.l.b16 %v1912
    %v3504 = vunpack.c.h.b16 %v1912
    %v3505 = vunpack.c.l.b16 %v1913
    %v3506 = vunpack.c.h.b16 %v1913
    %v3507 = vunpack.c.l.b16 %v1914
    %v3508 = vunpack.c.h.b16 %v1914
    %v3509 = vunpack.c.l.b16 %v1915
    %v3510 = vunpack.c.h.b16 %v1915
    %v3511 = vunpack.c.l.b16 %v1916
    %v3512 = vunpack.c.h.b16 %v1916
    %v3513 = vunpack.c.l.b16 %v1917
    %v3514 = vunpack.c.h.b16 %v1917
    %v3515 = vunpack.c.l.b16 %v1918
    %v3516 = vunpack.c.h.b16 %v1918
    %v3517 = vunpack.c.l.b16 %v1919
    %v3518 = vunpack.c.h.b16 %v1919
    %v3519 = vunpack.c.l.b16 %v1920
    %v3520 = vunpack.c.h.b16 %v1920
    %v3521 = vunpack.c.l.b16 %v1921
    %v3522 = vunpack.c.h.b16 %v1921
    %v3523 = vunpack.c.l.b16 %v1922
    %v3524 = vunpack.c.h.b16 %v1922
    %v3525 = vunpack.c.l.b16 %v1923
    %v3526 = vunpack.c.h.b16 %v1923
    %v3527 = vunpack.c.l.b16 %v1924
    %v3528 = vunpack.c.h.b16 %v1924
    %v3529 = vunpack.c.l.b16 %v1925
    %v3530 = vunpack.c.h.b16 %v1925
    %v3531 = vunpack.c.l.b16 %v1926
    %v3532 = vunpack.c.h.b16 %v1926
    %v3533 = vunpack.c.l.b16 %v1927
    %v3534 = vunpack.c.h.b16 %v1927
    %v3535 = vunpack.c.l.b16 %v1928
    %v3536 = vunpack.c.h.b16 %v1928
    %v3537 = vunpack.c.l.b16 %v1929
    %v3538 = vunpack.c.h.b16 %v1929
    %v3539 = vunpack.c.l.b16 %v1930
    %v3540 = vunpack.c.h.b16 %v1930
    %v3541 = vunpack.c.l.b16 %v1931
    %v3542 = vunpack.c.h.b16 %v1931
    %v3543 = vunpack.c.l.b16 %v1932
    %v3544 = vunpack.c.h.b16 %v1932
    %v3545 = vunpack.c.l.b16 %v1933
    %v3546 = vunpack.c.h.b16 %v1933
    %v3547 = vunpack.c.l.b16 %v1934
    %v3548 = vunpack.c.h.b16 %v1934
    %v3549 = vunpack.c.l.b16 %v1935
    %v3550 = vunpack.c.h.b16 %v1935
    %v3551 = vunpack.c.l.b16 %v1936
    %v3552 = vunpack.c.h.b16 %v1936
    %v3553 = vunpack.c.l.b16 %v1937
    %v3554 = vunpack.c.h.b16 %v1937
    %v3555 = vunpack.c.l.b16 %v1938
    %v3556 = vunpack.c.h.b16 %v1938
    %v3557 = vunpack.c.l.b16 %v1939
    %v3558 = vunpack.c.h.b16 %v1939
    %v3559 = vunpack.c.l.b16 %v1940
    %v3560 = vunpack.c.h.b16 %v1940
    %v3561 = vpack.c.b16 %v2553, %v2537
    %v3562 = vpack.c.b16 %v2554, %v2538
    %v3563 = vpack.c.b16 %v2555, %v2539
    %v3564 = vpack.c.b16 %v2556, %v2540
    %v3565 = vpack.c.b16 %v2557, %v2541
    %v3566 = vpack.c.b16 %v2558, %v2542
    %v3567 = vpack.c.b16 %v2559, %v2543
    %v3568 = vpack.c.b16 %v2560, %v2544
    %v3569 = vpack.c.b16 %v2561, %v2545
    %v3570 = vpack.c.b16 %v2562, %v2546
    %v3571 = vpack.c.b16 %v2563, %v2547
    %v3572 = vpack.c.b16 %v2564, %v2548
    %v3573 = vpack.c.b16 %v2565, %v2549
    %v3574 = vpack.c.b16 %v2566, %v2550
    %v3575 = vpack.c.b16 %v2567, %v2551
    %v3576 = vpack.c.b16 %v2568, %v2552
    %v3577 = vpack.c.b16 %v2585, %v2569
    %v3578 = vpack.c.b16 %v2586, %v2570
    %v3579 = vpack.c.b16 %v2587, %v2571
    %v3580 = vpack.c.b16 %v2588, %v2572
    %v3581 = vpack.c.b16 %v2589, %v2573
    %v3582 = vpack.c.b16 %v2590, %v2574
    %v3583 = vpack.c.b16 %v2591, %v2575
    %v3584 = vpack.c.b16 %v2592, %v2576
    %v3585 = vpack.c.b16 %v2593, %v2577
    %v3586 = vpack.c.b16 %v2594, %v2578
    %v3587 = vpack.c.b16 %v2595, %v2579
    %v3588 = vpack.c.b16 %v2596, %v2580
    %v3589 = vpack.c.b16 %v2597, %v2581
    %v3590 = vpack.c.b16 %v2598, %v2582
    %v3591 = vpack.c.b16 %v2599, %v2583
    %v3592 = vpack.c.b16 %v2600, %v2584
    %v3593 = vpack.c.b16 %v2617, %v2601
    %v3594 = vpack.c.b16 %v2618, %v2602
    %v3595 = vpack.c.b16 %v2619, %v2603
    %v3596 = vpack.c.b16 %v2620, %v2604
    %v3597 = vpack.c.b16 %v2621, %v2605
    %v3598 = vpack.c.b16 %v2622, %v2606
    %v3599 = vpack.c.b16 %v2623, %v2607
    %v3600 = vpack.c.b16 %v2624, %v2608
    %v3601 = vpack.c.b16 %v2625, %v2609
    %v3602 = vpack.c.b16 %v2626, %v2610
    %v3603 = vpack.c.b16 %v2627, %v2611
    %v3604 = vpack.c.b16 %v2628, %v2612
    %v3605 = vpack.c.b16 %v2629, %v2613
    %v3606 = vpack.c.b16 %v2630, %v2614
    %v3607 = vpack.c.b16 %v2631, %v2615
    %v3608 = vpack.c.b16 %v2632, %v2616
    %v3609 = vpack.c.b16 %v2649, %v2633
    %v3610 = vpack.c.b16 %v2650, %v2634
    %v3611 = vpack.c.b16 %v2651, %v2635
    %v3612 = vpack.c.b16 %v2652, %v2636
    %v3613 = vpack.c.b16 %v2653, %v2637
    %v3614 = vpack.c.b16 %v2654, %v2638
    %v3615 = vpack.c.b16 %v2655, %v2639
    %v3616 = vpack.c.b16 %v2656, %v2640
    %v3617 = vpack.c.b16 %v2657, %v2641
    %v3618 = vpack.c.b16 %v2658, %v2642
    %v3619 = vpack.c.b16 %v2659, %v2643
    %v3620 = vpack.c.b16 %v2660, %v2644
    %v3621 = vpack.c.b16 %v2661, %v2645
    %v3622 = vpack.c.b16 %v2662, %v2646
    %v3623 = vpack.c.b16 %v2663, %v2647
    %v3624 = vpack.c.b16 %v2664, %v2648
    %v3625 = vpack.c.b16 %v2681, %v2665
    %v3626 = vpack.c.b16 %v2682, %v2666
    %v3627 = vpack.c.b16 %v2683, %v2667
    %v3628 = vpack.c.b16 %v2684, %v2668
    %v3629 = vpack.c.b16 %v2685, %v2669
    %v3630 = vpack.c.b16 %v2686, %v2670
    %v3631 = vpack.c.b16 %v2687, %v2671
    %v3632 = vpack.c.b16 %v2688, %v2672
    %v3633 = vpack.c.b16 %v2689, %v2673
    %v3634 = vpack.c.b16 %v2690, %v2674
    %v3635 = vpack.c.b16 %v2691, %v2675
    %v3636 = vpack.c.b16 %v2692, %v2676
    %v3637 = vpack.c.b16 %v2693, %v2677
    %v3638 = vpack.c.b16 %v2694, %v2678
    %v3639 = vpack.c.b16 %v2695, %v2679
    %v3640 = vpack.c.b16 %v2696, %v2680
    %v3641 = vpack.c.b16 %v2713, %v2697
    %v3642 = vpack.c.b16 %v2714, %v2698
    %v3643 = vpack.c.b16 %v2715, %v2699
    %v3644 = vpack.c.b16 %v2716, %v2700
    %v3645 = vpack.c.b16 %v2717, %v2701
    %v3646 = vpack.c.b16 %v2718, %v2702
    %v3647 = vpack.c.b16 %v2719, %v2703
    %v3648 = vpack.c.b16 %v2720, %v2704
    %v3649 = vpack.c.b16 %v2721, %v2705
    %v3650 = vpack.c.b16 %v2722, %v2706
    %v3651 = vpack.c.b16 %v2723, %v2707
    %v3652 = vpack.c.b16 %v2724, %v2708
    %v3653 = vpack.c.b16 %v2725, %v2709
    %v3654 = vpack.c.b16 %v2726, %v2710
    %v3655 = vpack.c.b16 %v2727, %v2711
    %v3656 = vpack.c.b16 %v2728, %v2712
    %v3657 = vpack.c.b16 %v2745, %v2729
    %v3658 = vpack.c.b16 %v2746, %v2730
    %v3659 = vpack.c.b16 %v2747, %v2731
    %v3660 = vpack.c.b16 %v2748, %v2732
    %v3661 = vpack.c.b16 %v2749, %v2733
    %v3662 = vpack.c.b16 %v2750, %v2734
    %v3663 = vpack.c.b16 %v2751, %v2735
    %v3664 = vpack.c.b16 %v2752, %v2736
    %v3665 = vpack.c.b16 %v2753, %v2737
    %v3666 = vpack.c.b16 %v2754, %v2738
    %v3667 = vpack.c.b16 %v2755, %v2739
    %v3668 = vpack.c.b16 %v2756, %v2740
    %v3669 = vpack.c.b16 %v2757, %v2741
    %v3670 = vpack.c.b16 %v2758, %v2742
    %v3671 = vpack.c.b16 %v2759, %v2743
    %v3672 = vpack.c.b16 %v2760, %v2744
    %v3673 = vpack.c.b16 %v2777, %v2761
    %v3674 = vpack.c.b16 %v2778, %v2762
    %v3675 = vpack.c.b16 %v2779, %v2763
    %v3676 = vpack.c.b16 %v2780, %v2764
    %v3677 = vpack.c.b16 %v2781, %v2765
    %v3678 = vpack.c.b16 %v2782, %v2766
    %v3679 = vpack.c.b16 %v2783, %v2767
    %v3680 = vpack.c.b16 %v2784, %v2768
    %v3681 = vpack.c.b16 %v2785, %v2769
    %v3682 = vpack.c.b16 %v2786, %v2770
    %v3683 = vpack.c.b16 %v2787, %v2771
    %v3684 = vpack.c.b16 %v2788, %v2772
    %v3685 = vpack.c.b16 %v2789, %v2773
    %v3686 = vpack.c.b16 %v2790, %v2774
    %v3687 = vpack.c.b16 %v2791, %v2775
    %v3688 = vpack.c.b16 %v2792, %v2776
    %v3689 = vpack.c.b16 %v2809, %v2793
    %v3690 = vpack.c.b16 %v2810, %v2794
    %v3691 = vpack.c.b16 %v2811, %v2795
    %v3692 = vpack.c.b16 %v2812, %v2796
    %v3693 = vpack.c.b16 %v2813, %v2797
    %v3694 = vpack.c.b16 %v2814, %v2798
    %v3695 = vpack.c.b16 %v2815, %v2799
    %v3696 = vpack.c.b16 %v2816, %v2800
    %v3697 = vpack.c.b16 %v2817, %v2801
    %v3698 = vpack.c.b16 %v2818, %v2802
    %v3699 = vpack.c.b16 %v2819, %v2803
    %v3700 = vpack.c.b16 %v2820, %v2804
    %v3701 = vpack.c.b16 %v2821, %v2805
    %v3702 = vpack.c.b16 %v2822, %v2806
    %v3703 = vpack.c.b16 %v2823, %v2807
    %v3704 = vpack.c.b16 %v2824, %v2808
    %v3705 = vpack.c.b16 %v2841, %v2825
    %v3706 = vpack.c.b16 %v2842, %v2826
    %v3707 = vpack.c.b16 %v2843, %v2827
    %v3708 = vpack.c.b16 %v2844, %v2828
    %v3709 = vpack.c.b16 %v2845, %v2829
    %v3710 = vpack.c.b16 %v2846, %v2830
    %v3711 = vpack.c.b16 %v2847, %v2831
    %v3712 = vpack.c.b16 %v2848, %v2832
    %v3713 = vpack.c.b16 %v2849, %v2833
    %v3714 = vpack.c.b16 %v2850, %v2834
    %v3715 = vpack.c.b16 %v2851, %v2835
    %v3716 = vpack.c.b16 %v2852, %v2836
    %v3717 = vpack.c.b16 %v2853, %v2837
    %v3718 = vpack.c.b16 %v2854, %v2838
    %v3719 = vpack.c.b16 %v2855, %v2839
    %v3720 = vpack.c.b16 %v2856, %v2840
    %v3721 = vpack.c.b16 %v2873, %v2857
    %v3722 = vpack.c.b16 %v2874, %v2858
    %v3723 = vpack.c.b16 %v2875, %v2859
    %v3724 = vpack.c.b16 %v2876, %v2860
    %v3725 = vpack.c.b16 %v2877, %v2861
    %v3726 = vpack.c.b16 %v2878, %v2862
    %v3727 = vpack.c.b16 %v2879, %v2863
    %v3728 = vpack.c.b16 %v2880, %v2864
    %v3729 = vpack.c.b16 %v2881, %v2865
    %v3730 = vpack.c.b16 %v2882, %v2866
    %v3731 = vpack.c.b16 %v2883, %v2867
    %v3732 = vpack.c.b16 %v2884, %v2868
    %v3733 = vpack.c.b16 %v2885, %v2869
    %v3734 = vpack.c.b16 %v2886, %v2870
    %v3735 = vpack.c.b16 %v2887, %v2871
    %v3736 = vpack.c.b16 %v2888, %v2872
    %v3737 = vpack.c.b16 %v2905, %v2889
    %v3738 = vpack.c.b16 %v2906, %v2890
    %v3739 = vpack.c.b16 %v2907, %v2891
    %v3740 = vpack.c.b16 %v2908, %v2892
    %v3741 = vpack.c.b16 %v2909, %v2893
    %v3742 = vpack.c.b16 %v2910, %v2894
    %v3743 = vpack.c.b16 %v2911, %v2895
    %v3744 = vpack.c.b16 %v2912, %v2896
    %v3745 = vpack.c.b16 %v2913, %v2897
    %v3746 = vpack.c.b16 %v2914, %v2898
    %v3747 = vpack.c.b16 %v2915, %v2899
    %v3748 = vpack.c.b16 %v2916, %v2900
    %v3749 = vpack.c.b16 %v2917, %v2901
    %v3750 = vpack.c.b16 %v2918, %v2902
    %v3751 = vpack.c.b16 %v2919, %v2903
    %v3752 = vpack.c.b16 %v2920, %v2904
    %v3753 = vpack.c.b16 %v2937, %v2921
    %v3754 = vpack.c.b16 %v2938, %v2922
    %v3755 = vpack.c.b16 %v2939, %v2923
    %v3756 = vpack.c.b16 %v2940, %v2924
    %v3757 = vpack.c.b16 %v2941, %v2925
    %v3758 = vpack.c.b16 %v2942, %v2926
    %v3759 = vpack.c.b16 %v2943, %v2927
    %v3760 = vpack.c.b16 %v2944, %v2928
    %v3761 = vpack.c.b16 %v2945, %v2929
    %v3762 = vpack.c.b16 %v2946, %v2930
    %v3763 = vpack.c.b16 %v2947, %v2931
    %v3764 = vpack.c.b16 %v2948, %v2932
    %v3765 = vpack.c.b16 %v2949, %v2933
    %v3766 = vpack.c.b16 %v2950, %v2934
    %v3767 = vpack.c.b16 %v2951, %v2935
    %v3768 = vpack.c.b16 %v2952, %v2936
    %v3769 = vpack.c.b16 %v2969, %v2953
    %v3770 = vpack.c.b16 %v2970, %v2954
    %v3771 = vpack.c.b16 %v2971, %v2955
    %v3772 = vpack.c.b16 %v2972, %v2956
    %v3773 = vpack.c.b16 %v2973, %v2957
    %v3774 = vpack.c.b16 %v2974, %v2958
    %v3775 = vpack.c.b16 %v2975, %v2959
    %v3776 = vpack.c.b16 %v2976, %v2960
    %v3777 = vpack.c.b16 %v2977, %v2961
    %v3778 = vpack.c.b16 %v2978, %v2962
    %v3779 = vpack.c.b16 %v2979, %v2963
    %v3780 = vpack.c.b16 %v2980, %v2964
    %v3781 = vpack.c.b16 %v2981, %v2965
    %v3782 = vpack.c.b16 %v2982, %v2966
    %v3783 = vpack.c.b16 %v2983, %v2967
    %v3784 = vpack.c.b16 %v2984, %v2968
    %v3785 = vpack.c.b16 %v3001, %v2985
    %v3786 = vpack.c.b16 %v3002, %v2986
    %v3787 = vpack.c.b16 %v3003, %v2987
    %v3788 = vpack.c.b16 %v3004, %v2988
    %v3789 = vpack.c.b16 %v3005, %v2989
    %v3790 = vpack.c.b16 %v3006, %v2990
    %v3791 = vpack.c.b16 %v3007, %v2991
    %v3792 = vpack.c.b16 %v3008, %v2992
    %v3793 = vpack.c.b16 %v3009, %v2993
    %v3794 = vpack.c.b16 %v3010, %v2994
    %v3795 = vpack.c.b16 %v3011, %v2995
    %v3796 = vpack.c.b16 %v3012, %v2996
    %v3797 = vpack.c.b16 %v3013, %v2997
    %v3798 = vpack.c.b16 %v3014, %v2998
    %v3799 = vpack.c.b16 %v3015, %v2999
    %v3800 = vpack.c.b16 %v3016, %v3000
    %v3801 = vpack.c.b16 %v3033, %v3017
    %v3802 = vpack.c.b16 %v3034, %v3018
    %v3803 = vpack.c.b16 %v3035, %v3019
    %v3804 = vpack.c.b16 %v3036, %v3020
    %v3805 = vpack.c.b16 %v3037, %v3021
    %v3806 = vpack.c.b16 %v3038, %v3022
    %v3807 = vpack.c.b16 %v3039, %v3023
    %v3808 = vpack.c.b16 %v3040, %v3024
    %v3809 = vpack.c.b16 %v3041, %v3025
    %v3810 = vpack.c.b16 %v3042, %v3026
    %v3811 = vpack.c.b16 %v3043, %v3027
    %v3812 = vpack.c.b16 %v3044, %v3028
    %v3813 = vpack.c.b16 %v3045, %v3029
    %v3814 = vpack.c.b16 %v3046, %v3030
    %v3815 = vpack.c.b16 %v3047, %v3031
    %v3816 = vpack.c.b16 %v3048, %v3032
    %v3817 = vpack.c.b16 %v3065, %v3049
    %v3818 = vpack.c.b16 %v3066, %v3050
    %v3819 = vpack.c.b16 %v3067, %v3051
    %v3820 = vpack.c.b16 %v3068, %v3052
    %v3821 = vpack.c.b16 %v3069, %v3053
    %v3822 = vpack.c.b16 %v3070, %v3054
    %v3823 = vpack.c.b16 %v3071, %v3055
    %v3824 = vpack.c.b16 %v3072, %v3056
    %v3825 = vpack.c.b16 %v3073, %v3057
    %v3826 = vpack.c.b16 %v3074, %v3058
    %v3827 = vpack.c.b16 %v3075, %v3059
    %v3828 = vpack.c.b16 %v3076, %v3060
    %v3829 = vpack.c.b16 %v3077, %v3061
    %v3830 = vpack.c.b16 %v3078, %v3062
    %v3831 = vpack.c.b16 %v3079, %v3063
    %v3832 = vpack.c.b16 %v3080, %v3064
    %v3833 = vpack.c.b16 %v3097, %v3081
    %v3834 = vpack.c.b16 %v3098, %v3082
    %v3835 = vpack.c.b16 %v3099, %v3083
    %v3836 = vpack.c.b16 %v3100, %v3084
    %v3837 = vpack.c.b16 %v3101, %v3085
    %v3838 = vpack.c.b16 %v3102, %v3086
    %v3839 = vpack.c.b16 %v3103, %v3087
    %v3840 = vpack.c.b16 %v3104, %v3088
    %v3841 = vpack.c.b16 %v3105, %v3089
    %v3842 = vpack.c.b16 %v3106, %v3090
    %v3843 = vpack.c.b16 %v3107, %v3091
    %v3844 = vpack.c.b16 %v3108, %v3092
    %v3845 = vpack.c.b16 %v3109, %v3093
    %v3846 = vpack.c.b16 %v3110, %v3094
    %v3847 = vpack.c.b16 %v3111, %v3095
    %v3848 = vpack.c.b16 %v3112, %v3096
    %v3849 = vpack.c.b16 %v3129, %v3113
    %v3850 = vpack.c.b16 %v3130, %v3114
    %v3851 = vpack.c.b16 %v3131, %v3115
    %v3852 = vpack.c.b16 %v3132, %v3116
    %v3853 = vpack.c.b16 %v3133, %v3117
    %v3854 = vpack.c.b16 %v3134, %v3118
    %v3855 = vpack.c.b16 %v3135, %v3119
    %v3856 = vpack.c.b16 %v3136, %v3120
    %v3857 = vpack.c.b16 %v3137, %v3121
    %v3858 = vpack.c.b16 %v3138, %v3122
    %v3859 = vpack.c.b16 %v3139, %v3123
    %v3860 = vpack.c.b16 %v3140, %v3124
    %v3861 = vpack.c.b16 %v3141, %v3125
    %v3862 = vpack.c.b16 %v3142, %v3126
    %v3863 = vpack.c.b16 %v3143, %v3127
    %v3864 = vpack.c.b16 %v3144, %v3128
    %v3865 = vpack.c.b16 %v3161, %v3145
    %v3866 = vpack.c.b16 %v3162, %v3146
    %v3867 = vpack.c.b16 %v3163, %v3147
    %v3868 = vpack.c.b16 %v3164, %v3148
    %v3869 = vpack.c.b16 %v3165, %v3149
    %v3870 = vpack.c.b16 %v3166, %v3150
    %v3871 = vpack.c.b16 %v3167, %v3151
    %v3872 = vpack.c.b16 %v3168, %v3152
    %v3873 = vpack.c.b16 %v3169, %v3153
    %v3874 = vpack.c.b16 %v3170, %v3154
    %v3875 = vpack.c.b16 %v3171, %v3155
    %v3876 = vpack.c.b16 %v3172, %v3156
    %v3877 = vpack.c.b16 %v3173, %v3157
    %v3878 = vpack.c.b16 %v3174, %v3158
    %v3879 = vpack.c.b16 %v3175, %v3159
    %v3880 = vpack.c.b16 %v3176, %v3160
    %v3881 = vpack.c.b16 %v3193, %v3177
    %v3882 = vpack.c.b16 %v3194, %v3178
    %v3883 = vpack.c.b16 %v3195, %v3179
    %v3884 = vpack.c.b16 %v3196, %v3180
    %v3885 = vpack.c.b16 %v3197, %v3181
    %v3886 = vpack.c.b16 %v3198, %v3182
    %v3887 = vpack.c.b16 %v3199, %v3183
    %v3888 = vpack.c.b16 %v3200, %v3184
    %v3889 = vpack.c.b16 %v3201, %v3185
    %v3890 = vpack.c.b16 %v3202, %v3186
    %v3891 = vpack.c.b16 %v3203, %v3187
    %v3892 = vpack.c.b16 %v3204, %v3188
    %v3893 = vpack.c.b16 %v3205, %v3189
    %v3894 = vpack.c.b16 %v3206, %v3190
    %v3895 = vpack.c.b16 %v3207, %v3191
    %v3896 = vpack.c.b16 %v3208, %v3192
    %v3897 = vpack.c.b16 %v3225, %v3209
    %v3898 = vpack.c.b16 %v3226, %v3210
    %v3899 = vpack.c.b16 %v3227, %v3211
    %v3900 = vpack.c.b16 %v3228, %v3212
    %v3901 = vpack.c.b16 %v3229, %v3213
    %v3902 = vpack.c.b16 %v3230, %v3214
    %v3903 = vpack.c.b16 %v3231, %v3215
    %v3904 = vpack.c.b16 %v3232, %v3216
    %v3905 = vpack.c.b16 %v3233, %v3217
    %v3906 = vpack.c.b16 %v3234, %v3218
    %v3907 = vpack.c.b16 %v3235, %v3219
    %v3908 = vpack.c.b16 %v3236, %v3220
    %v3909 = vpack.c.b16 %v3237, %v3221
    %v3910 = vpack.c.b16 %v3238, %v3222
    %v3911 = vpack.c.b16 %v3239, %v3223
    %v3912 = vpack.c.b16 %v3240, %v3224
    %v3913 = vpack.c.b16 %v3257, %v3241
    %v3914 = vpack.c.b16 %v3258, %v3242
    %v3915 = vpack.c.b16 %v3259, %v3243
    %v3916 = vpack.c.b16 %v3260, %v3244
    %v3917 = vpack.c.b16 %v3261, %v3245
    %v3918 = vpack.c.b16 %v3262, %v3246
    %v3919 = vpack.c.b16 %v3263, %v3247
    %v3920 = vpack.c.b16 %v3264, %v3248
    %v3921 = vpack.c.b16 %v3265, %v3249
    %v3922 = vpack.c.b16 %v3266, %v3250
    %v3923 = vpack.c.b16 %v3267, %v3251
    %v3924 = vpack.c.b16 %v3268, %v3252
    %v3925 = vpack.c.b16 %v3269, %v3253
    %v3926 = vpack.c.b16 %v3270, %v3254
    %v3927 = vpack.c.b16 %v3271, %v3255
    %v3928 = vpack.c.b16 %v3272, %v3256
    %v3929 = vpack.c.b16 %v3289, %v3273
    %v3930 = vpack.c.b16 %v3290, %v3274
    %v3931 = vpack.c.b16 %v3291, %v3275
    %v3932 = vpack.c.b16 %v3292, %v3276
    %v3933 = vpack.c.b16 %v3293, %v3277
    %v3934 = vpack.c.b16 %v3294, %v3278
    %v3935 = vpack.c.b16 %v3295, %v3279
    %v3936 = vpack.c.b16 %v3296, %v3280
    %v3937 = vpack.c.b16 %v3297, %v3281
    %v3938 = vpack.c.b16 %v3298, %v3282
    %v3939 = vpack.c.b16 %v3299, %v3283
    %v3940 = vpack.c.b16 %v3300, %v3284
    %v3941 = vpack.c.b16 %v3301, %v3285
    %v3942 = vpack.c.b16 %v3302, %v3286
    %v3943 = vpack.c.b16 %v3303, %v3287
    %v3944 = vpack.c.b16 %v3304, %v3288
    %v3945 = vpack.c.b16 %v3321, %v3305
    %v3946 = vpack.c.b16 %v3322, %v3306
    %v3947 = vpack.c.b16 %v3323, %v3307
    %v3948 = vpack.c.b16 %v3324, %v3308
    %v3949 = vpack.c.b16 %v3325, %v3309
    %v3950 = vpack.c.b16 %v3326, %v3310
    %v3951 = vpack.c.b16 %v3327, %v3311
    %v3952 = vpack.c.b16 %v3328, %v3312
    %v3953 = vpack.c.b16 %v3329, %v3313
    %v3954 = vpack.c.b16 %v3330, %v3314
    %v3955 = vpack.c.b16 %v3331, %v3315
    %v3956 = vpack.c.b16 %v3332, %v3316
    %v3957 = vpack.c.b16 %v3333, %v3317
    %v3958 = vpack.c.b16 %v3334, %v3318
    %v3959 = vpack.c.b16 %v3335, %v3319
    %v3960 = vpack.c.b16 %v3336, %v3320
    %v3961 = vpack.c.b16 %v3353, %v3337
    %v3962 = vpack.c.b16 %v3354, %v3338
    %v3963 = vpack.c.b16 %v3355, %v3339
    %v3964 = vpack.c.b16 %v3356, %v3340
    %v3965 = vpack.c.b16 %v3357, %v3341
    %v3966 = vpack.c.b16 %v3358, %v3342
    %v3967 = vpack.c.b16 %v3359, %v3343
    %v3968 = vpack.c.b16 %v3360, %v3344
    %v3969 = vpack.c.b16 %v3361, %v3345
    %v3970 = vpack.c.b16 %v3362, %v3346
    %v3971 = vpack.c.b16 %v3363, %v3347
    %v3972 = vpack.c.b16 %v3364, %v3348
    %v3973 = vpack.c.b16 %v3365, %v3349
    %v3974 = vpack.c.b16 %v3366, %v3350
    %v3975 = vpack.c.b16 %v3367, %v3351
    %v3976 = vpack.c.b16 %v3368, %v3352
    %v3977 = vpack.c.b16 %v3385, %v3369
    %v3978 = vpack.c.b16 %v3386, %v3370
    %v3979 = vpack.c.b16 %v3387, %v3371
    %v3980 = vpack.c.b16 %v3388, %v3372
    %v3981 = vpack.c.b16 %v3389, %v3373
    %v3982 = vpack.c.b16 %v3390, %v3374
    %v3983 = vpack.c.b16 %v3391, %v3375
    %v3984 = vpack.c.b16 %v3392, %v3376
    %v3985 = vpack.c.b16 %v3393, %v3377
    %v3986 = vpack.c.b16 %v3394, %v3378
    %v3987 = vpack.c.b16 %v3395, %v3379
    %v3988 = vpack.c.b16 %v3396, %v3380
    %v3989 = vpack.c.b16 %v3397, %v3381
    %v3990 = vpack.c.b16 %v3398, %v3382
    %v3991 = vpack.c.b16 %v3399, %v3383
    %v3992 = vpack.c.b16 %v3400, %v3384
    %v3993 = vpack.c.b16 %v3417, %v3401
    %v3994 = vpack.c.b16 %v3418, %v3402
    %v3995 = vpack.c.b16 %v3419, %v3403
    %v3996 = vpack.c.b16 %v3420, %v3404
    %v3997 = vpack.c.b16 %v3421, %v3405
    %v3998 = vpack.c.b16 %v3422, %v3406
    %v3999 = vpack.c.b16 %v3423, %v3407
    %v4000 = vpack.c.b16 %v3424, %v3408
    %v4001 = vpack.c.b16 %v3425, %v3409
    %v4002 = vpack.c.b16 %v3426, %v3410
    %v4003 = vpack.c.b16 %v3427, %v3411
    %v4004 = vpack.c.b16 %v3428, %v3412
    %v4005 = vpack.c.b16 %v3429, %v3413
    %v4006 = vpack.c.b16 %v3430, %v3414
    %v4007 = vpack.c.b16 %v3431, %v3415
    %v4008 = vpack.c.b16 %v3432, %v3416
    %v4009 = vpack.c.b16 %v3449, %v3433
    %v4010 = vpack.c.b16 %v3450, %v3434
    %v4011 = vpack.c.b16 %v3451, %v3435
    %v4012 = vpack.c.b16 %v3452, %v3436
    %v4013 = vpack.c.b16 %v3453, %v3437
    %v4014 = vpack.c.b16 %v3454, %v3438
    %v4015 = vpack.c.b16 %v3455, %v3439
    %v4016 = vpack.c.b16 %v3456, %v3440
    %v4017 = vpack.c.b16 %v3457, %v3441
    %v4018 = vpack.c.b16 %v3458, %v3442
    %v4019 = vpack.c.b16 %v3459, %v3443
    %v4020 = vpack.c.b16 %v3460, %v3444
    %v4021 = vpack.c.b16 %v3461, %v3445
    %v4022 = vpack.c.b16 %v3462, %v3446
    %v4023 = vpack.c.b16 %v3463, %v3447
    %v4024 = vpack.c.b16 %v3464, %v3448
    %v4025 = vpack.c.b16 %v3481, %v3465
    %v4026 = vpack.c.b16 %v3482, %v3466
    %v4027 = vpack.c.b16 %v3483, %v3467
    %v4028 = vpack.c.b16 %v3484, %v3468
    %v4029 = vpack.c.b16 %v3485, %v3469
    %v4030 = vpack.c.b16 %v3486, %v3470
    %v4031 = vpack.c.b16 %v3487, %v3471
    %v4032 = vpack.c.b16 %v3488, %v3472
    %v4033 = vpack.c.b16 %v3489, %v3473
    %v4034 = vpack.c.b16 %v3490, %v3474
    %v4035 = vpack.c.b16 %v3491, %v3475
    %v4036 = vpack.c.b16 %v3492, %v3476
    %v4037 = vpack.c.b16 %v3493, %v3477
    %v4038 = vpack.c.b16 %v3494, %v3478
    %v4039 = vpack.c.b16 %v3495, %v3479
    %v4040 = vpack.c.b16 %v3496, %v3480
    %v4041 = vpack.c.b16 %v3513, %v3497
    %v4042 = vpack.c.b16 %v3514, %v3498
    %v4043 = vpack.c.b16 %v3515, %v3499
    %v4044 = vpack.c.b16 %v3516, %v3500
    %v4045 = vpack.c.b16 %v3517, %v3501
    %v4046 = vpack.c.b16 %v3518, %v3502
    %v4047 = vpack.c.b16 %v3519, %v3503
    %v4048 = vpack.c.b16 %v3520, %v3504
    %v4049 = vpack.c.b16 %v3521, %v3505
    %v4050 = vpack.c.b16 %v3522, %v3506
    %v4051 = vpack.c.b16 %v3523, %v3507
    %v4052 = vpack.c.b16 %v3524, %v3508
    %v4053 = vpack.c.b16 %v3525, %v3509
    %v4054 = vpack.c.b16 %v3526, %v3510
    %v4055 = vpack.c.b16 %v3527, %v3511
    %v4056 = vpack.c.b16 %v3528, %v3512
    %v4057 = vpack.c.b16 %v3545, %v3529
    %v4058 = vpack.c.b16 %v3546, %v3530
    %v4059 = vpack.c.b16 %v3547, %v3531
    %v4060 = vpack.c.b16 %v3548, %v3532
    %v4061 = vpack.c.b16 %v3549, %v3533
    %v4062 = vpack.c.b16 %v3550, %v3534
    %v4063 = vpack.c.b16 %v3551, %v3535
    %v4064 = vpack.c.b16 %v3552, %v3536
    %v4065 = vpack.c.b16 %v3553, %v3537
    %v4066 = vpack.c.b16 %v3554, %v3538
    %v4067 = vpack.c.b16 %v3555, %v3539
    %v4068 = vpack.c.b16 %v3556, %v3540
    %v4069 = vpack.c.b16 %v3557, %v3541
    %v4070 = vpack.c.b16 %v3558, %v3542
    %v4071 = vpack.c.b16 %v3559, %v3543
    %v4072 = vpack.c.b16 %v3560, %v3544
    %4585 = vmatprep.subr.bf16.mxu0 %v3674
    %4586 = vmatpush1.bf16.msra.mxu0 %v3673
    %4587 = vmatprep.subr.bf16.mxu0 %v3658
    %4588 = vmatpush1.bf16.msra.mxu0 %v3657
    %4589 = vmatprep.subr.bf16.mxu0 %v3642
    %4590 = vmatpush1.bf16.msra.mxu0 %v3641
    %4591 = vmatprep.subr.bf16.mxu0 %v3626
    %4592 = vmatpush1.bf16.msra.mxu0 %v3625
    %4593 = vmatprep.subr.bf16.mxu0 %v3610
    %4594 = vmatpush1.bf16.msra.mxu0 %v3609
    %4595 = vmatprep.subr.bf16.mxu0 %v3594
    %4596 = vmatpush1.bf16.msra.mxu0 %v3593
    %4597 = vmatprep.subr.bf16.mxu0 %v3578
    %4598 = vmatpush1.bf16.msra.mxu0 %v3577
    %4599 = vmatprep.subr.bf16.mxu0 %v3562
    %4600 = vmatpush1.bf16.msra.mxu0 %v3561
    %4601 = vmatprep.subr.bf16.mxu0 %v3802
    %4602 = vmatpush2.bf16.msra.mxu0 %v3801
    %4603 = vmatprep.subr.bf16.mxu0 %v3786
    %4604 = vmatpush2.bf16.msra.mxu0 %v3785
    %4605 = vmatprep.subr.bf16.mxu0 %v3770
    %4606 = vmatpush2.bf16.msra.mxu0 %v3769
    %4607 = vmatprep.subr.bf16.mxu0 %v3754
    %4608 = vmatpush2.bf16.msra.mxu0 %v3753
    %4609 = vmatprep.subr.bf16.mxu0 %v3738
    %4610 = vmatpush2.bf16.msra.mxu0 %v3737
    %4611 = vmatprep.subr.bf16.mxu0 %v3722
    %4612 = vmatpush2.bf16.msra.mxu0 %v3721
    %4613 = vmatprep.subr.bf16.mxu0 %v3706
    %4614 = vmatpush2.bf16.msra.mxu0 %v3705
    %4615 = vmatprep.subr.bf16.mxu0 %v3690
    %4616 = vmatpush2.bf16.msra.mxu0 %v3689
    %4617 = vmatprep.mubr.bf16.mxu0 %v1426
    %4618 = vmatmul.mubr.bf16.gmra.mxu0 %v1425
    %v4619 = vpop.f32.mrf.mxu0
    %v4620 = vadd.f32 %v1948, %v4619
    %v4621 = vpop.f32.mrf.mxu0
    %v4622 = vadd.f32 %v1952, %v4621
    %v4623 = vpop.f32.mrf.mxu0
    %v4624 = vadd.f32 %v1948, %v4623
    %v4625 = vpop.f32.mrf.mxu0
    %v4626 = vadd.f32 %v1952, %v4625
    %4627 = vdwg.mxu0
    %4628 = vmatprep.subr.bf16.mxu0 %v3930
    %4629 = vmatpush1.bf16.msra.mxu0 %v3929
    %4630 = vmatprep.subr.bf16.mxu0 %v3914
    %4631 = vmatpush1.bf16.msra.mxu0 %v3913
    %4632 = vmatprep.subr.bf16.mxu0 %v3898
    %4633 = vmatpush1.bf16.msra.mxu0 %v3897
    %4634 = vmatprep.subr.bf16.mxu0 %v3882
    %4635 = vmatpush1.bf16.msra.mxu0 %v3881
    %4636 = vmatprep.subr.bf16.mxu0 %v3866
    %4637 = vmatpush1.bf16.msra.mxu0 %v3865
    %4638 = vmatprep.subr.bf16.mxu0 %v3850
    %4639 = vmatpush1.bf16.msra.mxu0 %v3849
    %4640 = vmatprep.subr.bf16.mxu0 %v3834
    %4641 = vmatpush1.bf16.msra.mxu0 %v3833
    %4642 = vmatprep.subr.bf16.mxu0 %v3818
    %4643 = vmatpush1.bf16.msra.mxu0 %v3817
    %4644 = vmatprep.subr.bf16.mxu0 %v4058
    %4645 = vmatpush2.bf16.msra.mxu0 %v4057
    %4646 = vmatprep.subr.bf16.mxu0 %v4042
    %4647 = vmatpush2.bf16.msra.mxu0 %v4041
    %4648 = vmatprep.subr.bf16.mxu0 %v4026
    %4649 = vmatpush2.bf16.msra.mxu0 %v4025
    %4650 = vmatprep.subr.bf16.mxu0 %v4010
    %4651 = vmatpush2.bf16.msra.mxu0 %v4009
    %4652 = vmatprep.subr.bf16.mxu0 %v3994
    %4653 = vmatpush2.bf16.msra.mxu0 %v3993
    %4654 = vmatprep.subr.bf16.mxu0 %v3978
    %4655 = vmatpush2.bf16.msra.mxu0 %v3977
    %4656 = vmatprep.subr.bf16.mxu0 %v3962
    %4657 = vmatpush2.bf16.msra.mxu0 %v3961
    %4658 = vmatprep.subr.bf16.mxu0 %v3946
    %4659 = vmatpush2.bf16.msra.mxu0 %v3945
    %4660 = vmatprep.mubr.bf16.mxu0 %v1428
    %4661 = vmatmul.mubr.bf16.gmra.mxu0 %v1427
    %v4662 = vpop.f32.mrf.mxu0
    %v4663 = vadd.f32 %v4620, %v4662
    %v4664 = vpop.f32.mrf.mxu0
    %v4665 = vadd.f32 %v4622, %v4664
    %v4666 = vpop.f32.mrf.mxu0
    %v4667 = vadd.f32 %v4624, %v4666
    %v4668 = vpop.f32.mrf.mxu0
    %v4669 = vadd.f32 %v4626, %v4668
    %4670 = vdwg.mxu0
    %4671 = vmatprep.subr.bf16.mxu0 %v3676
    %4672 = vmatpush1.bf16.msra.mxu0 %v3675
    %4673 = vmatprep.subr.bf16.mxu0 %v3660
    %4674 = vmatpush1.bf16.msra.mxu0 %v3659
    %4675 = vmatprep.subr.bf16.mxu0 %v3644
    %4676 = vmatpush1.bf16.msra.mxu0 %v3643
    %4677 = vmatprep.subr.bf16.mxu0 %v3628
    %4678 = vmatpush1.bf16.msra.mxu0 %v3627
    %4679 = vmatprep.subr.bf16.mxu0 %v3612
    %4680 = vmatpush1.bf16.msra.mxu0 %v3611
    %4681 = vmatprep.subr.bf16.mxu0 %v3596
    %4682 = vmatpush1.bf16.msra.mxu0 %v3595
    %4683 = vmatprep.subr.bf16.mxu0 %v3580
    %4684 = vmatpush1.bf16.msra.mxu0 %v3579
    %4685 = vmatprep.subr.bf16.mxu0 %v3564
    %4686 = vmatpush1.bf16.msra.mxu0 %v3563
    %4687 = vmatprep.subr.bf16.mxu0 %v3804
    %4688 = vmatpush2.bf16.msra.mxu0 %v3803
    %4689 = vmatprep.subr.bf16.mxu0 %v3788
    %4690 = vmatpush2.bf16.msra.mxu0 %v3787
    %4691 = vmatprep.subr.bf16.mxu0 %v3772
    %4692 = vmatpush2.bf16.msra.mxu0 %v3771
    %4693 = vmatprep.subr.bf16.mxu0 %v3756
    %4694 = vmatpush2.bf16.msra.mxu0 %v3755
    %4695 = vmatprep.subr.bf16.mxu0 %v3740
    %4696 = vmatpush2.bf16.msra.mxu0 %v3739
    %4697 = vmatprep.subr.bf16.mxu0 %v3724
    %4698 = vmatpush2.bf16.msra.mxu0 %v3723
    %4699 = vmatprep.subr.bf16.mxu0 %v3708
    %4700 = vmatpush2.bf16.msra.mxu0 %v3707
    %4701 = vmatprep.subr.bf16.mxu0 %v3692
    %4702 = vmatpush2.bf16.msra.mxu0 %v3691
    %4703 = vmatprep.mubr.bf16.mxu0 %v1426
    %4704 = vmatmul.mubr.bf16.gmra.mxu0 %v1425
    %v4705 = vpop.f32.mrf.mxu0
    %v4706 = vadd.f32 %v1956, %v4705
    %v4707 = vpop.f32.mrf.mxu0
    %v4708 = vadd.f32 %v1960, %v4707
    %v4709 = vpop.f32.mrf.mxu0
    %v4710 = vadd.f32 %v1956, %v4709
    %v4711 = vpop.f32.mrf.mxu0
    %v4712 = vadd.f32 %v1960, %v4711
    %4713 = vdwg.mxu0
    %4714 = vmatprep.subr.bf16.mxu0 %v3932
    %4715 = vmatpush1.bf16.msra.mxu0 %v3931
    %4716 = vmatprep.subr.bf16.mxu0 %v3916
    %4717 = vmatpush1.bf16.msra.mxu0 %v3915
    %4718 = vmatprep.subr.bf16.mxu0 %v3900
    %4719 = vmatpush1.bf16.msra.mxu0 %v3899
    %4720 = vmatprep.subr.bf16.mxu0 %v3884
    %4721 = vmatpush1.bf16.msra.mxu0 %v3883
    %4722 = vmatprep.subr.bf16.mxu0 %v3868
    %4723 = vmatpush1.bf16.msra.mxu0 %v3867
    %4724 = vmatprep.subr.bf16.mxu0 %v3852
    %4725 = vmatpush1.bf16.msra.mxu0 %v3851
    %4726 = vmatprep.subr.bf16.mxu0 %v3836
    %4727 = vmatpush1.bf16.msra.mxu0 %v3835
    %4728 = vmatprep.subr.bf16.mxu0 %v3820
    %4729 = vmatpush1.bf16.msra.mxu0 %v3819
    %4730 = vmatprep.subr.bf16.mxu0 %v4060
    %4731 = vmatpush2.bf16.msra.mxu0 %v4059
    %4732 = vmatprep.subr.bf16.mxu0 %v4044
    %4733 = vmatpush2.bf16.msra.mxu0 %v4043
    %4734 = vmatprep.subr.bf16.mxu0 %v4028
    %4735 = vmatpush2.bf16.msra.mxu0 %v4027
    %4736 = vmatprep.subr.bf16.mxu0 %v4012
    %4737 = vmatpush2.bf16.msra.mxu0 %v4011
    %4738 = vmatprep.subr.bf16.mxu0 %v3996
    %4739 = vmatpush2.bf16.msra.mxu0 %v3995
    %4740 = vmatprep.subr.bf16.mxu0 %v3980
    %4741 = vmatpush2.bf16.msra.mxu0 %v3979
    %4742 = vmatprep.subr.bf16.mxu0 %v3964
    %4743 = vmatpush2.bf16.msra.mxu0 %v3963
    %4744 = vmatprep.subr.bf16.mxu0 %v3948
    %4745 = vmatpush2.bf16.msra.mxu0 %v3947
    %4746 = vmatprep.mubr.bf16.mxu0 %v1428
    %4747 = vmatmul.mubr.bf16.gmra.mxu0 %v1427
    %v4748 = vpop.f32.mrf.mxu0
    %v4749 = vadd.f32 %v4706, %v4748
    %v4750 = vpop.f32.mrf.mxu0
    %v4751 = vadd.f32 %v4708, %v4750
    %v4752 = vpop.f32.mrf.mxu0
    %v4753 = vadd.f32 %v4710, %v4752
    %v4754 = vpop.f32.mrf.mxu0
    %v4755 = vadd.f32 %v4712, %v4754
    %4756 = vdwg.mxu0
    %4757 = vmatprep.subr.bf16.mxu0 %v3678
    %4758 = vmatpush1.bf16.msra.mxu0 %v3677
    %4759 = vmatprep.subr.bf16.mxu0 %v3662
    %4760 = vmatpush1.bf16.msra.mxu0 %v3661
    %4761 = vmatprep.subr.bf16.mxu0 %v3646
    %4762 = vmatpush1.bf16.msra.mxu0 %v3645
    %4763 = vmatprep.subr.bf16.mxu0 %v3630
    %4764 = vmatpush1.bf16.msra.mxu0 %v3629
    %4765 = vmatprep.subr.bf16.mxu0 %v3614
    %4766 = vmatpush1.bf16.msra.mxu0 %v3613
    %4767 = vmatprep.subr.bf16.mxu0 %v3598
    %4768 = vmatpush1.bf16.msra.mxu0 %v3597
    %4769 = vmatprep.subr.bf16.mxu0 %v3582
    %4770 = vmatpush1.bf16.msra.mxu0 %v3581
    %4771 = vmatprep.subr.bf16.mxu0 %v3566
    %4772 = vmatpush1.bf16.msra.mxu0 %v3565
    %4773 = vmatprep.subr.bf16.mxu0 %v3806
    %4774 = vmatpush2.bf16.msra.mxu0 %v3805
    %4775 = vmatprep.subr.bf16.mxu0 %v3790
    %4776 = vmatpush2.bf16.msra.mxu0 %v3789
    %4777 = vmatprep.subr.bf16.mxu0 %v3774
    %4778 = vmatpush2.bf16.msra.mxu0 %v3773
    %4779 = vmatprep.subr.bf16.mxu0 %v3758
    %4780 = vmatpush2.bf16.msra.mxu0 %v3757
    %4781 = vmatprep.subr.bf16.mxu0 %v3742
    %4782 = vmatpush2.bf16.msra.mxu0 %v3741
    %4783 = vmatprep.subr.bf16.mxu0 %v3726
    %4784 = vmatpush2.bf16.msra.mxu0 %v3725
    %4785 = vmatprep.subr.bf16.mxu0 %v3710
    %4786 = vmatpush2.bf16.msra.mxu0 %v3709
    %4787 = vmatprep.subr.bf16.mxu0 %v3694
    %4788 = vmatpush2.bf16.msra.mxu0 %v3693
    %4789 = vmatprep.mubr.bf16.mxu0 %v1426
    %4790 = vmatmul.mubr.bf16.gmra.mxu0 %v1425
    %v4791 = vpop.f32.mrf.mxu0
    %v4792 = vadd.f32 %v1964, %v4791
    %v4793 = vpop.f32.mrf.mxu0
    %v4794 = vadd.f32 %v1968, %v4793
    %v4795 = vpop.f32.mrf.mxu0
    %v4796 = vadd.f32 %v1964, %v4795
    %v4797 = vpop.f32.mrf.mxu0
    %v4798 = vadd.f32 %v1968, %v4797
    %4799 = vdwg.mxu0
    %4800 = vmatprep.subr.bf16.mxu0 %v3934
    %4801 = vmatpush1.bf16.msra.mxu0 %v3933
    %4802 = vmatprep.subr.bf16.mxu0 %v3918
    %4803 = vmatpush1.bf16.msra.mxu0 %v3917
    %4804 = vmatprep.subr.bf16.mxu0 %v3902
    %4805 = vmatpush1.bf16.msra.mxu0 %v3901
    %4806 = vmatprep.subr.bf16.mxu0 %v3886
    %4807 = vmatpush1.bf16.msra.mxu0 %v3885
    %4808 = vmatprep.subr.bf16.mxu0 %v3870
    %4809 = vmatpush1.bf16.msra.mxu0 %v3869
    %4810 = vmatprep.subr.bf16.mxu0 %v3854
    %4811 = vmatpush1.bf16.msra.mxu0 %v3853
    %4812 = vmatprep.subr.bf16.mxu0 %v3838
    %4813 = vmatpush1.bf16.msra.mxu0 %v3837
    %4814 = vmatprep.subr.bf16.mxu0 %v3822
    %4815 = vmatpush1.bf16.msra.mxu0 %v3821
    %4816 = vmatprep.subr.bf16.mxu0 %v4062
    %4817 = vmatpush2.bf16.msra.mxu0 %v4061
    %4818 = vmatprep.subr.bf16.mxu0 %v4046
    %4819 = vmatpush2.bf16.msra.mxu0 %v4045
    %4820 = vmatprep.subr.bf16.mxu0 %v4030
    %4821 = vmatpush2.bf16.msra.mxu0 %v4029
    %4822 = vmatprep.subr.bf16.mxu0 %v4014
    %4823 = vmatpush2.bf16.msra.mxu0 %v4013
    %4824 = vmatprep.subr.bf16.mxu0 %v3998
    %4825 = vmatpush2.bf16.msra.mxu0 %v3997
    %4826 = vmatprep.subr.bf16.mxu0 %v3982
    %4827 = vmatpush2.bf16.msra.mxu0 %v3981
    %4828 = vmatprep.subr.bf16.mxu0 %v3966
    %4829 = vmatpush2.bf16.msra.mxu0 %v3965
    %4830 = vmatprep.subr.bf16.mxu0 %v3950
    %4831 = vmatpush2.bf16.msra.mxu0 %v3949
    %4832 = vmatprep.mubr.bf16.mxu0 %v1428
    %4833 = vmatmul.mubr.bf16.gmra.mxu0 %v1427
    %v4834 = vpop.f32.mrf.mxu0
    %v4835 = vadd.f32 %v4792, %v4834
    %v4836 = vpop.f32.mrf.mxu0
    %v4837 = vadd.f32 %v4794, %v4836
    %v4838 = vpop.f32.mrf.mxu0
    %v4839 = vadd.f32 %v4796, %v4838
    %v4840 = vpop.f32.mrf.mxu0
    %v4841 = vadd.f32 %v4798, %v4840
    %4842 = vdwg.mxu0
    %4843 = vmatprep.subr.bf16.mxu0 %v3680
    %4844 = vmatpush1.bf16.msra.mxu0 %v3679
    %4845 = vmatprep.subr.bf16.mxu0 %v3664
    %4846 = vmatpush1.bf16.msra.mxu0 %v3663
    %4847 = vmatprep.subr.bf16.mxu0 %v3648
    %4848 = vmatpush1.bf16.msra.mxu0 %v3647
    %4849 = vmatprep.subr.bf16.mxu0 %v3632
    %4850 = vmatpush1.bf16.msra.mxu0 %v3631
    %4851 = vmatprep.subr.bf16.mxu0 %v3616
    %4852 = vmatpush1.bf16.msra.mxu0 %v3615
    %4853 = vmatprep.subr.bf16.mxu0 %v3600
    %4854 = vmatpush1.bf16.msra.mxu0 %v3599
    %4855 = vmatprep.subr.bf16.mxu0 %v3584
    %4856 = vmatpush1.bf16.msra.mxu0 %v3583
    %4857 = vmatprep.subr.bf16.mxu0 %v3568
    %4858 = vmatpush1.bf16.msra.mxu0 %v3567
    %4859 = vmatprep.subr.bf16.mxu0 %v3808
    %4860 = vmatpush2.bf16.msra.mxu0 %v3807
    %4861 = vmatprep.subr.bf16.mxu0 %v3792
    %4862 = vmatpush2.bf16.msra.mxu0 %v3791
    %4863 = vmatprep.subr.bf16.mxu0 %v3776
    %4864 = vmatpush2.bf16.msra.mxu0 %v3775
    %4865 = vmatprep.subr.bf16.mxu0 %v3760
    %4866 = vmatpush2.bf16.msra.mxu0 %v3759
    %4867 = vmatprep.subr.bf16.mxu0 %v3744
    %4868 = vmatpush2.bf16.msra.mxu0 %v3743
    %4869 = vmatprep.subr.bf16.mxu0 %v3728
    %4870 = vmatpush2.bf16.msra.mxu0 %v3727
    %4871 = vmatprep.subr.bf16.mxu0 %v3712
    %4872 = vmatpush2.bf16.msra.mxu0 %v3711
    %4873 = vmatprep.subr.bf16.mxu0 %v3696
    %4874 = vmatpush2.bf16.msra.mxu0 %v3695
    %4875 = vmatprep.mubr.bf16.mxu0 %v1426
    %4876 = vmatmul.mubr.bf16.gmra.mxu0 %v1425
    %v4877 = vpop.f32.mrf.mxu0
    %v4878 = vadd.f32 %v1972, %v4877
    %v4879 = vpop.f32.mrf.mxu0
    %v4880 = vadd.f32 %v1976, %v4879
    %v4881 = vpop.f32.mrf.mxu0
    %v4882 = vadd.f32 %v1972, %v4881
    %v4883 = vpop.f32.mrf.mxu0
    %v4884 = vadd.f32 %v1976, %v4883
    %4885 = vdwg.mxu0
    %4886 = vmatprep.subr.bf16.mxu0 %v3936
    %4887 = vmatpush1.bf16.msra.mxu0 %v3935
    %4888 = vmatprep.subr.bf16.mxu0 %v3920
    %4889 = vmatpush1.bf16.msra.mxu0 %v3919
    %4890 = vmatprep.subr.bf16.mxu0 %v3904
    %4891 = vmatpush1.bf16.msra.mxu0 %v3903
    %4892 = vmatprep.subr.bf16.mxu0 %v3888
    %4893 = vmatpush1.bf16.msra.mxu0 %v3887
    %4894 = vmatprep.subr.bf16.mxu0 %v3872
    %4895 = vmatpush1.bf16.msra.mxu0 %v3871
    %4896 = vmatprep.subr.bf16.mxu0 %v3856
    %4897 = vmatpush1.bf16.msra.mxu0 %v3855
    %4898 = vmatprep.subr.bf16.mxu0 %v3840
    %4899 = vmatpush1.bf16.msra.mxu0 %v3839
    %4900 = vmatprep.subr.bf16.mxu0 %v3824
    %4901 = vmatpush1.bf16.msra.mxu0 %v3823
    %4902 = vmatprep.subr.bf16.mxu0 %v4064
    %4903 = vmatpush2.bf16.msra.mxu0 %v4063
    %4904 = vmatprep.subr.bf16.mxu0 %v4048
    %4905 = vmatpush2.bf16.msra.mxu0 %v4047
    %4906 = vmatprep.subr.bf16.mxu0 %v4032
    %4907 = vmatpush2.bf16.msra.mxu0 %v4031
    %4908 = vmatprep.subr.bf16.mxu0 %v4016
    %4909 = vmatpush2.bf16.msra.mxu0 %v4015
    %4910 = vmatprep.subr.bf16.mxu0 %v4000
    %4911 = vmatpush2.bf16.msra.mxu0 %v3999
    %4912 = vmatprep.subr.bf16.mxu0 %v3984
    %4913 = vmatpush2.bf16.msra.mxu0 %v3983
    %4914 = vmatprep.subr.bf16.mxu0 %v3968
    %4915 = vmatpush2.bf16.msra.mxu0 %v3967
    %4916 = vmatprep.subr.bf16.mxu0 %v3952
    %4917 = vmatpush2.bf16.msra.mxu0 %v3951
    %4918 = vmatprep.mubr.bf16.mxu0 %v1428
    %4919 = vmatmul.mubr.bf16.gmra.mxu0 %v1427
    %v4920 = vpop.f32.mrf.mxu0
    %v4921 = vadd.f32 %v4878, %v4920
    %v4922 = vpop.f32.mrf.mxu0
    %v4923 = vadd.f32 %v4880, %v4922
    %v4924 = vpop.f32.mrf.mxu0
    %v4925 = vadd.f32 %v4882, %v4924
    %v4926 = vpop.f32.mrf.mxu0
    %v4927 = vadd.f32 %v4884, %v4926
    %4928 = vdwg.mxu0
    %4929 = vmatprep.subr.bf16.mxu0 %v3682
    %4930 = vmatpush1.bf16.msra.mxu0 %v3681
    %4931 = vmatprep.subr.bf16.mxu0 %v3666
    %4932 = vmatpush1.bf16.msra.mxu0 %v3665
    %4933 = vmatprep.subr.bf16.mxu0 %v3650
    %4934 = vmatpush1.bf16.msra.mxu0 %v3649
    %4935 = vmatprep.subr.bf16.mxu0 %v3634
    %4936 = vmatpush1.bf16.msra.mxu0 %v3633
    %4937 = vmatprep.subr.bf16.mxu0 %v3618
    %4938 = vmatpush1.bf16.msra.mxu0 %v3617
    %4939 = vmatprep.subr.bf16.mxu0 %v3602
    %4940 = vmatpush1.bf16.msra.mxu0 %v3601
    %4941 = vmatprep.subr.bf16.mxu0 %v3586
    %4942 = vmatpush1.bf16.msra.mxu0 %v3585
    %4943 = vmatprep.subr.bf16.mxu0 %v3570
    %4944 = vmatpush1.bf16.msra.mxu0 %v3569
    %4945 = vmatprep.subr.bf16.mxu0 %v3810
    %4946 = vmatpush2.bf16.msra.mxu0 %v3809
    %4947 = vmatprep.subr.bf16.mxu0 %v3794
    %4948 = vmatpush2.bf16.msra.mxu0 %v3793
    %4949 = vmatprep.subr.bf16.mxu0 %v3778
    %4950 = vmatpush2.bf16.msra.mxu0 %v3777
    %4951 = vmatprep.subr.bf16.mxu0 %v3762
    %4952 = vmatpush2.bf16.msra.mxu0 %v3761
    %4953 = vmatprep.subr.bf16.mxu0 %v3746
    %4954 = vmatpush2.bf16.msra.mxu0 %v3745
    %4955 = vmatprep.subr.bf16.mxu0 %v3730
    %4956 = vmatpush2.bf16.msra.mxu0 %v3729
    %4957 = vmatprep.subr.bf16.mxu0 %v3714
    %4958 = vmatpush2.bf16.msra.mxu0 %v3713
    %4959 = vmatprep.subr.bf16.mxu0 %v3698
    %4960 = vmatpush2.bf16.msra.mxu0 %v3697
    %4961 = vmatprep.mubr.bf16.mxu0 %v1426
    %4962 = vmatmul.mubr.bf16.gmra.mxu0 %v1425
    %v4963 = vpop.f32.mrf.mxu0
    %v4964 = vadd.f32 %v1980, %v4963
    %v4965 = vpop.f32.mrf.mxu0
    %v4966 = vadd.f32 %v1984, %v4965
    %v4967 = vpop.f32.mrf.mxu0
    %v4968 = vadd.f32 %v1980, %v4967
    %v4969 = vpop.f32.mrf.mxu0
    %v4970 = vadd.f32 %v1984, %v4969
    %4971 = vdwg.mxu0
    %4972 = vmatprep.subr.bf16.mxu0 %v3938
    %4973 = vmatpush1.bf16.msra.mxu0 %v3937
    %4974 = vmatprep.subr.bf16.mxu0 %v3922
    %4975 = vmatpush1.bf16.msra.mxu0 %v3921
    %4976 = vmatprep.subr.bf16.mxu0 %v3906
    %4977 = vmatpush1.bf16.msra.mxu0 %v3905
    %4978 = vmatprep.subr.bf16.mxu0 %v3890
    %4979 = vmatpush1.bf16.msra.mxu0 %v3889
    %4980 = vmatprep.subr.bf16.mxu0 %v3874
    %4981 = vmatpush1.bf16.msra.mxu0 %v3873
    %4982 = vmatprep.subr.bf16.mxu0 %v3858
    %4983 = vmatpush1.bf16.msra.mxu0 %v3857
    %4984 = vmatprep.subr.bf16.mxu0 %v3842
    %4985 = vmatpush1.bf16.msra.mxu0 %v3841
    %4986 = vmatprep.subr.bf16.mxu0 %v3826
    %4987 = vmatpush1.bf16.msra.mxu0 %v3825
    %4988 = vmatprep.subr.bf16.mxu0 %v4066
    %4989 = vmatpush2.bf16.msra.mxu0 %v4065
    %4990 = vmatprep.subr.bf16.mxu0 %v4050
    %4991 = vmatpush2.bf16.msra.mxu0 %v4049
    %4992 = vmatprep.subr.bf16.mxu0 %v4034
    %4993 = vmatpush2.bf16.msra.mxu0 %v4033
    %4994 = vmatprep.subr.bf16.mxu0 %v4018
    %4995 = vmatpush2.bf16.msra.mxu0 %v4017
    %4996 = vmatprep.subr.bf16.mxu0 %v4002
    %4997 = vmatpush2.bf16.msra.mxu0 %v4001
    %4998 = vmatprep.subr.bf16.mxu0 %v3986
    %4999 = vmatpush2.bf16.msra.mxu0 %v3985
    %5000 = vmatprep.subr.bf16.mxu0 %v3970
    %5001 = vmatpush2.bf16.msra.mxu0 %v3969
    %5002 = vmatprep.subr.bf16.mxu0 %v3954
    %5003 = vmatpush2.bf16.msra.mxu0 %v3953
    %5004 = vmatprep.mubr.bf16.mxu0 %v1428
    %5005 = vmatmul.mubr.bf16.gmra.mxu0 %v1427
    %v5006 = vpop.f32.mrf.mxu0
    %v5007 = vadd.f32 %v4964, %v5006
    %v5008 = vpop.f32.mrf.mxu0
    %v5009 = vadd.f32 %v4966, %v5008
    %v5010 = vpop.f32.mrf.mxu0
    %v5011 = vadd.f32 %v4968, %v5010
    %v5012 = vpop.f32.mrf.mxu0
    %v5013 = vadd.f32 %v4970, %v5012
    %5014 = vdwg.mxu0
    %5015 = vmatprep.subr.bf16.mxu0 %v3684
    %5016 = vmatpush1.bf16.msra.mxu0 %v3683
    %5017 = vmatprep.subr.bf16.mxu0 %v3668
    %5018 = vmatpush1.bf16.msra.mxu0 %v3667
    %5019 = vmatprep.subr.bf16.mxu0 %v3652
    %5020 = vmatpush1.bf16.msra.mxu0 %v3651
    %5021 = vmatprep.subr.bf16.mxu0 %v3636
    %5022 = vmatpush1.bf16.msra.mxu0 %v3635
    %5023 = vmatprep.subr.bf16.mxu0 %v3620
    %5024 = vmatpush1.bf16.msra.mxu0 %v3619
    %5025 = vmatprep.subr.bf16.mxu0 %v3604
    %5026 = vmatpush1.bf16.msra.mxu0 %v3603
    %5027 = vmatprep.subr.bf16.mxu0 %v3588
    %5028 = vmatpush1.bf16.msra.mxu0 %v3587
    %5029 = vmatprep.subr.bf16.mxu0 %v3572
    %5030 = vmatpush1.bf16.msra.mxu0 %v3571
    %5031 = vmatprep.subr.bf16.mxu0 %v3812
    %5032 = vmatpush2.bf16.msra.mxu0 %v3811
    %5033 = vmatprep.subr.bf16.mxu0 %v3796
    %5034 = vmatpush2.bf16.msra.mxu0 %v3795
    %5035 = vmatprep.subr.bf16.mxu0 %v3780
    %5036 = vmatpush2.bf16.msra.mxu0 %v3779
    %5037 = vmatprep.subr.bf16.mxu0 %v3764
    %5038 = vmatpush2.bf16.msra.mxu0 %v3763
    %5039 = vmatprep.subr.bf16.mxu0 %v3748
    %5040 = vmatpush2.bf16.msra.mxu0 %v3747
    %5041 = vmatprep.subr.bf16.mxu0 %v3732
    %5042 = vmatpush2.bf16.msra.mxu0 %v3731
    %5043 = vmatprep.subr.bf16.mxu0 %v3716
    %5044 = vmatpush2.bf16.msra.mxu0 %v3715
    %5045 = vmatprep.subr.bf16.mxu0 %v3700
    %5046 = vmatpush2.bf16.msra.mxu0 %v3699
    %5047 = vmatprep.mubr.bf16.mxu0 %v1426
    %5048 = vmatmul.mubr.bf16.gmra.mxu0 %v1425
    %v5049 = vpop.f32.mrf.mxu0
    %v5050 = vadd.f32 %v1988, %v5049
    %v5051 = vpop.f32.mrf.mxu0
    %v5052 = vadd.f32 %v1992, %v5051
    %v5053 = vpop.f32.mrf.mxu0
    %v5054 = vadd.f32 %v1988, %v5053
    %v5055 = vpop.f32.mrf.mxu0
    %v5056 = vadd.f32 %v1992, %v5055
    %5057 = vdwg.mxu0
    %5058 = vmatprep.subr.bf16.mxu0 %v3940
    %5059 = vmatpush1.bf16.msra.mxu0 %v3939
    %5060 = vmatprep.subr.bf16.mxu0 %v3924
    %5061 = vmatpush1.bf16.msra.mxu0 %v3923
    %5062 = vmatprep.subr.bf16.mxu0 %v3908
    %5063 = vmatpush1.bf16.msra.mxu0 %v3907
    %5064 = vmatprep.subr.bf16.mxu0 %v3892
    %5065 = vmatpush1.bf16.msra.mxu0 %v3891
    %5066 = vmatprep.subr.bf16.mxu0 %v3876
    %5067 = vmatpush1.bf16.msra.mxu0 %v3875
    %5068 = vmatprep.subr.bf16.mxu0 %v3860
    %5069 = vmatpush1.bf16.msra.mxu0 %v3859
    %5070 = vmatprep.subr.bf16.mxu0 %v3844
    %5071 = vmatpush1.bf16.msra.mxu0 %v3843
    %5072 = vmatprep.subr.bf16.mxu0 %v3828
    %5073 = vmatpush1.bf16.msra.mxu0 %v3827
    %5074 = vmatprep.subr.bf16.mxu0 %v4068
    %5075 = vmatpush2.bf16.msra.mxu0 %v4067
    %5076 = vmatprep.subr.bf16.mxu0 %v4052
    %5077 = vmatpush2.bf16.msra.mxu0 %v4051
    %5078 = vmatprep.subr.bf16.mxu0 %v4036
    %5079 = vmatpush2.bf16.msra.mxu0 %v4035
    %5080 = vmatprep.subr.bf16.mxu0 %v4020
    %5081 = vmatpush2.bf16.msra.mxu0 %v4019
    %5082 = vmatprep.subr.bf16.mxu0 %v4004
    %5083 = vmatpush2.bf16.msra.mxu0 %v4003
    %5084 = vmatprep.subr.bf16.mxu0 %v3988
    %5085 = vmatpush2.bf16.msra.mxu0 %v3987
    %5086 = vmatprep.subr.bf16.mxu0 %v3972
    %5087 = vmatpush2.bf16.msra.mxu0 %v3971
    %5088 = vmatprep.subr.bf16.mxu0 %v3956
    %5089 = vmatpush2.bf16.msra.mxu0 %v3955
    %5090 = vmatprep.mubr.bf16.mxu0 %v1428
    %5091 = vmatmul.mubr.bf16.gmra.mxu0 %v1427
    %v5092 = vpop.f32.mrf.mxu0
    %v5093 = vadd.f32 %v5050, %v5092
    %v5094 = vpop.f32.mrf.mxu0
    %v5095 = vadd.f32 %v5052, %v5094
    %v5096 = vpop.f32.mrf.mxu0
    %v5097 = vadd.f32 %v5054, %v5096
    %v5098 = vpop.f32.mrf.mxu0
    %v5099 = vadd.f32 %v5056, %v5098
    %5100 = vdwg.mxu0
    %5101 = vmatprep.subr.bf16.mxu0 %v3686
    %5102 = vmatpush1.bf16.msra.mxu0 %v3685
    %5103 = vmatprep.subr.bf16.mxu0 %v3670
    %5104 = vmatpush1.bf16.msra.mxu0 %v3669
    %5105 = vmatprep.subr.bf16.mxu0 %v3654
    %5106 = vmatpush1.bf16.msra.mxu0 %v3653
    %5107 = vmatprep.subr.bf16.mxu0 %v3638
    %5108 = vmatpush1.bf16.msra.mxu0 %v3637
    %5109 = vmatprep.subr.bf16.mxu0 %v3622
    %5110 = vmatpush1.bf16.msra.mxu0 %v3621
    %5111 = vmatprep.subr.bf16.mxu0 %v3606
    %5112 = vmatpush1.bf16.msra.mxu0 %v3605
    %5113 = vmatprep.subr.bf16.mxu0 %v3590
    %5114 = vmatpush1.bf16.msra.mxu0 %v3589
    %5115 = vmatprep.subr.bf16.mxu0 %v3574
    %5116 = vmatpush1.bf16.msra.mxu0 %v3573
    %5117 = vmatprep.subr.bf16.mxu0 %v3814
    %5118 = vmatpush2.bf16.msra.mxu0 %v3813
    %5119 = vmatprep.subr.bf16.mxu0 %v3798
    %5120 = vmatpush2.bf16.msra.mxu0 %v3797
    %5121 = vmatprep.subr.bf16.mxu0 %v3782
    %5122 = vmatpush2.bf16.msra.mxu0 %v3781
    %5123 = vmatprep.subr.bf16.mxu0 %v3766
    %5124 = vmatpush2.bf16.msra.mxu0 %v3765
    %5125 = vmatprep.subr.bf16.mxu0 %v3750
    %5126 = vmatpush2.bf16.msra.mxu0 %v3749
    %5127 = vmatprep.subr.bf16.mxu0 %v3734
    %5128 = vmatpush2.bf16.msra.mxu0 %v3733
    %5129 = vmatprep.subr.bf16.mxu0 %v3718
    %5130 = vmatpush2.bf16.msra.mxu0 %v3717
    %5131 = vmatprep.subr.bf16.mxu0 %v3702
    %5132 = vmatpush2.bf16.msra.mxu0 %v3701
    %5133 = vmatprep.mubr.bf16.mxu0 %v1426
    %5134 = vmatmul.mubr.bf16.gmra.mxu0 %v1425
    %v5135 = vpop.f32.mrf.mxu0
    %v5136 = vadd.f32 %v1996, %v5135
    %v5137 = vpop.f32.mrf.mxu0
    %v5138 = vadd.f32 %v2000, %v5137
    %v5139 = vpop.f32.mrf.mxu0
    %v5140 = vadd.f32 %v1996, %v5139
    %v5141 = vpop.f32.mrf.mxu0
    %v5142 = vadd.f32 %v2000, %v5141
    %5143 = vdwg.mxu0
    %5144 = vmatprep.subr.bf16.mxu0 %v3942
    %5145 = vmatpush1.bf16.msra.mxu0 %v3941
    %5146 = vmatprep.subr.bf16.mxu0 %v3926
    %5147 = vmatpush1.bf16.msra.mxu0 %v3925
    %5148 = vmatprep.subr.bf16.mxu0 %v3910
    %5149 = vmatpush1.bf16.msra.mxu0 %v3909
    %5150 = vmatprep.subr.bf16.mxu0 %v3894
    %5151 = vmatpush1.bf16.msra.mxu0 %v3893
    %5152 = vmatprep.subr.bf16.mxu0 %v3878
    %5153 = vmatpush1.bf16.msra.mxu0 %v3877
    %5154 = vmatprep.subr.bf16.mxu0 %v3862
    %5155 = vmatpush1.bf16.msra.mxu0 %v3861
    %5156 = vmatprep.subr.bf16.mxu0 %v3846
    %5157 = vmatpush1.bf16.msra.mxu0 %v3845
    %5158 = vmatprep.subr.bf16.mxu0 %v3830
    %5159 = vmatpush1.bf16.msra.mxu0 %v3829
    %5160 = vmatprep.subr.bf16.mxu0 %v4070
    %5161 = vmatpush2.bf16.msra.mxu0 %v4069
    %5162 = vmatprep.subr.bf16.mxu0 %v4054
    %5163 = vmatpush2.bf16.msra.mxu0 %v4053
    %5164 = vmatprep.subr.bf16.mxu0 %v4038
    %5165 = vmatpush2.bf16.msra.mxu0 %v4037
    %5166 = vmatprep.subr.bf16.mxu0 %v4022
    %5167 = vmatpush2.bf16.msra.mxu0 %v4021
    %5168 = vmatprep.subr.bf16.mxu0 %v4006
    %5169 = vmatpush2.bf16.msra.mxu0 %v4005
    %5170 = vmatprep.subr.bf16.mxu0 %v3990
    %5171 = vmatpush2.bf16.msra.mxu0 %v3989
    %5172 = vmatprep.subr.bf16.mxu0 %v3974
    %5173 = vmatpush2.bf16.msra.mxu0 %v3973
    %5174 = vmatprep.subr.bf16.mxu0 %v3958
    %5175 = vmatpush2.bf16.msra.mxu0 %v3957
    %5176 = vmatprep.mubr.bf16.mxu0 %v1428
    %5177 = vmatmul.mubr.bf16.gmra.mxu0 %v1427
    %v5178 = vpop.f32.mrf.mxu0
    %v5179 = vadd.f32 %v5136, %v5178
    %v5180 = vpop.f32.mrf.mxu0
    %v5181 = vadd.f32 %v5138, %v5180
    %v5182 = vpop.f32.mrf.mxu0
    %v5183 = vadd.f32 %v5140, %v5182
    %v5184 = vpop.f32.mrf.mxu0
    %v5185 = vadd.f32 %v5142, %v5184
    %5186 = vdwg.mxu0
    %5187 = vmatprep.subr.bf16.mxu0 %v3688
    %5188 = vmatpush1.bf16.msra.mxu0 %v3687
    %5189 = vmatprep.subr.bf16.mxu0 %v3672
    %5190 = vmatpush1.bf16.msra.mxu0 %v3671
    %5191 = vmatprep.subr.bf16.mxu0 %v3656
    %5192 = vmatpush1.bf16.msra.mxu0 %v3655
    %5193 = vmatprep.subr.bf16.mxu0 %v3640
    %5194 = vmatpush1.bf16.msra.mxu0 %v3639
    %5195 = vmatprep.subr.bf16.mxu0 %v3624
    %5196 = vmatpush1.bf16.msra.mxu0 %v3623
    %5197 = vmatprep.subr.bf16.mxu0 %v3608
    %5198 = vmatpush1.bf16.msra.mxu0 %v3607
    %5199 = vmatprep.subr.bf16.mxu0 %v3592
    %5200 = vmatpush1.bf16.msra.mxu0 %v3591
    %5201 = vmatprep.subr.bf16.mxu0 %v3576
    %5202 = vmatpush1.bf16.msra.mxu0 %v3575
    %5203 = vmatprep.subr.bf16.mxu0 %v3816
    %5204 = vmatpush2.bf16.msra.mxu0 %v3815
    %5205 = vmatprep.subr.bf16.mxu0 %v3800
    %5206 = vmatpush2.bf16.msra.mxu0 %v3799
    %5207 = vmatprep.subr.bf16.mxu0 %v3784
    %5208 = vmatpush2.bf16.msra.mxu0 %v3783
    %5209 = vmatprep.subr.bf16.mxu0 %v3768
    %5210 = vmatpush2.bf16.msra.mxu0 %v3767
    %5211 = vmatprep.subr.bf16.mxu0 %v3752
    %5212 = vmatpush2.bf16.msra.mxu0 %v3751
    %5213 = vmatprep.subr.bf16.mxu0 %v3736
    %5214 = vmatpush2.bf16.msra.mxu0 %v3735
    %5215 = vmatprep.subr.bf16.mxu0 %v3720
    %5216 = vmatpush2.bf16.msra.mxu0 %v3719
    %5217 = vmatprep.subr.bf16.mxu0 %v3704
    %5218 = vmatpush2.bf16.msra.mxu0 %v3703
    %5219 = vmatprep.mubr.bf16.mxu0 %v1426
    %5220 = vmatmul.mubr.bf16.gmra.mxu0 %v1425
    %v5221 = vpop.f32.mrf.mxu0
    %v5222 = vadd.f32 %v2004, %v5221
    %v5223 = vpop.f32.mrf.mxu0
    %v5224 = vadd.f32 %v2008, %v5223
    %v5225 = vpop.f32.mrf.mxu0
    %v5226 = vadd.f32 %v2004, %v5225
    %v5227 = vpop.f32.mrf.mxu0
    %v5228 = vadd.f32 %v2008, %v5227
    %5229 = vdwg.mxu0
    %5230 = vmatprep.subr.bf16.mxu0 %v3944
    %5231 = vmatpush1.bf16.msra.mxu0 %v3943
    %5232 = vmatprep.subr.bf16.mxu0 %v3928
    %5233 = vmatpush1.bf16.msra.mxu0 %v3927
    %5234 = vmatprep.subr.bf16.mxu0 %v3912
    %5235 = vmatpush1.bf16.msra.mxu0 %v3911
    %5236 = vmatprep.subr.bf16.mxu0 %v3896
    %5237 = vmatpush1.bf16.msra.mxu0 %v3895
    %5238 = vmatprep.subr.bf16.mxu0 %v3880
    %5239 = vmatpush1.bf16.msra.mxu0 %v3879
    %5240 = vmatprep.subr.bf16.mxu0 %v3864
    %5241 = vmatpush1.bf16.msra.mxu0 %v3863
    %5242 = vmatprep.subr.bf16.mxu0 %v3848
    %5243 = vmatpush1.bf16.msra.mxu0 %v3847
    %5244 = vmatprep.subr.bf16.mxu0 %v3832
    %5245 = vmatpush1.bf16.msra.mxu0 %v3831
    %5246 = vmatprep.subr.bf16.mxu0 %v4072
    %5247 = vmatpush2.bf16.msra.mxu0 %v4071
    %5248 = vmatprep.subr.bf16.mxu0 %v4056
    %5249 = vmatpush2.bf16.msra.mxu0 %v4055
    %5250 = vmatprep.subr.bf16.mxu0 %v4040
    %5251 = vmatpush2.bf16.msra.mxu0 %v4039
    %5252 = vmatprep.subr.bf16.mxu0 %v4024
    %5253 = vmatpush2.bf16.msra.mxu0 %v4023
    %5254 = vmatprep.subr.bf16.mxu0 %v4008
    %5255 = vmatpush2.bf16.msra.mxu0 %v4007
    %5256 = vmatprep.subr.bf16.mxu0 %v3992
    %5257 = vmatpush2.bf16.msra.mxu0 %v3991
    %5258 = vmatprep.subr.bf16.mxu0 %v3976
    %5259 = vmatpush2.bf16.msra.mxu0 %v3975
    %5260 = vmatprep.subr.bf16.mxu0 %v3960
    %5261 = vmatpush2.bf16.msra.mxu0 %v3959
    %5262 = vmatprep.mubr.bf16.mxu0 %v1428
    %5263 = vmatmul.mubr.bf16.gmra.mxu0 %v1427
    %v5264 = vpop.f32.mrf.mxu0
    %v5265 = vadd.f32 %v5222, %v5264
    %v5266 = vpop.f32.mrf.mxu0
    %v5267 = vadd.f32 %v5224, %v5266
    %v5268 = vpop.f32.mrf.mxu0
    %v5269 = vadd.f32 %v5226, %v5268
    %v5270 = vpop.f32.mrf.mxu0
    %v5271 = vadd.f32 %v5228, %v5270
    %5272 = vdwg.mxu0
    %v5273 = vmax.f32 %v4663, 0.0
    %v5274 = vmax.f32 %v4665, 0.0
    %v5275 = vmax.f32 %v4749, 0.0
    %v5276 = vmax.f32 %v4751, 0.0
    %v5277 = vmax.f32 %v4835, 0.0
    %v5278 = vmax.f32 %v4837, 0.0
    %v5279 = vmax.f32 %v4921, 0.0
    %v5280 = vmax.f32 %v4923, 0.0
    %v5281 = vmax.f32 %v5007, 0.0
    %v5282 = vmax.f32 %v5009, 0.0
    %v5283 = vmax.f32 %v5093, 0.0
    %v5284 = vmax.f32 %v5095, 0.0
    %v5285 = vmax.f32 %v5179, 0.0
    %v5286 = vmax.f32 %v5181, 0.0
    %v5287 = vmax.f32 %v5265, 0.0
    %v5288 = vmax.f32 %v5267, 0.0
    %v5289 = vmax.f32 %v4667, 0.0
    %v5290 = vmax.f32 %v4669, 0.0
    %v5291 = vmax.f32 %v4753, 0.0
    %v5292 = vmax.f32 %v4755, 0.0
    %v5293 = vmax.f32 %v4839, 0.0
    %v5294 = vmax.f32 %v4841, 0.0
    %v5295 = vmax.f32 %v4925, 0.0
    %v5296 = vmax.f32 %v4927, 0.0
    %v5297 = vmax.f32 %v5011, 0.0
    %v5298 = vmax.f32 %v5013, 0.0
    %v5299 = vmax.f32 %v5097, 0.0
    %v5300 = vmax.f32 %v5099, 0.0
    %v5301 = vmax.f32 %v5183, 0.0
    %v5302 = vmax.f32 %v5185, 0.0
    %v5303 = vmax.f32 %v5269, 0.0
    %v5304 = vmax.f32 %v5271, 0.0
    %v5305 = vpack.c.bf16 %v5289, %v5273
    %v5306 = vpack.c.bf16 %v5290, %v5274
    %v5307 = vpack.c.bf16 %v5291, %v5275
    %v5308 = vpack.c.bf16 %v5292, %v5276
    %v5309 = vpack.c.bf16 %v5293, %v5277
    %v5310 = vpack.c.bf16 %v5294, %v5278
    %v5311 = vpack.c.bf16 %v5295, %v5279
    %v5312 = vpack.c.bf16 %v5296, %v5280
    %v5313 = vpack.c.bf16 %v5297, %v5281
    %v5314 = vpack.c.bf16 %v5298, %v5282
    %v5315 = vpack.c.bf16 %v5299, %v5283
    %v5316 = vpack.c.bf16 %v5300, %v5284
    %v5317 = vpack.c.bf16 %v5301, %v5285
    %v5318 = vpack.c.bf16 %v5302, %v5286
    %v5319 = vpack.c.bf16 %v5303, %v5287
    %v5320 = vpack.c.bf16 %v5304, %v5288
    %v5321 = vld [vmem:[#allocation13] sm:$0xf]
    %v5322 = vld [vmem:[#allocation13 + $0x4] sm:$0xf]
    %v5323 = vld [vmem:[#allocation13 + $0x8] sm:$0xf]
    %v5324 = vld [vmem:[#allocation13 + $0xc] sm:$0xf]
    %v5325 = vld [vmem:[#allocation13 + $0x10] sm:$0xf]
    %v5326 = vld [vmem:[#allocation13 + $0x14] sm:$0xf]
    %v5327 = vld [vmem:[#allocation13 + $0x18] sm:$0xf]
    %v5328 = vld [vmem:[#allocation13 + $0x1c] sm:$0xf]
    %v5329 = vld [vmem:[#allocation13 + $0x20] sm:$0xf]
    %v5330 = vld [vmem:[#allocation13 + $0x24] sm:$0xf]
    %v5331 = vld [vmem:[#allocation13 + $0x28] sm:$0xf]
    %v5332 = vld [vmem:[#allocation13 + $0x2c] sm:$0xf]
    %v5333 = vld [vmem:[#allocation13 + $0x30] sm:$0xf]
    %v5334 = vld [vmem:[#allocation13 + $0x34] sm:$0xf]
    %v5335 = vld [vmem:[#allocation13 + $0x38] sm:$0xf]
    %v5336 = vld [vmem:[#allocation13 + $0x3c] sm:$0xf]
    %v5337 = vld [vmem:[#allocation13 + $0x40] sm:$0xf]
    %v5338 = vld [vmem:[#allocation13 + $0x44] sm:$0xf]
    %v5339 = vld [vmem:[#allocation13 + $0x48] sm:$0xf]
    %v5340 = vld [vmem:[#allocation13 + $0x4c] sm:$0xf]
    %v5341 = vld [vmem:[#allocation13 + $0x50] sm:$0xf]
    %v5342 = vld [vmem:[#allocation13 + $0x54] sm:$0xf]
    %v5343 = vld [vmem:[#allocation13 + $0x58] sm:$0xf]
    %v5344 = vld [vmem:[#allocation13 + $0x5c] sm:$0xf]
    %v5345 = vld [vmem:[#allocation13 + $0x60] sm:$0xf]
    %v5346 = vld [vmem:[#allocation13 + $0x64] sm:$0xf]
    %v5347 = vld [vmem:[#allocation13 + $0x68] sm:$0xf]
    %v5348 = vld [vmem:[#allocation13 + $0x6c] sm:$0xf]
    %v5349 = vld [vmem:[#allocation13 + $0x70] sm:$0xf]
    %v5350 = vld [vmem:[#allocation13 + $0x74] sm:$0xf]
    %v5351 = vld [vmem:[#allocation13 + $0x78] sm:$0xf]
    %v5352 = vld [vmem:[#allocation13 + $0x7c] sm:$0xf]
    %v5353 = vld [vmem:[#allocation13 + $0x80] sm:$0xf]
    %v5354 = vld [vmem:[#allocation13 + $0x84] sm:$0xf]
    %v5355 = vld [vmem:[#allocation13 + $0x88] sm:$0xf]
    %v5356 = vld [vmem:[#allocation13 + $0x8c] sm:$0xf]
    %v5357 = vld [vmem:[#allocation13 + $0x90] sm:$0xf]
    %v5358 = vld [vmem:[#allocation13 + $0x94] sm:$0xf]
    %v5359 = vld [vmem:[#allocation13 + $0x98] sm:$0xf]
    %v5360 = vld [vmem:[#allocation13 + $0x9c] sm:$0xf]
    %v5361 = vld [vmem:[#allocation13 + $0xa0] sm:$0xf]
    %v5362 = vld [vmem:[#allocation13 + $0xa4] sm:$0xf]
    %v5363 = vld [vmem:[#allocation13 + $0xa8] sm:$0xf]
    %v5364 = vld [vmem:[#allocation13 + $0xac] sm:$0xf]
    %v5365 = vld [vmem:[#allocation13 + $0xb0] sm:$0xf]
    %v5366 = vld [vmem:[#allocation13 + $0xb4] sm:$0xf]
    %v5367 = vld [vmem:[#allocation13 + $0xb8] sm:$0xf]
    %v5368 = vld [vmem:[#allocation13 + $0xbc] sm:$0xf]
    %v5369 = vld [vmem:[#allocation13 + $0xc0] sm:$0xf]
    %v5370 = vld [vmem:[#allocation13 + $0xc4] sm:$0xf]
    %v5371 = vld [vmem:[#allocation13 + $0xc8] sm:$0xf]
    %v5372 = vld [vmem:[#allocation13 + $0xcc] sm:$0xf]
    %v5373 = vld [vmem:[#allocation13 + $0xd0] sm:$0xf]
    %v5374 = vld [vmem:[#allocation13 + $0xd4] sm:$0xf]
    %v5375 = vld [vmem:[#allocation13 + $0xd8] sm:$0xf]
    %v5376 = vld [vmem:[#allocation13 + $0xdc] sm:$0xf]
    %v5377 = vld [vmem:[#allocation13 + $0xe0] sm:$0xf]
    %v5378 = vld [vmem:[#allocation13 + $0xe4] sm:$0xf]
    %v5379 = vld [vmem:[#allocation13 + $0xe8] sm:$0xf]
    %v5380 = vld [vmem:[#allocation13 + $0xec] sm:$0xf]
    %v5381 = vld [vmem:[#allocation13 + $0xf0] sm:$0xf]
    %v5382 = vld [vmem:[#allocation13 + $0xf4] sm:$0xf]
    %v5383 = vld [vmem:[#allocation13 + $0xf8] sm:$0xf]
    %v5384 = vld [vmem:[#allocation13 + $0xfc] sm:$0xf]
    %v5385 = vld [vmem:[#allocation13 + $0x100] sm:$0xf]
    %v5386 = vld [vmem:[#allocation13 + $0x104] sm:$0xf]
    %v5387 = vld [vmem:[#allocation13 + $0x108] sm:$0xf]
    %v5388 = vld [vmem:[#allocation13 + $0x10c] sm:$0xf]
    %v5389 = vld [vmem:[#allocation13 + $0x110] sm:$0xf]
    %v5390 = vld [vmem:[#allocation13 + $0x114] sm:$0xf]
    %v5391 = vld [vmem:[#allocation13 + $0x118] sm:$0xf]
    %v5392 = vld [vmem:[#allocation13 + $0x11c] sm:$0xf]
    %v5393 = vld [vmem:[#allocation13 + $0x120] sm:$0xf]
    %v5394 = vld [vmem:[#allocation13 + $0x124] sm:$0xf]
    %v5395 = vld [vmem:[#allocation13 + $0x128] sm:$0xf]
    %v5396 = vld [vmem:[#allocation13 + $0x12c] sm:$0xf]
    %v5397 = vld [vmem:[#allocation13 + $0x130] sm:$0xf]
    %v5398 = vld [vmem:[#allocation13 + $0x134] sm:$0xf]
    %v5399 = vld [vmem:[#allocation13 + $0x138] sm:$0xf]
    %v5400 = vld [vmem:[#allocation13 + $0x13c] sm:$0xf]
    %v5401 = vld [vmem:[#allocation13 + $0x140] sm:$0xf]
    %v5402 = vld [vmem:[#allocation13 + $0x144] sm:$0xf]
    %v5403 = vld [vmem:[#allocation13 + $0x148] sm:$0xf]
    %v5404 = vld [vmem:[#allocation13 + $0x14c] sm:$0xf]
    %v5405 = vld [vmem:[#allocation13 + $0x150] sm:$0xf]
    %v5406 = vld [vmem:[#allocation13 + $0x154] sm:$0xf]
    %v5407 = vld [vmem:[#allocation13 + $0x158] sm:$0xf]
    %v5408 = vld [vmem:[#allocation13 + $0x15c] sm:$0xf]
    %v5409 = vld [vmem:[#allocation13 + $0x160] sm:$0xf]
    %v5410 = vld [vmem:[#allocation13 + $0x164] sm:$0xf]
    %v5411 = vld [vmem:[#allocation13 + $0x168] sm:$0xf]
    %v5412 = vld [vmem:[#allocation13 + $0x16c] sm:$0xf]
    %v5413 = vld [vmem:[#allocation13 + $0x170] sm:$0xf]
    %v5414 = vld [vmem:[#allocation13 + $0x174] sm:$0xf]
    %v5415 = vld [vmem:[#allocation13 + $0x178] sm:$0xf]
    %v5416 = vld [vmem:[#allocation13 + $0x17c] sm:$0xf]
    %v5417 = vld [vmem:[#allocation13 + $0x180] sm:$0xf]
    %v5418 = vld [vmem:[#allocation13 + $0x184] sm:$0xf]
    %v5419 = vld [vmem:[#allocation13 + $0x188] sm:$0xf]
    %v5420 = vld [vmem:[#allocation13 + $0x18c] sm:$0xf]
    %v5421 = vld [vmem:[#allocation13 + $0x190] sm:$0xf]
    %v5422 = vld [vmem:[#allocation13 + $0x194] sm:$0xf]
    %v5423 = vld [vmem:[#allocation13 + $0x198] sm:$0xf]
    %v5424 = vld [vmem:[#allocation13 + $0x19c] sm:$0xf]
    %v5425 = vld [vmem:[#allocation13 + $0x1a0] sm:$0xf]
    %v5426 = vld [vmem:[#allocation13 + $0x1a4] sm:$0xf]
    %v5427 = vld [vmem:[#allocation13 + $0x1a8] sm:$0xf]
    %v5428 = vld [vmem:[#allocation13 + $0x1ac] sm:$0xf]
    %v5429 = vld [vmem:[#allocation13 + $0x1b0] sm:$0xf]
    %v5430 = vld [vmem:[#allocation13 + $0x1b4] sm:$0xf]
    %v5431 = vld [vmem:[#allocation13 + $0x1b8] sm:$0xf]
    %v5432 = vld [vmem:[#allocation13 + $0x1bc] sm:$0xf]
    %v5433 = vld [vmem:[#allocation13 + $0x1c0] sm:$0xf]
    %v5434 = vld [vmem:[#allocation13 + $0x1c4] sm:$0xf]
    %v5435 = vld [vmem:[#allocation13 + $0x1c8] sm:$0xf]
    %v5436 = vld [vmem:[#allocation13 + $0x1cc] sm:$0xf]
    %v5437 = vld [vmem:[#allocation13 + $0x1d0] sm:$0xf]
    %v5438 = vld [vmem:[#allocation13 + $0x1d4] sm:$0xf]
    %v5439 = vld [vmem:[#allocation13 + $0x1d8] sm:$0xf]
    %v5440 = vld [vmem:[#allocation13 + $0x1dc] sm:$0xf]
    %v5441 = vld [vmem:[#allocation13 + $0x1e0] sm:$0xf]
    %v5442 = vld [vmem:[#allocation13 + $0x1e4] sm:$0xf]
    %v5443 = vld [vmem:[#allocation13 + $0x1e8] sm:$0xf]
    %v5444 = vld [vmem:[#allocation13 + $0x1ec] sm:$0xf]
    %v5445 = vld [vmem:[#allocation13 + $0x1f0] sm:$0xf]
    %v5446 = vld [vmem:[#allocation13 + $0x1f4] sm:$0xf]
    %v5447 = vld [vmem:[#allocation13 + $0x1f8] sm:$0xf]
    %v5448 = vld [vmem:[#allocation13 + $0x1fc] sm:$0xf]
    %v5449 = vld [vmem:[#allocation13 + $0x200] sm:$0xf]
    %v5450 = vld [vmem:[#allocation13 + $0x204] sm:$0xf]
    %v5451 = vld [vmem:[#allocation13 + $0x208] sm:$0xf]
    %v5452 = vld [vmem:[#allocation13 + $0x20c] sm:$0xf]
    %v5453 = vld [vmem:[#allocation13 + $0x210] sm:$0xf]
    %v5454 = vld [vmem:[#allocation13 + $0x214] sm:$0xf]
    %v5455 = vld [vmem:[#allocation13 + $0x218] sm:$0xf]
    %v5456 = vld [vmem:[#allocation13 + $0x21c] sm:$0xf]
    %v5457 = vld [vmem:[#allocation13 + $0x220] sm:$0xf]
    %v5458 = vld [vmem:[#allocation13 + $0x224] sm:$0xf]
    %v5459 = vld [vmem:[#allocation13 + $0x228] sm:$0xf]
    %v5460 = vld [vmem:[#allocation13 + $0x22c] sm:$0xf]
    %v5461 = vld [vmem:[#allocation13 + $0x230] sm:$0xf]
    %v5462 = vld [vmem:[#allocation13 + $0x234] sm:$0xf]
    %v5463 = vld [vmem:[#allocation13 + $0x238] sm:$0xf]
    %v5464 = vld [vmem:[#allocation13 + $0x23c] sm:$0xf]
    %v5465 = vld [vmem:[#allocation13 + $0x240] sm:$0xf]
    %v5466 = vld [vmem:[#allocation13 + $0x244] sm:$0xf]
    %v5467 = vld [vmem:[#allocation13 + $0x248] sm:$0xf]
    %v5468 = vld [vmem:[#allocation13 + $0x24c] sm:$0xf]
    %v5469 = vld [vmem:[#allocation13 + $0x250] sm:$0xf]
    %v5470 = vld [vmem:[#allocation13 + $0x254] sm:$0xf]
    %v5471 = vld [vmem:[#allocation13 + $0x258] sm:$0xf]
    %v5472 = vld [vmem:[#allocation13 + $0x25c] sm:$0xf]
    %v5473 = vld [vmem:[#allocation13 + $0x260] sm:$0xf]
    %v5474 = vld [vmem:[#allocation13 + $0x264] sm:$0xf]
    %v5475 = vld [vmem:[#allocation13 + $0x268] sm:$0xf]
    %v5476 = vld [vmem:[#allocation13 + $0x26c] sm:$0xf]
    %v5477 = vld [vmem:[#allocation13 + $0x270] sm:$0xf]
    %v5478 = vld [vmem:[#allocation13 + $0x274] sm:$0xf]
    %v5479 = vld [vmem:[#allocation13 + $0x278] sm:$0xf]
    %v5480 = vld [vmem:[#allocation13 + $0x27c] sm:$0xf]
    %v5481 = vld [vmem:[#allocation13 + $0x280] sm:$0xf]
    %v5482 = vld [vmem:[#allocation13 + $0x284] sm:$0xf]
    %v5483 = vld [vmem:[#allocation13 + $0x288] sm:$0xf]
    %v5484 = vld [vmem:[#allocation13 + $0x28c] sm:$0xf]
    %v5485 = vld [vmem:[#allocation13 + $0x290] sm:$0xf]
    %v5486 = vld [vmem:[#allocation13 + $0x294] sm:$0xf]
    %v5487 = vld [vmem:[#allocation13 + $0x298] sm:$0xf]
    %v5488 = vld [vmem:[#allocation13 + $0x29c] sm:$0xf]
    %v5489 = vld [vmem:[#allocation13 + $0x2a0] sm:$0xf]
    %v5490 = vld [vmem:[#allocation13 + $0x2a4] sm:$0xf]
    %v5491 = vld [vmem:[#allocation13 + $0x2a8] sm:$0xf]
    %v5492 = vld [vmem:[#allocation13 + $0x2ac] sm:$0xf]
    %v5493 = vld [vmem:[#allocation13 + $0x2b0] sm:$0xf]
    %v5494 = vld [vmem:[#allocation13 + $0x2b4] sm:$0xf]
    %v5495 = vld [vmem:[#allocation13 + $0x2b8] sm:$0xf]
    %v5496 = vld [vmem:[#allocation13 + $0x2bc] sm:$0xf]
    %v5497 = vld [vmem:[#allocation13 + $0x2c0] sm:$0xf]
    %v5498 = vld [vmem:[#allocation13 + $0x2c4] sm:$0xf]
    %v5499 = vld [vmem:[#allocation13 + $0x2c8] sm:$0xf]
    %v5500 = vld [vmem:[#allocation13 + $0x2cc] sm:$0xf]
    %v5501 = vld [vmem:[#allocation13 + $0x2d0] sm:$0xf]
    %v5502 = vld [vmem:[#allocation13 + $0x2d4] sm:$0xf]
    %v5503 = vld [vmem:[#allocation13 + $0x2d8] sm:$0xf]
    %v5504 = vld [vmem:[#allocation13 + $0x2dc] sm:$0xf]
    %v5505 = vld [vmem:[#allocation13 + $0x2e0] sm:$0xf]
    %v5506 = vld [vmem:[#allocation13 + $0x2e4] sm:$0xf]
    %v5507 = vld [vmem:[#allocation13 + $0x2e8] sm:$0xf]
    %v5508 = vld [vmem:[#allocation13 + $0x2ec] sm:$0xf]
    %v5509 = vld [vmem:[#allocation13 + $0x2f0] sm:$0xf]
    %v5510 = vld [vmem:[#allocation13 + $0x2f4] sm:$0xf]
    %v5511 = vld [vmem:[#allocation13 + $0x2f8] sm:$0xf]
    %v5512 = vld [vmem:[#allocation13 + $0x2fc] sm:$0xf]
    %v5513 = vld [vmem:[#allocation13 + $0x300] sm:$0xf]
    %v5514 = vld [vmem:[#allocation13 + $0x304] sm:$0xf]
    %v5515 = vld [vmem:[#allocation13 + $0x308] sm:$0xf]
    %v5516 = vld [vmem:[#allocation13 + $0x30c] sm:$0xf]
    %v5517 = vld [vmem:[#allocation13 + $0x310] sm:$0xf]
    %v5518 = vld [vmem:[#allocation13 + $0x314] sm:$0xf]
    %v5519 = vld [vmem:[#allocation13 + $0x318] sm:$0xf]
    %v5520 = vld [vmem:[#allocation13 + $0x31c] sm:$0xf]
    %v5521 = vld [vmem:[#allocation13 + $0x320] sm:$0xf]
    %v5522 = vld [vmem:[#allocation13 + $0x324] sm:$0xf]
    %v5523 = vld [vmem:[#allocation13 + $0x328] sm:$0xf]
    %v5524 = vld [vmem:[#allocation13 + $0x32c] sm:$0xf]
    %v5525 = vld [vmem:[#allocation13 + $0x330] sm:$0xf]
    %v5526 = vld [vmem:[#allocation13 + $0x334] sm:$0xf]
    %v5527 = vld [vmem:[#allocation13 + $0x338] sm:$0xf]
    %v5528 = vld [vmem:[#allocation13 + $0x33c] sm:$0xf]
    %v5529 = vld [vmem:[#allocation13 + $0x340] sm:$0xf]
    %v5530 = vld [vmem:[#allocation13 + $0x344] sm:$0xf]
    %v5531 = vld [vmem:[#allocation13 + $0x348] sm:$0xf]
    %v5532 = vld [vmem:[#allocation13 + $0x34c] sm:$0xf]
    %v5533 = vld [vmem:[#allocation13 + $0x350] sm:$0xf]
    %v5534 = vld [vmem:[#allocation13 + $0x354] sm:$0xf]
    %v5535 = vld [vmem:[#allocation13 + $0x358] sm:$0xf]
    %v5536 = vld [vmem:[#allocation13 + $0x35c] sm:$0xf]
    %v5537 = vld [vmem:[#allocation13 + $0x360] sm:$0xf]
    %v5538 = vld [vmem:[#allocation13 + $0x364] sm:$0xf]
    %v5539 = vld [vmem:[#allocation13 + $0x368] sm:$0xf]
    %v5540 = vld [vmem:[#allocation13 + $0x36c] sm:$0xf]
    %v5541 = vld [vmem:[#allocation13 + $0x370] sm:$0xf]
    %v5542 = vld [vmem:[#allocation13 + $0x374] sm:$0xf]
    %v5543 = vld [vmem:[#allocation13 + $0x378] sm:$0xf]
    %v5544 = vld [vmem:[#allocation13 + $0x37c] sm:$0xf]
    %v5545 = vld [vmem:[#allocation13 + $0x380] sm:$0xf]
    %v5546 = vld [vmem:[#allocation13 + $0x384] sm:$0xf]
    %v5547 = vld [vmem:[#allocation13 + $0x388] sm:$0xf]
    %v5548 = vld [vmem:[#allocation13 + $0x38c] sm:$0xf]
    %v5549 = vld [vmem:[#allocation13 + $0x390] sm:$0xf]
    %v5550 = vld [vmem:[#allocation13 + $0x394] sm:$0xf]
    %v5551 = vld [vmem:[#allocation13 + $0x398] sm:$0xf]
    %v5552 = vld [vmem:[#allocation13 + $0x39c] sm:$0xf]
    %v5553 = vld [vmem:[#allocation13 + $0x3a0] sm:$0xf]
    %v5554 = vld [vmem:[#allocation13 + $0x3a4] sm:$0xf]
    %v5555 = vld [vmem:[#allocation13 + $0x3a8] sm:$0xf]
    %v5556 = vld [vmem:[#allocation13 + $0x3ac] sm:$0xf]
    %v5557 = vld [vmem:[#allocation13 + $0x3b0] sm:$0xf]
    %v5558 = vld [vmem:[#allocation13 + $0x3b4] sm:$0xf]
    %v5559 = vld [vmem:[#allocation13 + $0x3b8] sm:$0xf]
    %v5560 = vld [vmem:[#allocation13 + $0x3bc] sm:$0xf]
    %v5561 = vld [vmem:[#allocation13 + $0x3c0] sm:$0xf]
    %v5562 = vld [vmem:[#allocation13 + $0x3c4] sm:$0xf]
    %v5563 = vld [vmem:[#allocation13 + $0x3c8] sm:$0xf]
    %v5564 = vld [vmem:[#allocation13 + $0x3cc] sm:$0xf]
    %v5565 = vld [vmem:[#allocation13 + $0x3d0] sm:$0xf]
    %v5566 = vld [vmem:[#allocation13 + $0x3d4] sm:$0xf]
    %v5567 = vld [vmem:[#allocation13 + $0x3d8] sm:$0xf]
    %v5568 = vld [vmem:[#allocation13 + $0x3dc] sm:$0xf]
    %v5569 = vld [vmem:[#allocation13 + $0x3e0] sm:$0xf]
    %v5570 = vld [vmem:[#allocation13 + $0x3e4] sm:$0xf]
    %v5571 = vld [vmem:[#allocation13 + $0x3e8] sm:$0xf]
    %v5572 = vld [vmem:[#allocation13 + $0x3ec] sm:$0xf]
    %v5573 = vld [vmem:[#allocation13 + $0x3f0] sm:$0xf]
    %v5574 = vld [vmem:[#allocation13 + $0x3f4] sm:$0xf]
    %v5575 = vld [vmem:[#allocation13 + $0x3f8] sm:$0xf]
    %v5576 = vld [vmem:[#allocation13 + $0x3fc] sm:$0xf]
    %v5577 = vld [vmem:[#allocation14] sm:$0x1]
    %v5579 = vlaneseq
    %v5580 = vshrl.u32 %v5579, 7
    %v5581 = vsub.s32 0, %v5580
    %v5582 = vrot.slane %v5577, %v5581
    %v5840 = vunpack.c.l.b16 %v5321
    %v5841 = vunpack.c.l.b16 %v5322
    %v5842 = vunpack.c.l.b16 %v5323
    %v5843 = vunpack.c.l.b16 %v5324
    %v5844 = vunpack.c.l.b16 %v5325
    %v5845 = vunpack.c.l.b16 %v5326
    %v5846 = vunpack.c.l.b16 %v5327
    %v5847 = vunpack.c.l.b16 %v5328
    %v5848 = vunpack.c.l.b16 %v5329
    %v5849 = vunpack.c.l.b16 %v5330
    %v5850 = vunpack.c.l.b16 %v5331
    %v5851 = vunpack.c.l.b16 %v5332
    %v5852 = vunpack.c.l.b16 %v5333
    %v5853 = vunpack.c.l.b16 %v5334
    %v5854 = vunpack.c.l.b16 %v5335
    %v5855 = vunpack.c.l.b16 %v5336
    %v5856 = vunpack.c.l.b16 %v5337
    %v5857 = vunpack.c.l.b16 %v5338
    %v5858 = vunpack.c.l.b16 %v5339
    %v5859 = vunpack.c.l.b16 %v5340
    %v5860 = vunpack.c.l.b16 %v5341
    %v5861 = vunpack.c.l.b16 %v5342
    %v5862 = vunpack.c.l.b16 %v5343
    %v5863 = vunpack.c.l.b16 %v5344
    %v5864 = vunpack.c.l.b16 %v5345
    %v5865 = vunpack.c.l.b16 %v5346
    %v5866 = vunpack.c.l.b16 %v5347
    %v5867 = vunpack.c.l.b16 %v5348
    %v5868 = vunpack.c.l.b16 %v5349
    %v5869 = vunpack.c.l.b16 %v5350
    %v5870 = vunpack.c.l.b16 %v5351
    %v5871 = vunpack.c.l.b16 %v5352
    %v5872 = vunpack.c.l.b16 %v5353
    %v5873 = vunpack.c.l.b16 %v5354
    %v5874 = vunpack.c.l.b16 %v5355
    %v5875 = vunpack.c.l.b16 %v5356
    %v5876 = vunpack.c.l.b16 %v5357
    %v5877 = vunpack.c.l.b16 %v5358
    %v5878 = vunpack.c.l.b16 %v5359
    %v5879 = vunpack.c.l.b16 %v5360
    %v5880 = vunpack.c.l.b16 %v5361
    %v5881 = vunpack.c.l.b16 %v5362
    %v5882 = vunpack.c.l.b16 %v5363
    %v5883 = vunpack.c.l.b16 %v5364
    %v5884 = vunpack.c.l.b16 %v5365
    %v5885 = vunpack.c.l.b16 %v5366
    %v5886 = vunpack.c.l.b16 %v5367
    %v5887 = vunpack.c.l.b16 %v5368
    %v5888 = vunpack.c.l.b16 %v5369
    %v5889 = vunpack.c.l.b16 %v5370
    %v5890 = vunpack.c.l.b16 %v5371
    %v5891 = vunpack.c.l.b16 %v5372
    %v5892 = vunpack.c.l.b16 %v5373
    %v5893 = vunpack.c.l.b16 %v5374
    %v5894 = vunpack.c.l.b16 %v5375
    %v5895 = vunpack.c.l.b16 %v5376
    %v5896 = vunpack.c.l.b16 %v5377
    %v5897 = vunpack.c.l.b16 %v5378
    %v5898 = vunpack.c.l.b16 %v5379
    %v5899 = vunpack.c.l.b16 %v5380
    %v5900 = vunpack.c.l.b16 %v5381
    %v5901 = vunpack.c.l.b16 %v5382
    %v5902 = vunpack.c.l.b16 %v5383
    %v5903 = vunpack.c.l.b16 %v5384
    %v5904 = vunpack.c.l.b16 %v5385
    %v5905 = vunpack.c.l.b16 %v5386
    %v5906 = vunpack.c.l.b16 %v5387
    %v5907 = vunpack.c.l.b16 %v5388
    %v5908 = vunpack.c.l.b16 %v5389
    %v5909 = vunpack.c.l.b16 %v5390
    %v5910 = vunpack.c.l.b16 %v5391
    %v5911 = vunpack.c.l.b16 %v5392
    %v5912 = vunpack.c.l.b16 %v5393
    %v5913 = vunpack.c.l.b16 %v5394
    %v5914 = vunpack.c.l.b16 %v5395
    %v5915 = vunpack.c.l.b16 %v5396
    %v5916 = vunpack.c.l.b16 %v5397
    %v5917 = vunpack.c.l.b16 %v5398
    %v5918 = vunpack.c.l.b16 %v5399
    %v5919 = vunpack.c.l.b16 %v5400
    %v5920 = vunpack.c.l.b16 %v5401
    %v5921 = vunpack.c.l.b16 %v5402
    %v5922 = vunpack.c.l.b16 %v5403
    %v5923 = vunpack.c.l.b16 %v5404
    %v5924 = vunpack.c.l.b16 %v5405
    %v5925 = vunpack.c.l.b16 %v5406
    %v5926 = vunpack.c.l.b16 %v5407
    %v5927 = vunpack.c.l.b16 %v5408
    %v5928 = vunpack.c.l.b16 %v5409
    %v5929 = vunpack.c.l.b16 %v5410
    %v5930 = vunpack.c.l.b16 %v5411
    %v5931 = vunpack.c.l.b16 %v5412
    %v5932 = vunpack.c.l.b16 %v5413
    %v5933 = vunpack.c.l.b16 %v5414
    %v5934 = vunpack.c.l.b16 %v5415
    %v5935 = vunpack.c.l.b16 %v5416
    %v5936 = vunpack.c.l.b16 %v5417
    %v5937 = vunpack.c.l.b16 %v5418
    %v5938 = vunpack.c.l.b16 %v5419
    %v5939 = vunpack.c.l.b16 %v5420
    %v5940 = vunpack.c.l.b16 %v5421
    %v5941 = vunpack.c.l.b16 %v5422
    %v5942 = vunpack.c.l.b16 %v5423
    %v5943 = vunpack.c.l.b16 %v5424
    %v5944 = vunpack.c.l.b16 %v5425
    %v5945 = vunpack.c.l.b16 %v5426
    %v5946 = vunpack.c.l.b16 %v5427
    %v5947 = vunpack.c.l.b16 %v5428
    %v5948 = vunpack.c.l.b16 %v5429
    %v5949 = vunpack.c.l.b16 %v5430
    %v5950 = vunpack.c.l.b16 %v5431
    %v5951 = vunpack.c.l.b16 %v5432
    %v5952 = vunpack.c.l.b16 %v5433
    %v5953 = vunpack.c.l.b16 %v5434
    %v5954 = vunpack.c.l.b16 %v5435
    %v5955 = vunpack.c.l.b16 %v5436
    %v5956 = vunpack.c.l.b16 %v5437
    %v5957 = vunpack.c.l.b16 %v5438
    %v5958 = vunpack.c.l.b16 %v5439
    %v5959 = vunpack.c.l.b16 %v5440
    %v5960 = vunpack.c.l.b16 %v5441
    %v5961 = vunpack.c.l.b16 %v5442
    %v5962 = vunpack.c.l.b16 %v5443
    %v5963 = vunpack.c.l.b16 %v5444
    %v5964 = vunpack.c.l.b16 %v5445
    %v5965 = vunpack.c.l.b16 %v5446
    %v5966 = vunpack.c.l.b16 %v5447
    %v5967 = vunpack.c.l.b16 %v5448
    %v5968 = vunpack.c.l.b16 %v5449
    %v5969 = vunpack.c.l.b16 %v5450
    %v5970 = vunpack.c.l.b16 %v5451
    %v5971 = vunpack.c.l.b16 %v5452
    %v5972 = vunpack.c.l.b16 %v5453
    %v5973 = vunpack.c.l.b16 %v5454
    %v5974 = vunpack.c.l.b16 %v5455
    %v5975 = vunpack.c.l.b16 %v5456
    %v5976 = vunpack.c.l.b16 %v5457
    %v5977 = vunpack.c.l.b16 %v5458
    %v5978 = vunpack.c.l.b16 %v5459
    %v5979 = vunpack.c.l.b16 %v5460
    %v5980 = vunpack.c.l.b16 %v5461
    %v5981 = vunpack.c.l.b16 %v5462
    %v5982 = vunpack.c.l.b16 %v5463
    %v5983 = vunpack.c.l.b16 %v5464
    %v5984 = vunpack.c.l.b16 %v5465
    %v5985 = vunpack.c.l.b16 %v5466
    %v5986 = vunpack.c.l.b16 %v5467
    %v5987 = vunpack.c.l.b16 %v5468
    %v5988 = vunpack.c.l.b16 %v5469
    %v5989 = vunpack.c.l.b16 %v5470
    %v5990 = vunpack.c.l.b16 %v5471
    %v5991 = vunpack.c.l.b16 %v5472
    %v5992 = vunpack.c.l.b16 %v5473
    %v5993 = vunpack.c.l.b16 %v5474
    %v5994 = vunpack.c.l.b16 %v5475
    %v5995 = vunpack.c.l.b16 %v5476
    %v5996 = vunpack.c.l.b16 %v5477
    %v5997 = vunpack.c.l.b16 %v5478
    %v5998 = vunpack.c.l.b16 %v5479
    %v5999 = vunpack.c.l.b16 %v5480
    %v6000 = vunpack.c.l.b16 %v5481
    %v6001 = vunpack.c.l.b16 %v5482
    %v6002 = vunpack.c.l.b16 %v5483
    %v6003 = vunpack.c.l.b16 %v5484
    %v6004 = vunpack.c.l.b16 %v5485
    %v6005 = vunpack.c.l.b16 %v5486
    %v6006 = vunpack.c.l.b16 %v5487
    %v6007 = vunpack.c.l.b16 %v5488
    %v6008 = vunpack.c.l.b16 %v5489
    %v6009 = vunpack.c.l.b16 %v5490
    %v6010 = vunpack.c.l.b16 %v5491
    %v6011 = vunpack.c.l.b16 %v5492
    %v6012 = vunpack.c.l.b16 %v5493
    %v6013 = vunpack.c.l.b16 %v5494
    %v6014 = vunpack.c.l.b16 %v5495
    %v6015 = vunpack.c.l.b16 %v5496
    %v6016 = vunpack.c.l.b16 %v5497
    %v6017 = vunpack.c.l.b16 %v5498
    %v6018 = vunpack.c.l.b16 %v5499
    %v6019 = vunpack.c.l.b16 %v5500
    %v6020 = vunpack.c.l.b16 %v5501
    %v6021 = vunpack.c.l.b16 %v5502
    %v6022 = vunpack.c.l.b16 %v5503
    %v6023 = vunpack.c.l.b16 %v5504
    %v6024 = vunpack.c.l.b16 %v5505
    %v6025 = vunpack.c.l.b16 %v5506
    %v6026 = vunpack.c.l.b16 %v5507
    %v6027 = vunpack.c.l.b16 %v5508
    %v6028 = vunpack.c.l.b16 %v5509
    %v6029 = vunpack.c.l.b16 %v5510
    %v6030 = vunpack.c.l.b16 %v5511
    %v6031 = vunpack.c.l.b16 %v5512
    %v6032 = vunpack.c.l.b16 %v5513
    %v6033 = vunpack.c.l.b16 %v5514
    %v6034 = vunpack.c.l.b16 %v5515
    %v6035 = vunpack.c.l.b16 %v5516
    %v6036 = vunpack.c.l.b16 %v5517
    %v6037 = vunpack.c.l.b16 %v5518
    %v6038 = vunpack.c.l.b16 %v5519
    %v6039 = vunpack.c.l.b16 %v5520
    %v6040 = vunpack.c.l.b16 %v5521
    %v6041 = vunpack.c.l.b16 %v5522
    %v6042 = vunpack.c.l.b16 %v5523
    %v6043 = vunpack.c.l.b16 %v5524
    %v6044 = vunpack.c.l.b16 %v5525
    %v6045 = vunpack.c.l.b16 %v5526
    %v6046 = vunpack.c.l.b16 %v5527
    %v6047 = vunpack.c.l.b16 %v5528
    %v6048 = vunpack.c.l.b16 %v5529
    %v6049 = vunpack.c.l.b16 %v5530
    %v6050 = vunpack.c.l.b16 %v5531
    %v6051 = vunpack.c.l.b16 %v5532
    %v6052 = vunpack.c.l.b16 %v5533
    %v6053 = vunpack.c.l.b16 %v5534
    %v6054 = vunpack.c.l.b16 %v5535
    %v6055 = vunpack.c.l.b16 %v5536
    %v6056 = vunpack.c.l.b16 %v5537
    %v6057 = vunpack.c.l.b16 %v5538
    %v6058 = vunpack.c.l.b16 %v5539
    %v6059 = vunpack.c.l.b16 %v5540
    %v6060 = vunpack.c.l.b16 %v5541
    %v6061 = vunpack.c.l.b16 %v5542
    %v6062 = vunpack.c.l.b16 %v5543
    %v6063 = vunpack.c.l.b16 %v5544
    %v6064 = vunpack.c.l.b16 %v5545
    %v6065 = vunpack.c.l.b16 %v5546
    %v6066 = vunpack.c.l.b16 %v5547
    %v6067 = vunpack.c.l.b16 %v5548
    %v6068 = vunpack.c.l.b16 %v5549
    %v6069 = vunpack.c.l.b16 %v5550
    %v6070 = vunpack.c.l.b16 %v5551
    %v6071 = vunpack.c.l.b16 %v5552
    %v6072 = vunpack.c.l.b16 %v5553
    %v6073 = vunpack.c.l.b16 %v5554
    %v6074 = vunpack.c.l.b16 %v5555
    %v6075 = vunpack.c.l.b16 %v5556
    %v6076 = vunpack.c.l.b16 %v5557
    %v6077 = vunpack.c.l.b16 %v5558
    %v6078 = vunpack.c.l.b16 %v5559
    %v6079 = vunpack.c.l.b16 %v5560
    %v6080 = vunpack.c.l.b16 %v5561
    %v6081 = vunpack.c.l.b16 %v5562
    %v6082 = vunpack.c.l.b16 %v5563
    %v6083 = vunpack.c.l.b16 %v5564
    %v6084 = vunpack.c.l.b16 %v5565
    %v6085 = vunpack.c.l.b16 %v5566
    %v6086 = vunpack.c.l.b16 %v5567
    %v6087 = vunpack.c.l.b16 %v5568
    %v6088 = vunpack.c.l.b16 %v5569
    %v6089 = vunpack.c.l.b16 %v5570
    %v6090 = vunpack.c.l.b16 %v5571
    %v6091 = vunpack.c.l.b16 %v5572
    %v6092 = vunpack.c.l.b16 %v5573
    %v6093 = vunpack.c.l.b16 %v5574
    %v6094 = vunpack.c.l.b16 %v5575
    %v6095 = vunpack.c.l.b16 %v5576
    %v6096 = vpack.c.b16 %v5841, %v5840
    %v6097 = vpack.c.b16 %v5843, %v5842
    %v6098 = vpack.c.b16 %v5845, %v5844
    %v6099 = vpack.c.b16 %v5847, %v5846
    %v6100 = vpack.c.b16 %v5849, %v5848
    %v6101 = vpack.c.b16 %v5851, %v5850
    %v6102 = vpack.c.b16 %v5853, %v5852
    %v6103 = vpack.c.b16 %v5855, %v5854
    %v6104 = vpack.c.b16 %v5857, %v5856
    %v6105 = vpack.c.b16 %v5859, %v5858
    %v6106 = vpack.c.b16 %v5861, %v5860
    %v6107 = vpack.c.b16 %v5863, %v5862
    %v6108 = vpack.c.b16 %v5865, %v5864
    %v6109 = vpack.c.b16 %v5867, %v5866
    %v6110 = vpack.c.b16 %v5869, %v5868
    %v6111 = vpack.c.b16 %v5871, %v5870
    %v6112 = vpack.c.b16 %v5873, %v5872
    %v6113 = vpack.c.b16 %v5875, %v5874
    %v6114 = vpack.c.b16 %v5877, %v5876
    %v6115 = vpack.c.b16 %v5879, %v5878
    %v6116 = vpack.c.b16 %v5881, %v5880
    %v6117 = vpack.c.b16 %v5883, %v5882
    %v6118 = vpack.c.b16 %v5885, %v5884
    %v6119 = vpack.c.b16 %v5887, %v5886
    %v6120 = vpack.c.b16 %v5889, %v5888
    %v6121 = vpack.c.b16 %v5891, %v5890
    %v6122 = vpack.c.b16 %v5893, %v5892
    %v6123 = vpack.c.b16 %v5895, %v5894
    %v6124 = vpack.c.b16 %v5897, %v5896
    %v6125 = vpack.c.b16 %v5899, %v5898
    %v6126 = vpack.c.b16 %v5901, %v5900
    %v6127 = vpack.c.b16 %v5903, %v5902
    %v6128 = vpack.c.b16 %v5905, %v5904
    %v6129 = vpack.c.b16 %v5907, %v5906
    %v6130 = vpack.c.b16 %v5909, %v5908
    %v6131 = vpack.c.b16 %v5911, %v5910
    %v6132 = vpack.c.b16 %v5913, %v5912
    %v6133 = vpack.c.b16 %v5915, %v5914
    %v6134 = vpack.c.b16 %v5917, %v5916
    %v6135 = vpack.c.b16 %v5919, %v5918
    %v6136 = vpack.c.b16 %v5921, %v5920
    %v6137 = vpack.c.b16 %v5923, %v5922
    %v6138 = vpack.c.b16 %v5925, %v5924
    %v6139 = vpack.c.b16 %v5927, %v5926
    %v6140 = vpack.c.b16 %v5929, %v5928
    %v6141 = vpack.c.b16 %v5931, %v5930
    %v6142 = vpack.c.b16 %v5933, %v5932
    %v6143 = vpack.c.b16 %v5935, %v5934
    %v6144 = vpack.c.b16 %v5937, %v5936
    %v6145 = vpack.c.b16 %v5939, %v5938
    %v6146 = vpack.c.b16 %v5941, %v5940
    %v6147 = vpack.c.b16 %v5943, %v5942
    %v6148 = vpack.c.b16 %v5945, %v5944
    %v6149 = vpack.c.b16 %v5947, %v5946
    %v6150 = vpack.c.b16 %v5949, %v5948
    %v6151 = vpack.c.b16 %v5951, %v5950
    %v6152 = vpack.c.b16 %v5953, %v5952
    %v6153 = vpack.c.b16 %v5955, %v5954
    %v6154 = vpack.c.b16 %v5957, %v5956
    %v6155 = vpack.c.b16 %v5959, %v5958
    %v6156 = vpack.c.b16 %v5961, %v5960
    %v6157 = vpack.c.b16 %v5963, %v5962
    %v6158 = vpack.c.b16 %v5965, %v5964
    %v6159 = vpack.c.b16 %v5967, %v5966
    %v6160 = vpack.c.b16 %v5969, %v5968
    %v6161 = vpack.c.b16 %v5971, %v5970
    %v6162 = vpack.c.b16 %v5973, %v5972
    %v6163 = vpack.c.b16 %v5975, %v5974
    %v6164 = vpack.c.b16 %v5977, %v5976
    %v6165 = vpack.c.b16 %v5979, %v5978
    %v6166 = vpack.c.b16 %v5981, %v5980
    %v6167 = vpack.c.b16 %v5983, %v5982
    %v6168 = vpack.c.b16 %v5985, %v5984
    %v6169 = vpack.c.b16 %v5987, %v5986
    %v6170 = vpack.c.b16 %v5989, %v5988
    %v6171 = vpack.c.b16 %v5991, %v5990
    %v6172 = vpack.c.b16 %v5993, %v5992
    %v6173 = vpack.c.b16 %v5995, %v5994
    %v6174 = vpack.c.b16 %v5997, %v5996
    %v6175 = vpack.c.b16 %v5999, %v5998
    %v6176 = vpack.c.b16 %v6001, %v6000
    %v6177 = vpack.c.b16 %v6003, %v6002
    %v6178 = vpack.c.b16 %v6005, %v6004
    %v6179 = vpack.c.b16 %v6007, %v6006
    %v6180 = vpack.c.b16 %v6009, %v6008
    %v6181 = vpack.c.b16 %v6011, %v6010
    %v6182 = vpack.c.b16 %v6013, %v6012
    %v6183 = vpack.c.b16 %v6015, %v6014
    %v6184 = vpack.c.b16 %v6017, %v6016
    %v6185 = vpack.c.b16 %v6019, %v6018
    %v6186 = vpack.c.b16 %v6021, %v6020
    %v6187 = vpack.c.b16 %v6023, %v6022
    %v6188 = vpack.c.b16 %v6025, %v6024
    %v6189 = vpack.c.b16 %v6027, %v6026
    %v6190 = vpack.c.b16 %v6029, %v6028
    %v6191 = vpack.c.b16 %v6031, %v6030
    %v6192 = vpack.c.b16 %v6033, %v6032
    %v6193 = vpack.c.b16 %v6035, %v6034
    %v6194 = vpack.c.b16 %v6037, %v6036
    %v6195 = vpack.c.b16 %v6039, %v6038
    %v6196 = vpack.c.b16 %v6041, %v6040
    %v6197 = vpack.c.b16 %v6043, %v6042
    %v6198 = vpack.c.b16 %v6045, %v6044
    %v6199 = vpack.c.b16 %v6047, %v6046
    %v6200 = vpack.c.b16 %v6049, %v6048
    %v6201 = vpack.c.b16 %v6051, %v6050
    %v6202 = vpack.c.b16 %v6053, %v6052
    %v6203 = vpack.c.b16 %v6055, %v6054
    %v6204 = vpack.c.b16 %v6057, %v6056
    %v6205 = vpack.c.b16 %v6059, %v6058
    %v6206 = vpack.c.b16 %v6061, %v6060
    %v6207 = vpack.c.b16 %v6063, %v6062
    %v6208 = vpack.c.b16 %v6065, %v6064
    %v6209 = vpack.c.b16 %v6067, %v6066
    %v6210 = vpack.c.b16 %v6069, %v6068
    %v6211 = vpack.c.b16 %v6071, %v6070
    %v6212 = vpack.c.b16 %v6073, %v6072
    %v6213 = vpack.c.b16 %v6075, %v6074
    %v6214 = vpack.c.b16 %v6077, %v6076
    %v6215 = vpack.c.b16 %v6079, %v6078
    %v6216 = vpack.c.b16 %v6081, %v6080
    %v6217 = vpack.c.b16 %v6083, %v6082
    %v6218 = vpack.c.b16 %v6085, %v6084
    %v6219 = vpack.c.b16 %v6087, %v6086
    %v6220 = vpack.c.b16 %v6089, %v6088
    %v6221 = vpack.c.b16 %v6091, %v6090
    %v6222 = vpack.c.b16 %v6093, %v6092
    %v6223 = vpack.c.b16 %v6095, %v6094
    %6352 = vmatprep.subr.bf16.mxu0 0
    %6353 = vmatpush1.bf16.msra.mxu0 %v6103
    %6354 = vmatprep.subr.bf16.mxu0 0
    %6355 = vmatpush1.bf16.msra.mxu0 %v6102
    %6356 = vmatprep.subr.bf16.mxu0 0
    %6357 = vmatpush1.bf16.msra.mxu0 %v6101
    %6358 = vmatprep.subr.bf16.mxu0 0
    %6359 = vmatpush1.bf16.msra.mxu0 %v6100
    %6360 = vmatprep.subr.bf16.mxu0 0
    %6361 = vmatpush1.bf16.msra.mxu0 %v6099
    %6362 = vmatprep.subr.bf16.mxu0 0
    %6363 = vmatpush1.bf16.msra.mxu0 %v6098
    %6364 = vmatprep.subr.bf16.mxu0 0
    %6365 = vmatpush1.bf16.msra.mxu0 %v6097
    %6366 = vmatprep.subr.bf16.mxu0 0
    %6367 = vmatpush1.bf16.msra.mxu0 %v6096
    %6368 = vmatprep.subr.bf16.mxu0 0
    %6369 = vmatpush2.bf16.msra.mxu0 %v6111
    %6370 = vmatprep.subr.bf16.mxu0 0
    %6371 = vmatpush2.bf16.msra.mxu0 %v6110
    %6372 = vmatprep.subr.bf16.mxu0 0
    %6373 = vmatpush2.bf16.msra.mxu0 %v6109
    %6374 = vmatprep.subr.bf16.mxu0 0
    %6375 = vmatpush2.bf16.msra.mxu0 %v6108
    %6376 = vmatprep.subr.bf16.mxu0 0
    %6377 = vmatpush2.bf16.msra.mxu0 %v6107
    %6378 = vmatprep.subr.bf16.mxu0 0
    %6379 = vmatpush2.bf16.msra.mxu0 %v6106
    %6380 = vmatprep.subr.bf16.mxu0 0
    %6381 = vmatpush2.bf16.msra.mxu0 %v6105
    %6382 = vmatprep.subr.bf16.mxu0 0
    %6383 = vmatpush2.bf16.msra.mxu0 %v6104
    %6384 = vmatprep.mubr.bf16.mxu0 %v5306
    %6385 = vmatmul.mubr.bf16.gmra.mxu0 %v5305
    %v6386 = vpop.f32.mrf.mxu0
    %v6387 = vadd.f32 %v5582, %v6386
    %v6388 = vpop.f32.mrf.mxu0
    %v6389 = vpop.f32.mrf.mxu0
    %v6390 = vadd.f32 %v5582, %v6389
    %v6391 = vpop.f32.mrf.mxu0
    %6392 = vdwg.mxu0
    %6393 = vmatprep.subr.bf16.mxu0 0
    %6394 = vmatpush1.bf16.msra.mxu0 %v6119
    %6395 = vmatprep.subr.bf16.mxu0 0
    %6396 = vmatpush1.bf16.msra.mxu0 %v6118
    %6397 = vmatprep.subr.bf16.mxu0 0
    %6398 = vmatpush1.bf16.msra.mxu0 %v6117
    %6399 = vmatprep.subr.bf16.mxu0 0
    %6400 = vmatpush1.bf16.msra.mxu0 %v6116
    %6401 = vmatprep.subr.bf16.mxu0 0
    %6402 = vmatpush1.bf16.msra.mxu0 %v6115
    %6403 = vmatprep.subr.bf16.mxu0 0
    %6404 = vmatpush1.bf16.msra.mxu0 %v6114
    %6405 = vmatprep.subr.bf16.mxu0 0
    %6406 = vmatpush1.bf16.msra.mxu0 %v6113
    %6407 = vmatprep.subr.bf16.mxu0 0
    %6408 = vmatpush1.bf16.msra.mxu0 %v6112
    %6409 = vmatprep.subr.bf16.mxu0 0
    %6410 = vmatpush2.bf16.msra.mxu0 %v6127
    %6411 = vmatprep.subr.bf16.mxu0 0
    %6412 = vmatpush2.bf16.msra.mxu0 %v6126
    %6413 = vmatprep.subr.bf16.mxu0 0
    %6414 = vmatpush2.bf16.msra.mxu0 %v6125
    %6415 = vmatprep.subr.bf16.mxu0 0
    %6416 = vmatpush2.bf16.msra.mxu0 %v6124
    %6417 = vmatprep.subr.bf16.mxu0 0
    %6418 = vmatpush2.bf16.msra.mxu0 %v6123
    %6419 = vmatprep.subr.bf16.mxu0 0
    %6420 = vmatpush2.bf16.msra.mxu0 %v6122
    %6421 = vmatprep.subr.bf16.mxu0 0
    %6422 = vmatpush2.bf16.msra.mxu0 %v6121
    %6423 = vmatprep.subr.bf16.mxu0 0
    %6424 = vmatpush2.bf16.msra.mxu0 %v6120
    %6425 = vmatprep.mubr.bf16.mxu0 %v5308
    %6426 = vmatmul.mubr.bf16.gmra.mxu0 %v5307
    %v6427 = vpop.f32.mrf.mxu0
    %v6428 = vadd.f32 %v6387, %v6427
    %v6429 = vpop.f32.mrf.mxu0
    %v6430 = vpop.f32.mrf.mxu0
    %v6431 = vadd.f32 %v6390, %v6430
    %v6432 = vpop.f32.mrf.mxu0
    %6433 = vdwg.mxu0
    %6434 = vmatprep.subr.bf16.mxu0 0
    %6435 = vmatpush1.bf16.msra.mxu0 %v6135
    %6436 = vmatprep.subr.bf16.mxu0 0
    %6437 = vmatpush1.bf16.msra.mxu0 %v6134
    %6438 = vmatprep.subr.bf16.mxu0 0
    %6439 = vmatpush1.bf16.msra.mxu0 %v6133
    %6440 = vmatprep.subr.bf16.mxu0 0
    %6441 = vmatpush1.bf16.msra.mxu0 %v6132
    %6442 = vmatprep.subr.bf16.mxu0 0
    %6443 = vmatpush1.bf16.msra.mxu0 %v6131
    %6444 = vmatprep.subr.bf16.mxu0 0
    %6445 = vmatpush1.bf16.msra.mxu0 %v6130
    %6446 = vmatprep.subr.bf16.mxu0 0
    %6447 = vmatpush1.bf16.msra.mxu0 %v6129
    %6448 = vmatprep.subr.bf16.mxu0 0
    %6449 = vmatpush1.bf16.msra.mxu0 %v6128
    %6450 = vmatprep.subr.bf16.mxu0 0
    %6451 = vmatpush2.bf16.msra.mxu0 %v6143
    %6452 = vmatprep.subr.bf16.mxu0 0
    %6453 = vmatpush2.bf16.msra.mxu0 %v6142
    %6454 = vmatprep.subr.bf16.mxu0 0
    %6455 = vmatpush2.bf16.msra.mxu0 %v6141
    %6456 = vmatprep.subr.bf16.mxu0 0
    %6457 = vmatpush2.bf16.msra.mxu0 %v6140
    %6458 = vmatprep.subr.bf16.mxu0 0
    %6459 = vmatpush2.bf16.msra.mxu0 %v6139
    %6460 = vmatprep.subr.bf16.mxu0 0
    %6461 = vmatpush2.bf16.msra.mxu0 %v6138
    %6462 = vmatprep.subr.bf16.mxu0 0
    %6463 = vmatpush2.bf16.msra.mxu0 %v6137
    %6464 = vmatprep.subr.bf16.mxu0 0
    %6465 = vmatpush2.bf16.msra.mxu0 %v6136
    %6466 = vmatprep.mubr.bf16.mxu0 %v5310
    %6467 = vmatmul.mubr.bf16.gmra.mxu0 %v5309
    %v6468 = vpop.f32.mrf.mxu0
    %v6469 = vadd.f32 %v6428, %v6468
    %v6470 = vpop.f32.mrf.mxu0
    %v6471 = vpop.f32.mrf.mxu0
    %v6472 = vadd.f32 %v6431, %v6471
    %v6473 = vpop.f32.mrf.mxu0
    %6474 = vdwg.mxu0
    %6475 = vmatprep.subr.bf16.mxu0 0
    %6476 = vmatpush1.bf16.msra.mxu0 %v6151
    %6477 = vmatprep.subr.bf16.mxu0 0
    %6478 = vmatpush1.bf16.msra.mxu0 %v6150
    %6479 = vmatprep.subr.bf16.mxu0 0
    %6480 = vmatpush1.bf16.msra.mxu0 %v6149
    %6481 = vmatprep.subr.bf16.mxu0 0
    %6482 = vmatpush1.bf16.msra.mxu0 %v6148
    %6483 = vmatprep.subr.bf16.mxu0 0
    %6484 = vmatpush1.bf16.msra.mxu0 %v6147
    %6485 = vmatprep.subr.bf16.mxu0 0
    %6486 = vmatpush1.bf16.msra.mxu0 %v6146
    %6487 = vmatprep.subr.bf16.mxu0 0
    %6488 = vmatpush1.bf16.msra.mxu0 %v6145
    %6489 = vmatprep.subr.bf16.mxu0 0
    %6490 = vmatpush1.bf16.msra.mxu0 %v6144
    %6491 = vmatprep.subr.bf16.mxu0 0
    %6492 = vmatpush2.bf16.msra.mxu0 %v6159
    %6493 = vmatprep.subr.bf16.mxu0 0
    %6494 = vmatpush2.bf16.msra.mxu0 %v6158
    %6495 = vmatprep.subr.bf16.mxu0 0
    %6496 = vmatpush2.bf16.msra.mxu0 %v6157
    %6497 = vmatprep.subr.bf16.mxu0 0
    %6498 = vmatpush2.bf16.msra.mxu0 %v6156
    %6499 = vmatprep.subr.bf16.mxu0 0
    %6500 = vmatpush2.bf16.msra.mxu0 %v6155
    %6501 = vmatprep.subr.bf16.mxu0 0
    %6502 = vmatpush2.bf16.msra.mxu0 %v6154
    %6503 = vmatprep.subr.bf16.mxu0 0
    %6504 = vmatpush2.bf16.msra.mxu0 %v6153
    %6505 = vmatprep.subr.bf16.mxu0 0
    %6506 = vmatpush2.bf16.msra.mxu0 %v6152
    %6507 = vmatprep.mubr.bf16.mxu0 %v5312
    %6508 = vmatmul.mubr.bf16.gmra.mxu0 %v5311
    %v6509 = vpop.f32.mrf.mxu0
    %v6510 = vadd.f32 %v6469, %v6509
    %v6511 = vpop.f32.mrf.mxu0
    %v6512 = vpop.f32.mrf.mxu0
    %v6513 = vadd.f32 %v6472, %v6512
    %v6514 = vpop.f32.mrf.mxu0
    %6515 = vdwg.mxu0
    %6516 = vmatprep.subr.bf16.mxu0 0
    %6517 = vmatpush1.bf16.msra.mxu0 %v6167
    %6518 = vmatprep.subr.bf16.mxu0 0
    %6519 = vmatpush1.bf16.msra.mxu0 %v6166
    %6520 = vmatprep.subr.bf16.mxu0 0
    %6521 = vmatpush1.bf16.msra.mxu0 %v6165
    %6522 = vmatprep.subr.bf16.mxu0 0
    %6523 = vmatpush1.bf16.msra.mxu0 %v6164
    %6524 = vmatprep.subr.bf16.mxu0 0
    %6525 = vmatpush1.bf16.msra.mxu0 %v6163
    %6526 = vmatprep.subr.bf16.mxu0 0
    %6527 = vmatpush1.bf16.msra.mxu0 %v6162
    %6528 = vmatprep.subr.bf16.mxu0 0
    %6529 = vmatpush1.bf16.msra.mxu0 %v6161
    %6530 = vmatprep.subr.bf16.mxu0 0
    %6531 = vmatpush1.bf16.msra.mxu0 %v6160
    %6532 = vmatprep.subr.bf16.mxu0 0
    %6533 = vmatpush2.bf16.msra.mxu0 %v6175
    %6534 = vmatprep.subr.bf16.mxu0 0
    %6535 = vmatpush2.bf16.msra.mxu0 %v6174
    %6536 = vmatprep.subr.bf16.mxu0 0
    %6537 = vmatpush2.bf16.msra.mxu0 %v6173
    %6538 = vmatprep.subr.bf16.mxu0 0
    %6539 = vmatpush2.bf16.msra.mxu0 %v6172
    %6540 = vmatprep.subr.bf16.mxu0 0
    %6541 = vmatpush2.bf16.msra.mxu0 %v6171
    %6542 = vmatprep.subr.bf16.mxu0 0
    %6543 = vmatpush2.bf16.msra.mxu0 %v6170
    %6544 = vmatprep.subr.bf16.mxu0 0
    %6545 = vmatpush2.bf16.msra.mxu0 %v6169
    %6546 = vmatprep.subr.bf16.mxu0 0
    %6547 = vmatpush2.bf16.msra.mxu0 %v6168
    %6548 = vmatprep.mubr.bf16.mxu0 %v5314
    %6549 = vmatmul.mubr.bf16.gmra.mxu0 %v5313
    %v6550 = vpop.f32.mrf.mxu0
    %v6551 = vadd.f32 %v6510, %v6550
    %v6552 = vpop.f32.mrf.mxu0
    %v6553 = vpop.f32.mrf.mxu0
    %v6554 = vadd.f32 %v6513, %v6553
    %v6555 = vpop.f32.mrf.mxu0
    %6556 = vdwg.mxu0
    %6557 = vmatprep.subr.bf16.mxu0 0
    %6558 = vmatpush1.bf16.msra.mxu0 %v6183
    %6559 = vmatprep.subr.bf16.mxu0 0
    %6560 = vmatpush1.bf16.msra.mxu0 %v6182
    %6561 = vmatprep.subr.bf16.mxu0 0
    %6562 = vmatpush1.bf16.msra.mxu0 %v6181
    %6563 = vmatprep.subr.bf16.mxu0 0
    %6564 = vmatpush1.bf16.msra.mxu0 %v6180
    %6565 = vmatprep.subr.bf16.mxu0 0
    %6566 = vmatpush1.bf16.msra.mxu0 %v6179
    %6567 = vmatprep.subr.bf16.mxu0 0
    %6568 = vmatpush1.bf16.msra.mxu0 %v6178
    %6569 = vmatprep.subr.bf16.mxu0 0
    %6570 = vmatpush1.bf16.msra.mxu0 %v6177
    %6571 = vmatprep.subr.bf16.mxu0 0
    %6572 = vmatpush1.bf16.msra.mxu0 %v6176
    %6573 = vmatprep.subr.bf16.mxu0 0
    %6574 = vmatpush2.bf16.msra.mxu0 %v6191
    %6575 = vmatprep.subr.bf16.mxu0 0
    %6576 = vmatpush2.bf16.msra.mxu0 %v6190
    %6577 = vmatprep.subr.bf16.mxu0 0
    %6578 = vmatpush2.bf16.msra.mxu0 %v6189
    %6579 = vmatprep.subr.bf16.mxu0 0
    %6580 = vmatpush2.bf16.msra.mxu0 %v6188
    %6581 = vmatprep.subr.bf16.mxu0 0
    %6582 = vmatpush2.bf16.msra.mxu0 %v6187
    %6583 = vmatprep.subr.bf16.mxu0 0
    %6584 = vmatpush2.bf16.msra.mxu0 %v6186
    %6585 = vmatprep.subr.bf16.mxu0 0
    %6586 = vmatpush2.bf16.msra.mxu0 %v6185
    %6587 = vmatprep.subr.bf16.mxu0 0
    %6588 = vmatpush2.bf16.msra.mxu0 %v6184
    %6589 = vmatprep.mubr.bf16.mxu0 %v5316
    %6590 = vmatmul.mubr.bf16.gmra.mxu0 %v5315
    %v6591 = vpop.f32.mrf.mxu0
    %v6592 = vadd.f32 %v6551, %v6591
    %v6593 = vpop.f32.mrf.mxu0
    %v6594 = vpop.f32.mrf.mxu0
    %v6595 = vadd.f32 %v6554, %v6594
    %v6596 = vpop.f32.mrf.mxu0
    %6597 = vdwg.mxu0
    %6598 = vmatprep.subr.bf16.mxu0 0
    %6599 = vmatpush1.bf16.msra.mxu0 %v6199
    %6600 = vmatprep.subr.bf16.mxu0 0
    %6601 = vmatpush1.bf16.msra.mxu0 %v6198
    %6602 = vmatprep.subr.bf16.mxu0 0
    %6603 = vmatpush1.bf16.msra.mxu0 %v6197
    %6604 = vmatprep.subr.bf16.mxu0 0
    %6605 = vmatpush1.bf16.msra.mxu0 %v6196
    %6606 = vmatprep.subr.bf16.mxu0 0
    %6607 = vmatpush1.bf16.msra.mxu0 %v6195
    %6608 = vmatprep.subr.bf16.mxu0 0
    %6609 = vmatpush1.bf16.msra.mxu0 %v6194
    %6610 = vmatprep.subr.bf16.mxu0 0
    %6611 = vmatpush1.bf16.msra.mxu0 %v6193
    %6612 = vmatprep.subr.bf16.mxu0 0
    %6613 = vmatpush1.bf16.msra.mxu0 %v6192
    %6614 = vmatprep.subr.bf16.mxu0 0
    %6615 = vmatpush2.bf16.msra.mxu0 %v6207
    %6616 = vmatprep.subr.bf16.mxu0 0
    %6617 = vmatpush2.bf16.msra.mxu0 %v6206
    %6618 = vmatprep.subr.bf16.mxu0 0
    %6619 = vmatpush2.bf16.msra.mxu0 %v6205
    %6620 = vmatprep.subr.bf16.mxu0 0
    %6621 = vmatpush2.bf16.msra.mxu0 %v6204
    %6622 = vmatprep.subr.bf16.mxu0 0
    %6623 = vmatpush2.bf16.msra.mxu0 %v6203
    %6624 = vmatprep.subr.bf16.mxu0 0
    %6625 = vmatpush2.bf16.msra.mxu0 %v6202
    %6626 = vmatprep.subr.bf16.mxu0 0
    %6627 = vmatpush2.bf16.msra.mxu0 %v6201
    %6628 = vmatprep.subr.bf16.mxu0 0
    %6629 = vmatpush2.bf16.msra.mxu0 %v6200
    %6630 = vmatprep.mubr.bf16.mxu0 %v5318
    %6631 = vmatmul.mubr.bf16.gmra.mxu0 %v5317
    %v6632 = vpop.f32.mrf.mxu0
    %v6633 = vadd.f32 %v6592, %v6632
    %v6634 = vpop.f32.mrf.mxu0
    %v6635 = vpop.f32.mrf.mxu0
    %v6636 = vadd.f32 %v6595, %v6635
    %v6637 = vpop.f32.mrf.mxu0
    %6638 = vdwg.mxu0
    %6639 = vmatprep.subr.bf16.mxu0 0
    %6640 = vmatpush1.bf16.msra.mxu0 %v6215
    %6641 = vmatprep.subr.bf16.mxu0 0
    %6642 = vmatpush1.bf16.msra.mxu0 %v6214
    %6643 = vmatprep.subr.bf16.mxu0 0
    %6644 = vmatpush1.bf16.msra.mxu0 %v6213
    %6645 = vmatprep.subr.bf16.mxu0 0
    %6646 = vmatpush1.bf16.msra.mxu0 %v6212
    %6647 = vmatprep.subr.bf16.mxu0 0
    %6648 = vmatpush1.bf16.msra.mxu0 %v6211
    %6649 = vmatprep.subr.bf16.mxu0 0
    %6650 = vmatpush1.bf16.msra.mxu0 %v6210
    %6651 = vmatprep.subr.bf16.mxu0 0
    %6652 = vmatpush1.bf16.msra.mxu0 %v6209
    %6653 = vmatprep.subr.bf16.mxu0 0
    %6654 = vmatpush1.bf16.msra.mxu0 %v6208
    %6655 = vmatprep.subr.bf16.mxu0 0
    %6656 = vmatpush2.bf16.msra.mxu0 %v6223
    %6657 = vmatprep.subr.bf16.mxu0 0
    %6658 = vmatpush2.bf16.msra.mxu0 %v6222
    %6659 = vmatprep.subr.bf16.mxu0 0
    %6660 = vmatpush2.bf16.msra.mxu0 %v6221
    %6661 = vmatprep.subr.bf16.mxu0 0
    %6662 = vmatpush2.bf16.msra.mxu0 %v6220
    %6663 = vmatprep.subr.bf16.mxu0 0
    %6664 = vmatpush2.bf16.msra.mxu0 %v6219
    %6665 = vmatprep.subr.bf16.mxu0 0
    %6666 = vmatpush2.bf16.msra.mxu0 %v6218
    %6667 = vmatprep.subr.bf16.mxu0 0
    %6668 = vmatpush2.bf16.msra.mxu0 %v6217
    %6669 = vmatprep.subr.bf16.mxu0 0
    %6670 = vmatpush2.bf16.msra.mxu0 %v6216
    %6671 = vmatprep.mubr.bf16.mxu0 %v5320
    %6672 = vmatmul.mubr.bf16.gmra.mxu0 %v5319
    %v6673 = vpop.f32.mrf.mxu0
    %v6674 = vadd.f32 %v6633, %v6673
    %v6675 = vpop.f32.mrf.mxu0
    %v6676 = vpop.f32.mrf.mxu0
    %v6677 = vadd.f32 %v6636, %v6676
    %v6678 = vpop.f32.mrf.mxu0
    %6679 = vdwg.mxu0
    %6680 = vst [vmem:[#allocation16] sm:$0xff] %v6674
    %6681 = vst [vmem:[#allocation16 + $0x8] sm:$0xff] %v6677
    // Predicated region
    $region70: #{encoder_forward.1} parent=1 // pred_check
      _
    $region71: #{encoder_forward.1} parent=1 // pred_check_branch
      %6683 = sbr.rel (0) target = $region73
    $region72: #{encoder_forward.1} parent=1 // pred_region
      %s6685 = ssub.s32 256, 256
      %6686 = vsyncadd [#allocation4], %s6685
      %s6687 = sshll.u32 [#allocation16], 4
      %s6688 = int_to_ptr.vmem [resolvable:$true] %s6687
      %6693 = dma.vmem_to_hbm [thread:$0]  %s6688, 256, %s9, [#allocation4], 128, 128, 8
    $region73: #{encoder_forward.1} parent=1 // pred_fallthru
      _
    // Predicated region
    $region74: #{encoder_forward.1} parent=1 // pred_check
      _
    $region75: #{encoder_forward.1} parent=1 // pred_check_branch
      %6695 = sbr.rel (0) target = $region77
    $region76: #{encoder_forward.1} parent=1 // pred_region
      %6696 = dma.done [#allocation4], 256
    $region77: #{encoder_forward.1} parent=1 // pred_fallthru
      _
    %6697 = vsyncpa [#allocation3], 1
    %6698 = vsyncpa [#allocation6], 1
    %6699 = vsyncpa [#allocation9], 1
    %6700 = vsyncpa [#allocation12], 1
    %6701 = vsyncpa [#allocation15], 1
    %6702 = vsyncpa [#allocation4], 1

</llo_original>
